<compile_context>
chip_gen: v5e
topology: v5e:2x2
jax: 0.10.0
libtpu: 0.0.40
codegen_flags: <defaults>
</compile_context>

<pallas_src>
import functools

import jax
import jax.numpy as jnp
from jax.experimental import pallas as pl
from jax.experimental.pallas import tpu as pltpu


def _leaky_relu(x, slope=0.01):
    return jnp.where(x > 0, x, slope * x)


def _round_up(x, m):
    return (x + m - 1) // m * m


def boke_kernel(
    img_ref, x2_ref,
    w1_ref, b1_ref,
    wx_ref, wh_ref, bl_ref,
    w2i_ref, w2h_ref, b2_ref,
    w3_ref, b3_ref,
    w4_ref, b4_ref,
    out_ref,
    xproj_scr, hs_scr, y_scr,
):
    TB = img_ref.shape[0]
    T, _, Fp = x2_ref.shape
    F2 = w2h_ref.shape[1]          # 2 * Fp
    F3 = 3 * Fp
    TV = w4_ref.shape[1]

    # The recurrence + fc2/fc3 trunk only depends on the batch tile, so run it
    # once per batch tile (vocab axis is the inner grid axis).
    @pl.when(pl.program_id(1) == 0)
    def _trunk():
        # fc1 + leaky_relu on image features (loop invariant).
        x1 = _leaky_relu(
            jnp.dot(img_ref[...], w1_ref[...],
                    preferred_element_type=jnp.float32) + b1_ref[...])

        # Image half of fc2 (removes the per-step concat([x1, h])).
        x1_fc2 = jnp.dot(x1.astype(jnp.bfloat16), w2i_ref[...],
                         preferred_element_type=jnp.float32) + b2_ref[...]

        # Input projection for the whole sequence in one matmul (time-major),
        # fused LSTM bias folded in.  Gate order [i, f, o, g].
        x2_flat = x2_ref[...].reshape(T * TB, Fp)
        xproj_scr[...] = (
            jnp.dot(x2_flat, wx_ref[...], preferred_element_type=jnp.float32)
            + bl_ref[...])

        # Serial LSTM recurrence (zero init state); only h @ Wh per step.
        # Fp is lane-padded to 128 in the wrapper, so every gate slice is a
        # full lane tile (no masked lane selects on the critical path).
        def step(t, carry):
            h, c = carry
            off = pl.multiple_of(t * TB, TB)
            gates = xproj_scr[pl.ds(off, TB), :] + jnp.dot(
                h.astype(jnp.bfloat16), wh_ref[...],
                preferred_element_type=jnp.float32)
            ifo = jax.nn.sigmoid(gates[:, :F3])     # one EUP push for i|f|o
            g_g = jnp.tanh(gates[:, F3:])
            i_g = ifo[:, :Fp]
            f_g = ifo[:, Fp:2 * Fp]
            o_g = ifo[:, 2 * Fp:F3]
            c = f_g * c + i_g * g_g
            h = o_g * jnp.tanh(c)
            hs_scr[pl.ds(off, TB), :] = h.astype(jnp.bfloat16)
            return h, c

        zeros = jnp.zeros((TB, Fp), jnp.float32)
        jax.lax.fori_loop(0, T, step, (zeros, zeros), unroll=True)

        # fc2 (hidden half) + fc3, batched over all (t, b) rows.
        y = jnp.dot(hs_scr[...], w2h_ref[...],
                    preferred_element_type=jnp.float32)
        y = _leaky_relu(y.reshape(T, TB, F2) + x1_fc2[None, :, :])
        y = y.reshape(T * TB, F2)
        y = _leaky_relu(
            jnp.dot(y.astype(jnp.bfloat16), w3_ref[...],
                    preferred_element_type=jnp.float32) + b3_ref[...])
        y_scr[...] = y.astype(jnp.bfloat16)

    # fc4 for the current vocab tile -> one lane-dense unmasked store.
    logits = jnp.dot(y_scr[...], w4_ref[...],
                     preferred_element_type=jnp.float32) + b4_ref[...]
    out_ref[...] = logits.reshape(T, TB, TV)


def init_params(key, num_word, image_feature_dim, feature_dim):
    F = feature_dim
    keys = jax.random.split(key, 32)  # 21 needed; extras unused
    it = iter(keys)

    def rnd(shape, scale=0.05):
        return scale * jax.random.normal(next(it), shape, dtype=jnp.float32)

    params = {}
    # fc1: Linear(image_feature_dim -> F); stored transposed for x @ W.
    params["w1"] = rnd((image_feature_dim, F))
    params["b1"] = rnd((1, F))
    # embedding (num_word, F) with padding_idx=0 -> row 0 zeroed.
    emb = rnd((num_word, F))
    params["emb"] = emb.at[0].set(0.0)
    # LSTM, per-gate (input->hidden and hidden->hidden) matrices, b = b_ih + b_hh.
    for g in ("i", "f", "g", "o"):
        params[f"wx{g}"] = rnd((F, F))
        params[f"wh{g}"] = rnd((F, F))
        params[f"b{g}"] = rnd((1, F))
    # fc2, fc3: Linear(2F -> 2F); fc4: Linear(2F -> num_word).
    params["w2"] = rnd((2 * F, 2 * F))
    params["b2"] = rnd((1, 2 * F))
    params["w3"] = rnd((2 * F, 2 * F))
    params["b3"] = rnd((1, 2 * F))
    params["w4"] = rnd((2 * F, num_word))
    params["b4"] = rnd((1, num_word))
    return params


@functools.partial(jax.jit, static_argnames=("sentence_length",))
def boke_forward(params, image_features, sentences, *, sentence_length):
    B, Dimg = image_features.shape
    T = sentence_length
    F = params["w1"].shape[1]
    V = params["w4"].shape[1]

    # --- padded / tiled sizes ------------------------------------------------
    TB = min(128, _round_up(B, 16))           # batch tile (bf16 sublane mult.)
    B_pad = _round_up(B, TB)
    Dp = _round_up(Dimg, 128)
    Fp = _round_up(F, 128)                    # each LSTM gate = full lane tile
    TV = min(1024, _round_up(V, 128))         # vocab tile (v7x VMEM budget)
    Vp = _round_up(V, TV)

    bf16 = jnp.bfloat16

    def pad2(a, r, c):
        return jnp.pad(a, ((0, r - a.shape[0]), (0, c - a.shape[1])))

    # --- glue: fuse / split / pad / cast parameters --------------------------
    w1 = pad2(params["w1"], Dp, Fp).astype(bf16)
    b1 = pad2(params["b1"], 1, Fp)

    wx = jnp.concatenate(
        [pad2(params[f"wx{g}"], Fp, Fp) for g in ("i", "f", "o", "g")],
        axis=1).astype(bf16)
    wh = jnp.concatenate(
        [pad2(params[f"wh{g}"], Fp, Fp) for g in ("i", "f", "o", "g")],
        axis=1).astype(bf16)
    bl = jnp.concatenate(
        [pad2(params[f"b{g}"], 1, Fp) for g in ("i", "f", "o", "g")], axis=1)

    w2i = pad2(params["w2"][:F, :], Fp, 2 * Fp).astype(bf16)   # image half
    w2h = pad2(params["w2"][F:, :], Fp, 2 * Fp).astype(bf16)   # hidden half
    b2 = pad2(params["b2"], 1, 2 * Fp)
    w3 = pad2(params["w3"], 2 * Fp, 2 * Fp).astype(bf16)
    b3 = pad2(params["b3"], 1, 2 * Fp)
    w4 = pad2(params["w4"], 2 * Fp, Vp).astype(bf16)
    b4 = pad2(params["b4"], 1, Vp)

    # --- glue: embedding lookup + layout --------------------------------------
    # TODO(synk): fold the embedding gather into the kernel with
    # PrefetchScalarGridSpec-driven per-row DMA once shapes scale up.
    emb = jnp.pad(params["emb"], ((0, 0), (0, Fp - F)))
    x2 = jnp.take(emb, sentences, axis=0)                  # (B, T, Fp)
    x2 = jnp.transpose(x2, (1, 0, 2))                      # (T, B, Fp)
    x2 = jnp.pad(x2, ((0, 0), (0, B_pad - B), (0, 0))).astype(bf16)
    img = jnp.pad(image_features,
                  ((0, B_pad - B), (0, Dp - Dimg))).astype(bf16)

    nb = B_pad // TB
    nv = Vp // TV

    def full2d(a):
        return pl.BlockSpec(a.shape, lambda b, v: (0, 0))

    out = pl.pallas_call(
        boke_kernel,
        out_shape=jax.ShapeDtypeStruct((T, B_pad, Vp), jnp.float32),
        grid=(nb, nv),
        in_specs=[
            pl.BlockSpec((TB, Dp), lambda b, v: (b, 0)),
            pl.BlockSpec((T, TB, Fp), lambda b, v: (0, b, 0)),
            full2d(w1), full2d(b1),
            full2d(wx), full2d(wh), full2d(bl),
            full2d(w2i), full2d(w2h), full2d(b2),
            full2d(w3), full2d(b3),
            pl.BlockSpec((2 * Fp, TV), lambda b, v: (0, v)),
            pl.BlockSpec((1, TV), lambda b, v: (0, v)),
        ],
        out_specs=pl.BlockSpec((T, TB, TV), lambda b, v: (0, b, v)),
        scratch_shapes=[
            pltpu.VMEM((T * TB, 4 * Fp), jnp.float32),    # hoisted x2 @ Wx
            pltpu.VMEM((T * TB, Fp), jnp.bfloat16),       # per-step hidden states
            pltpu.VMEM((T * TB, 2 * Fp), jnp.bfloat16),   # post-fc3 activations
        ],
        compiler_params=pltpu.CompilerParams(
            dimension_semantics=("parallel", "arbitrary"),
            vmem_limit_bytes=32 * 1024 * 1024),
    )(
        img, x2,
        w1, b1, wx, wh, bl,
        w2i, w2h, b2, w3, b3, w4, b4,
    )

    # (T, B_pad, Vp) time-major, padded -> (B, T, V)
    return jnp.transpose(out[:, :B, :V], (1, 0, 2))


def boke_forward_ref(params, image_features, sentences):
    """Pure-JAX f32 reference mirroring the PyTorch forward."""
    x1 = _leaky_relu(image_features @ params["w1"] + params["b1"])  # (B, F)
    x2 = jnp.take(params["emb"], sentences, axis=0)  # (B, T, F)

    B, T, F = x2.shape
    h = jnp.zeros((B, F), jnp.float32)
    c = jnp.zeros((B, F), jnp.float32)
    hs = []
    for t in range(T):
        xt = x2[:, t, :]
        i_g = jax.nn.sigmoid(xt @ params["wxi"] + h @ params["whi"] + params["bi"])
        f_g = jax.nn.sigmoid(xt @ params["wxf"] + h @ params["whf"] + params["bf"])
        g_g = jnp.tanh(xt @ params["wxg"] + h @ params["whg"] + params["bg"])
        o_g = jax.nn.sigmoid(xt @ params["wxo"] + h @ params["who"] + params["bo"])
        c = f_g * c + i_g * g_g
        h = o_g * jnp.tanh(c)
        hs.append(h)
    x2_out = jnp.stack(hs, axis=1)  # (B, T, F)

    x1_rep = jnp.repeat(x1[:, None, :], T, axis=1)  # (B, T, F)
    x = jnp.concatenate([x1_rep, x2_out], axis=-1)  # (B, T, 2F)
    x = _leaky_relu(x @ params["w2"] + params["b2"])
    x = _leaky_relu(x @ params["w3"] + params["b3"])
    return x @ params["w4"] + params["b4"]  # (B, T, V)


if __name__ == "__main__":
    # Small synthetic configuration.
    B = 2                  # batch
    NUM_WORD = 64          # vocabulary size
    IMG_DIM = 16           # image_feature_dim
    T = 8                  # sentence_length
    F = 32                 # feature_dim

    key = jax.random.PRNGKey(0)
    k_param, k_img, k_sent = jax.random.split(key, 3)

    params = init_params(k_param, NUM_WORD, IMG_DIM, F)
    image_features = jax.random.normal(k_img, (B, IMG_DIM), dtype=jnp.float32)
    sentences = jax.random.randint(k_sent, (B, T), 0, NUM_WORD, dtype=jnp.int32)

    out = boke_forward(params, image_features, sentences, sentence_length=T)
    out = jax.block_until_ready(out)

    ref = boke_forward_ref(params, image_features, sentences)
    assert out.shape == (B, T, NUM_WORD)
    # bf16 MXU operands -> looser tolerance vs. the f32 reference.
    assert jnp.allclose(out, ref, atol=1e-2, rtol=1e-2), "mismatch vs reference"

    print("KERNEL_OK")
</pallas_src>

<mosaic_0001>
module attributes {stable_mosaic.version = 11 : i64} {
  func.func @boke_kernel(%arg0: i32, %arg1: i32, %arg2: memref<16x128xbf16, #tpu.memory_space<vmem>>, %arg3: memref<8x16x128xbf16, #tpu.memory_space<vmem>>, %arg4: memref<128x128xbf16, #tpu.memory_space<vmem>>, %arg5: memref<1x128xf32, #tpu.memory_space<vmem>>, %arg6: memref<128x512xbf16, #tpu.memory_space<vmem>>, %arg7: memref<128x512xbf16, #tpu.memory_space<vmem>>, %arg8: memref<1x512xf32, #tpu.memory_space<vmem>>, %arg9: memref<128x256xbf16, #tpu.memory_space<vmem>>, %arg10: memref<128x256xbf16, #tpu.memory_space<vmem>>, %arg11: memref<1x256xf32, #tpu.memory_space<vmem>>, %arg12: memref<256x256xbf16, #tpu.memory_space<vmem>>, %arg13: memref<1x256xf32, #tpu.memory_space<vmem>>, %arg14: memref<256x128xbf16, #tpu.memory_space<vmem>>, %arg15: memref<1x128xf32, #tpu.memory_space<vmem>>, %arg16: memref<8x16x128xf32, #tpu.memory_space<vmem>>, %arg17: memref<128x512xf32, #tpu.memory_space<vmem>>, %arg18: memref<128x128xbf16, #tpu.memory_space<vmem>>, %arg19: memref<128x256xbf16, #tpu.memory_space<vmem>>) attributes {dimension_semantics = [#tpu.dimension_semantics<parallel>, #tpu.dimension_semantics<arbitrary>], iteration_bounds = array<i64: 1, 1>, scalar_prefetch = 0 : i64, scratch_operands = 3 : i64, tpu.core_type = #tpu.core_type<tc>, window_params = [{transform_indices = @transform_0, window_bounds = array<i64: 16, 128>}, {transform_indices = @transform_1, window_bounds = array<i64: 8, 16, 128>}, {pipeline_mode = #tpu.pipeline_mode<synchronous>, transform_indices = @transform_2, window_bounds = array<i64: 128, 128>}, {pipeline_mode = #tpu.pipeline_mode<synchronous>, transform_indices = @transform_3, window_bounds = array<i64: 1, 128>}, {pipeline_mode = #tpu.pipeline_mode<synchronous>, transform_indices = @transform_4, window_bounds = array<i64: 128, 512>}, {pipeline_mode = #tpu.pipeline_mode<synchronous>, transform_indices = @transform_5, window_bounds = array<i64: 128, 512>}, {pipeline_mode = #tpu.pipeline_mode<synchronous>, transform_indices = @transform_6, window_bounds = array<i64: 1, 512>}, {pipeline_mode = #tpu.pipeline_mode<synchronous>, transform_indices = @transform_7, window_bounds = array<i64: 128, 256>}, {pipeline_mode = #tpu.pipeline_mode<synchronous>, transform_indices = @transform_8, window_bounds = array<i64: 128, 256>}, {pipeline_mode = #tpu.pipeline_mode<synchronous>, transform_indices = @transform_9, window_bounds = array<i64: 1, 256>}, {pipeline_mode = #tpu.pipeline_mode<synchronous>, transform_indices = @transform_10, window_bounds = array<i64: 256, 256>}, {pipeline_mode = #tpu.pipeline_mode<synchronous>, transform_indices = @transform_11, window_bounds = array<i64: 1, 256>}, {transform_indices = @transform_12, window_bounds = array<i64: 256, 128>}, {transform_indices = @transform_13, window_bounds = array<i64: 1, 128>}, {transform_indices = @transform_14, window_bounds = array<i64: 8, 16, 128>}]} {
    %c0_i32 = arith.constant 0 : i32
    %0 = arith.cmpi eq, %arg1, %c0_i32 : i32
    %1 = arith.extui %0 : i1 to i32
    %c0_i32_0 = arith.constant 0 : i32
    %2 = arith.cmpi ne, %1, %c0_i32_0 : i32
    scf.if %2 {
      %c0_9 = arith.constant 0 : index
      %c0_10 = arith.constant 0 : index
      %11 = vector.load %arg2[%c0_9, %c0_10] : memref<16x128xbf16, #tpu.memory_space<vmem>>, vector<16x128xbf16>
      %c0_11 = arith.constant 0 : index
      %c0_12 = arith.constant 0 : index
      %12 = vector.load %arg4[%c0_11, %c0_12] : memref<128x128xbf16, #tpu.memory_space<vmem>>, vector<128x128xbf16>
      %cst_13 = arith.constant dense<0.000000e+00> : vector<16x128xf32>
      %13 = tpu.matmul %11, %12, %cst_13 {dimension_numbers = #tpu.dot_dimension_numbers<[1], [0], [0], [1], [0, 0, 1, 1], [], []>} : vector<16x128xbf16>, vector<128x128xbf16>, vector<16x128xf32> -> vector<16x128xf32>
      %c0_14 = arith.constant 0 : index
      %c0_15 = arith.constant 0 : index
      %14 = vector.load %arg5[%c0_14, %c0_15] : memref<1x128xf32, #tpu.memory_space<vmem>>, vector<1x128xf32>
      %15 = vector.broadcast %14 : vector<1x128xf32> to vector<16x128xf32>
      %16 = arith.addf %13, %15 : vector<16x128xf32>
      %cst_16 = arith.constant 0.000000e+00 : f32
      %17 = vector.broadcast %cst_16 : f32 to vector<16x128xf32>
      %18 = arith.cmpf ogt, %16, %17 : vector<16x128xf32>
      %cst_17 = arith.constant 0.00999999977 : f32
      %19 = vector.broadcast %cst_17 : f32 to vector<16x128xf32>
      %20 = arith.mulf %19, %16 : vector<16x128xf32>
      %21 = arith.select %18, %16, %20 : vector<16x128xi1>, vector<16x128xf32>
      %22 = arith.truncf %21 : vector<16x128xf32> to vector<16x128xbf16>
      %c0_18 = arith.constant 0 : index
      %c0_19 = arith.constant 0 : index
      %23 = vector.load %arg9[%c0_18, %c0_19] : memref<128x256xbf16, #tpu.memory_space<vmem>>, vector<128x256xbf16>
      %cst_20 = arith.constant dense<0.000000e+00> : vector<16x256xf32>
      %24 = tpu.matmul %22, %23, %cst_20 {dimension_numbers = #tpu.dot_dimension_numbers<[1], [0], [0], [1], [0, 0, 1, 1], [], []>} : vector<16x128xbf16>, vector<128x256xbf16>, vector<16x256xf32> -> vector<16x256xf32>
      %c0_21 = arith.constant 0 : index
      %c0_22 = arith.constant 0 : index
      %25 = vector.load %arg11[%c0_21, %c0_22] : memref<1x256xf32, #tpu.memory_space<vmem>>, vector<1x256xf32>
      %26 = vector.broadcast %25 : vector<1x256xf32> to vector<16x256xf32>
      %27 = arith.addf %24, %26 : vector<16x256xf32>
      %c0_23 = arith.constant 0 : index
      %c0_24 = arith.constant 0 : index
      %c0_25 = arith.constant 0 : index
      %28 = vector.load %arg3[%c0_23, %c0_24, %c0_25] : memref<8x16x128xbf16, #tpu.memory_space<vmem>>, vector<8x16x128xbf16>
      %29 = vector.shape_cast %28 : vector<8x16x128xbf16> to vector<128x128xbf16>
      %c0_26 = arith.constant 0 : index
      %c0_27 = arith.constant 0 : index
      %30 = vector.load %arg6[%c0_26, %c0_27] : memref<128x512xbf16, #tpu.memory_space<vmem>>, vector<128x512xbf16>
      %cst_28 = arith.constant dense<0.000000e+00> : vector<128x512xf32>
      %31 = tpu.matmul %29, %30, %cst_28 {dimension_numbers = #tpu.dot_dimension_numbers<[1], [0], [0], [1], [0, 0, 1, 1], [], []>} : vector<128x128xbf16>, vector<128x512xbf16>, vector<128x512xf32> -> vector<128x512xf32>
      %c0_29 = arith.constant 0 : index
      %c0_30 = arith.constant 0 : index
      %32 = vector.load %arg8[%c0_29, %c0_30] : memref<1x512xf32, #tpu.memory_space<vmem>>, vector<1x512xf32>
      %33 = vector.broadcast %32 : vector<1x512xf32> to vector<128x512xf32>
      %34 = arith.addf %31, %33 : vector<128x512xf32>
      %c0_31 = arith.constant 0 : index
      %c0_32 = arith.constant 0 : index
      %35 = vector.load %arg17[%c0_31, %c0_32] : memref<128x512xf32, #tpu.memory_space<vmem>>, vector<128x512xf32>
      tpu.vector_store %arg17[%c0_31, %c0_32], %34 {strides = array<i32>} : memref<128x512xf32, #tpu.memory_space<vmem>>, vector<128x512xf32>,
      %cst_33 = arith.constant 0.000000e+00 : f32
      %36 = vector.broadcast %cst_33 : f32 to vector<16x128xf32>
      %c0_i32_34 = arith.constant 0 : i32
      %c16_i32 = arith.constant 16 : i32
      %37 = arith.muli %c0_i32_34, %c16_i32 : i32
      %38 = tpu.assume_multiple %37, 16 : i32
      %39 = arith.index_cast %38 : i32 to index
      %c0_35 = arith.constant 0 : index
      %40 = vector.load %arg17[%39, %c0_35] : memref<128x512xf32, #tpu.memory_space<vmem>>, vector<16x512xf32>
      %41 = arith.truncf %36 : vector<16x128xf32> to vector<16x128xbf16>
      %c0_36 = arith.constant 0 : index
      %c0_37 = arith.constant 0 : index
      %42 = vector.load %arg7[%c0_36, %c0_37] : memref<128x512xbf16, #tpu.memory_space<vmem>>, vector<128x512xbf16>
      %cst_38 = arith.constant dense<0.000000e+00> : vector<16x512xf32>
      %43 = tpu.matmul %41, %42, %cst_38 {dimension_numbers = #tpu.dot_dimension_numbers<[1], [0], [0], [1], [0, 0, 1, 1], [], []>} : vector<16x128xbf16>, vector<128x512xbf16>, vector<16x512xf32> -> vector<16x512xf32>
      %44 = arith.addf %40, %43 : vector<16x512xf32>
      %45 = vector.extract_strided_slice %44 {offsets = [0, 0], sizes = [16, 384], strides = [1, 1]} : vector<16x512xf32> to vector<16x384xf32>
      %46 = arith.negf %45 : vector<16x384xf32>
      %47 = math.exp %46 : vector<16x384xf32>
      %cst_39 = arith.constant 1.000000e+00 : f32
      %48 = vector.broadcast %cst_39 : f32 to vector<16x384xf32>
      %49 = arith.addf %48, %47 : vector<16x384xf32>
      %50 = arith.divf %48, %49 : vector<16x384xf32>
      %51 = vector.extract_strided_slice %44 {offsets = [0, 384], sizes = [16, 128], strides = [1, 1]} : vector<16x512xf32> to vector<16x128xf32>
      %52 = math.tanh %51 : vector<16x128xf32>
      %53 = vector.extract_strided_slice %50 {offsets = [0, 0], sizes = [16, 128], strides = [1, 1]} : vector<16x384xf32> to vector<16x128xf32>
      %54 = vector.extract_strided_slice %50 {offsets = [0, 128], sizes = [16, 128], strides = [1, 1]} : vector<16x384xf32> to vector<16x128xf32>
      %55 = vector.extract_strided_slice %50 {offsets = [0, 256], sizes = [16, 128], strides = [1, 1]} : vector<16x384xf32> to vector<16x128xf32>
      %56 = arith.mulf %54, %36 : vector<16x128xf32>
      %57 = arith.mulf %53, %52 : vector<16x128xf32>
      %58 = arith.addf %56, %57 : vector<16x128xf32>
      %59 = math.tanh %58 : vector<16x128xf32>
      %60 = arith.mulf %55, %59 : vector<16x128xf32>
      %61 = arith.truncf %60 : vector<16x128xf32> to vector<16x128xbf16>
      %62 = arith.index_cast %38 : i32 to index
      %c0_40 = arith.constant 0 : index
      %63 = vector.load %arg18[%62, %c0_40] : memref<128x128xbf16, #tpu.memory_space<vmem>>, vector<16x128xbf16>
      tpu.vector_store %arg18[%62, %c0_40], %61 {strides = array<i32>} : memref<128x128xbf16, #tpu.memory_space<vmem>>, vector<16x128xbf16>,
      %c1_i32 = arith.constant 1 : i32
      %c16_i32_41 = arith.constant 16 : i32
      %64 = arith.muli %c1_i32, %c16_i32_41 : i32
      %65 = tpu.assume_multiple %64, 16 : i32
      %66 = arith.index_cast %65 : i32 to index
      %c0_42 = arith.constant 0 : index
      %67 = vector.load %arg17[%66, %c0_42] : memref<128x512xf32, #tpu.memory_space<vmem>>, vector<16x512xf32>
      %68 = arith.truncf %60 : vector<16x128xf32> to vector<16x128xbf16>
      %c0_43 = arith.constant 0 : index
      %c0_44 = arith.constant 0 : index
      %69 = vector.load %arg7[%c0_43, %c0_44] : memref<128x512xbf16, #tpu.memory_space<vmem>>, vector<128x512xbf16>
      %cst_45 = arith.constant dense<0.000000e+00> : vector<16x512xf32>
      %70 = tpu.matmul %68, %69, %cst_45 {dimension_numbers = #tpu.dot_dimension_numbers<[1], [0], [0], [1], [0, 0, 1, 1], [], []>} : vector<16x128xbf16>, vector<128x512xbf16>, vector<16x512xf32> -> vector<16x512xf32>
      %71 = arith.addf %67, %70 : vector<16x512xf32>
      %72 = vector.extract_strided_slice %71 {offsets = [0, 0], sizes = [16, 384], strides = [1, 1]} : vector<16x512xf32> to vector<16x384xf32>
      %73 = arith.negf %72 : vector<16x384xf32>
      %74 = math.exp %73 : vector<16x384xf32>
      %cst_46 = arith.constant 1.000000e+00 : f32
      %75 = vector.broadcast %cst_46 : f32 to vector<16x384xf32>
      %76 = arith.addf %75, %74 : vector<16x384xf32>
      %77 = arith.divf %75, %76 : vector<16x384xf32>
      %78 = vector.extract_strided_slice %71 {offsets = [0, 384], sizes = [16, 128], strides = [1, 1]} : vector<16x512xf32> to vector<16x128xf32>
      %79 = math.tanh %78 : vector<16x128xf32>
      %80 = vector.extract_strided_slice %77 {offsets = [0, 0], sizes = [16, 128], strides = [1, 1]} : vector<16x384xf32> to vector<16x128xf32>
      %81 = vector.extract_strided_slice %77 {offsets = [0, 128], sizes = [16, 128], strides = [1, 1]} : vector<16x384xf32> to vector<16x128xf32>
      %82 = vector.extract_strided_slice %77 {offsets = [0, 256], sizes = [16, 128], strides = [1, 1]} : vector<16x384xf32> to vector<16x128xf32>
      %83 = arith.mulf %81, %58 : vector<16x128xf32>
      %84 = arith.mulf %80, %79 : vector<16x128xf32>
      %85 = arith.addf %83, %84 : vector<16x128xf32>
      %86 = math.tanh %85 : vector<16x128xf32>
      %87 = arith.mulf %82, %86 : vector<16x128xf32>
      %88 = arith.truncf %87 : vector<16x128xf32> to vector<16x128xbf16>
      %89 = arith.index_cast %65 : i32 to index
      %c0_47 = arith.constant 0 : index
      %90 = vector.load %arg18[%89, %c0_47] : memref<128x128xbf16, #tpu.memory_space<vmem>>, vector<16x128xbf16>
      tpu.vector_store %arg18[%89, %c0_47], %88 {strides = array<i32>} : memref<128x128xbf16, #tpu.memory_space<vmem>>, vector<16x128xbf16>,
      %c2_i32 = arith.constant 2 : i32
      %c16_i32_48 = arith.constant 16 : i32
      %91 = arith.muli %c2_i32, %c16_i32_48 : i32
      %92 = tpu.assume_multiple %91, 16 : i32
      %93 = arith.index_cast %92 : i32 to index
      %c0_49 = arith.constant 0 : index
      %94 = vector.load %arg17[%93, %c0_49] : memref<128x512xf32, #tpu.memory_space<vmem>>, vector<16x512xf32>
      %95 = arith.truncf %87 : vector<16x128xf32> to vector<16x128xbf16>
      %c0_50 = arith.constant 0 : index
      %c0_51 = arith.constant 0 : index
      %96 = vector.load %arg7[%c0_50, %c0_51] : memref<128x512xbf16, #tpu.memory_space<vmem>>, vector<128x512xbf16>
      %cst_52 = arith.constant dense<0.000000e+00> : vector<16x512xf32>
      %97 = tpu.matmul %95, %96, %cst_52 {dimension_numbers = #tpu.dot_dimension_numbers<[1], [0], [0], [1], [0, 0, 1, 1], [], []>} : vector<16x128xbf16>, vector<128x512xbf16>, vector<16x512xf32> -> vector<16x512xf32>
      %98 = arith.addf %94, %97 : vector<16x512xf32>
      %99 = vector.extract_strided_slice %98 {offsets = [0, 0], sizes = [16, 384], strides = [1, 1]} : vector<16x512xf32> to vector<16x384xf32>
      %100 = arith.negf %99 : vector<16x384xf32>
      %101 = math.exp %100 : vector<16x384xf32>
      %cst_53 = arith.constant 1.000000e+00 : f32
      %102 = vector.broadcast %cst_53 : f32 to vector<16x384xf32>
      %103 = arith.addf %102, %101 : vector<16x384xf32>
      %104 = arith.divf %102, %103 : vector<16x384xf32>
      %105 = vector.extract_strided_slice %98 {offsets = [0, 384], sizes = [16, 128], strides = [1, 1]} : vector<16x512xf32> to vector<16x128xf32>
      %106 = math.tanh %105 : vector<16x128xf32>
      %107 = vector.extract_strided_slice %104 {offsets = [0, 0], sizes = [16, 128], strides = [1, 1]} : vector<16x384xf32> to vector<16x128xf32>
      %108 = vector.extract_strided_slice %104 {offsets = [0, 128], sizes = [16, 128], strides = [1, 1]} : vector<16x384xf32> to vector<16x128xf32>
      %109 = vector.extract_strided_slice %104 {offsets = [0, 256], sizes = [16, 128], strides = [1, 1]} : vector<16x384xf32> to vector<16x128xf32>
      %110 = arith.mulf %108, %85 : vector<16x128xf32>
      %111 = arith.mulf %107, %106 : vector<16x128xf32>
      %112 = arith.addf %110, %111 : vector<16x128xf32>
      %113 = math.tanh %112 : vector<16x128xf32>
      %114 = arith.mulf %109, %113 : vector<16x128xf32>
      %115 = arith.truncf %114 : vector<16x128xf32> to vector<16x128xbf16>
      %116 = arith.index_cast %92 : i32 to index
      %c0_54 = arith.constant 0 : index
      %117 = vector.load %arg18[%116, %c0_54] : memref<128x128xbf16, #tpu.memory_space<vmem>>, vector<16x128xbf16>
      tpu.vector_store %arg18[%116, %c0_54], %115 {strides = array<i32>} : memref<128x128xbf16, #tpu.memory_space<vmem>>, vector<16x128xbf16>,
      %c3_i32 = arith.constant 3 : i32
      %c16_i32_55 = arith.constant 16 : i32
      %118 = arith.muli %c3_i32, %c16_i32_55 : i32
      %119 = tpu.assume_multiple %118, 16 : i32
      %120 = arith.index_cast %119 : i32 to index
      %c0_56 = arith.constant 0 : index
      %121 = vector.load %arg17[%120, %c0_56] : memref<128x512xf32, #tpu.memory_space<vmem>>, vector<16x512xf32>
      %122 = arith.truncf %114 : vector<16x128xf32> to vector<16x128xbf16>
      %c0_57 = arith.constant 0 : index
      %c0_58 = arith.constant 0 : index
      %123 = vector.load %arg7[%c0_57, %c0_58] : memref<128x512xbf16, #tpu.memory_space<vmem>>, vector<128x512xbf16>
      %cst_59 = arith.constant dense<0.000000e+00> : vector<16x512xf32>
      %124 = tpu.matmul %122, %123, %cst_59 {dimension_numbers = #tpu.dot_dimension_numbers<[1], [0], [0], [1], [0, 0, 1, 1], [], []>} : vector<16x128xbf16>, vector<128x512xbf16>, vector<16x512xf32> -> vector<16x512xf32>
      %125 = arith.addf %121, %124 : vector<16x512xf32>
      %126 = vector.extract_strided_slice %125 {offsets = [0, 0], sizes = [16, 384], strides = [1, 1]} : vector<16x512xf32> to vector<16x384xf32>
      %127 = arith.negf %126 : vector<16x384xf32>
      %128 = math.exp %127 : vector<16x384xf32>
      %cst_60 = arith.constant 1.000000e+00 : f32
      %129 = vector.broadcast %cst_60 : f32 to vector<16x384xf32>
      %130 = arith.addf %129, %128 : vector<16x384xf32>
      %131 = arith.divf %129, %130 : vector<16x384xf32>
      %132 = vector.extract_strided_slice %125 {offsets = [0, 384], sizes = [16, 128], strides = [1, 1]} : vector<16x512xf32> to vector<16x128xf32>
      %133 = math.tanh %132 : vector<16x128xf32>
      %134 = vector.extract_strided_slice %131 {offsets = [0, 0], sizes = [16, 128], strides = [1, 1]} : vector<16x384xf32> to vector<16x128xf32>
      %135 = vector.extract_strided_slice %131 {offsets = [0, 128], sizes = [16, 128], strides = [1, 1]} : vector<16x384xf32> to vector<16x128xf32>
      %136 = vector.extract_strided_slice %131 {offsets = [0, 256], sizes = [16, 128], strides = [1, 1]} : vector<16x384xf32> to vector<16x128xf32>
      %137 = arith.mulf %135, %112 : vector<16x128xf32>
      %138 = arith.mulf %134, %133 : vector<16x128xf32>
      %139 = arith.addf %137, %138 : vector<16x128xf32>
      %140 = math.tanh %139 : vector<16x128xf32>
      %141 = arith.mulf %136, %140 : vector<16x128xf32>
      %142 = arith.truncf %141 : vector<16x128xf32> to vector<16x128xbf16>
      %143 = arith.index_cast %119 : i32 to index
      %c0_61 = arith.constant 0 : index
      %144 = vector.load %arg18[%143, %c0_61] : memref<128x128xbf16, #tpu.memory_space<vmem>>, vector<16x128xbf16>
      tpu.vector_store %arg18[%143, %c0_61], %142 {strides = array<i32>} : memref<128x128xbf16, #tpu.memory_space<vmem>>, vector<16x128xbf16>,
      %c4_i32 = arith.constant 4 : i32
      %c16_i32_62 = arith.constant 16 : i32
      %145 = arith.muli %c4_i32, %c16_i32_62 : i32
      %146 = tpu.assume_multiple %145, 16 : i32
      %147 = arith.index_cast %146 : i32 to index
      %c0_63 = arith.constant 0 : index
      %148 = vector.load %arg17[%147, %c0_63] : memref<128x512xf32, #tpu.memory_space<vmem>>, vector<16x512xf32>
      %149 = arith.truncf %141 : vector<16x128xf32> to vector<16x128xbf16>
      %c0_64 = arith.constant 0 : index
      %c0_65 = arith.constant 0 : index
      %150 = vector.load %arg7[%c0_64, %c0_65] : memref<128x512xbf16, #tpu.memory_space<vmem>>, vector<128x512xbf16>
      %cst_66 = arith.constant dense<0.000000e+00> : vector<16x512xf32>
      %151 = tpu.matmul %149, %150, %cst_66 {dimension_numbers = #tpu.dot_dimension_numbers<[1], [0], [0], [1], [0, 0, 1, 1], [], []>} : vector<16x128xbf16>, vector<128x512xbf16>, vector<16x512xf32> -> vector<16x512xf32>
      %152 = arith.addf %148, %151 : vector<16x512xf32>
      %153 = vector.extract_strided_slice %152 {offsets = [0, 0], sizes = [16, 384], strides = [1, 1]} : vector<16x512xf32> to vector<16x384xf32>
      %154 = arith.negf %153 : vector<16x384xf32>
      %155 = math.exp %154 : vector<16x384xf32>
      %cst_67 = arith.constant 1.000000e+00 : f32
      %156 = vector.broadcast %cst_67 : f32 to vector<16x384xf32>
      %157 = arith.addf %156, %155 : vector<16x384xf32>
      %158 = arith.divf %156, %157 : vector<16x384xf32>
      %159 = vector.extract_strided_slice %152 {offsets = [0, 384], sizes = [16, 128], strides = [1, 1]} : vector<16x512xf32> to vector<16x128xf32>
      %160 = math.tanh %159 : vector<16x128xf32>
      %161 = vector.extract_strided_slice %158 {offsets = [0, 0], sizes = [16, 128], strides = [1, 1]} : vector<16x384xf32> to vector<16x128xf32>
      %162 = vector.extract_strided_slice %158 {offsets = [0, 128], sizes = [16, 128], strides = [1, 1]} : vector<16x384xf32> to vector<16x128xf32>
      %163 = vector.extract_strided_slice %158 {offsets = [0, 256], sizes = [16, 128], strides = [1, 1]} : vector<16x384xf32> to vector<16x128xf32>
      %164 = arith.mulf %162, %139 : vector<16x128xf32>
      %165 = arith.mulf %161, %160 : vector<16x128xf32>
      %166 = arith.addf %164, %165 : vector<16x128xf32>
      %167 = math.tanh %166 : vector<16x128xf32>
      %168 = arith.mulf %163, %167 : vector<16x128xf32>
      %169 = arith.truncf %168 : vector<16x128xf32> to vector<16x128xbf16>
      %170 = arith.index_cast %146 : i32 to index
      %c0_68 = arith.constant 0 : index
      %171 = vector.load %arg18[%170, %c0_68] : memref<128x128xbf16, #tpu.memory_space<vmem>>, vector<16x128xbf16>
      tpu.vector_store %arg18[%170, %c0_68], %169 {strides = array<i32>} : memref<128x128xbf16, #tpu.memory_space<vmem>>, vector<16x128xbf16>,
      %c5_i32 = arith.constant 5 : i32
      %c16_i32_69 = arith.constant 16 : i32
      %172 = arith.muli %c5_i32, %c16_i32_69 : i32
      %173 = tpu.assume_multiple %172, 16 : i32
      %174 = arith.index_cast %173 : i32 to index
      %c0_70 = arith.constant 0 : index
      %175 = vector.load %arg17[%174, %c0_70] : memref<128x512xf32, #tpu.memory_space<vmem>>, vector<16x512xf32>
      %176 = arith.truncf %168 : vector<16x128xf32> to vector<16x128xbf16>
      %c0_71 = arith.constant 0 : index
      %c0_72 = arith.constant 0 : index
      %177 = vector.load %arg7[%c0_71, %c0_72] : memref<128x512xbf16, #tpu.memory_space<vmem>>, vector<128x512xbf16>
      %cst_73 = arith.constant dense<0.000000e+00> : vector<16x512xf32>
      %178 = tpu.matmul %176, %177, %cst_73 {dimension_numbers = #tpu.dot_dimension_numbers<[1], [0], [0], [1], [0, 0, 1, 1], [], []>} : vector<16x128xbf16>, vector<128x512xbf16>, vector<16x512xf32> -> vector<16x512xf32>
      %179 = arith.addf %175, %178 : vector<16x512xf32>
      %180 = vector.extract_strided_slice %179 {offsets = [0, 0], sizes = [16, 384], strides = [1, 1]} : vector<16x512xf32> to vector<16x384xf32>
      %181 = arith.negf %180 : vector<16x384xf32>
      %182 = math.exp %181 : vector<16x384xf32>
      %cst_74 = arith.constant 1.000000e+00 : f32
      %183 = vector.broadcast %cst_74 : f32 to vector<16x384xf32>
      %184 = arith.addf %183, %182 : vector<16x384xf32>
      %185 = arith.divf %183, %184 : vector<16x384xf32>
      %186 = vector.extract_strided_slice %179 {offsets = [0, 384], sizes = [16, 128], strides = [1, 1]} : vector<16x512xf32> to vector<16x128xf32>
      %187 = math.tanh %186 : vector<16x128xf32>
      %188 = vector.extract_strided_slice %185 {offsets = [0, 0], sizes = [16, 128], strides = [1, 1]} : vector<16x384xf32> to vector<16x128xf32>
      %189 = vector.extract_strided_slice %185 {offsets = [0, 128], sizes = [16, 128], strides = [1, 1]} : vector<16x384xf32> to vector<16x128xf32>
      %190 = vector.extract_strided_slice %185 {offsets = [0, 256], sizes = [16, 128], strides = [1, 1]} : vector<16x384xf32> to vector<16x128xf32>
      %191 = arith.mulf %189, %166 : vector<16x128xf32>
      %192 = arith.mulf %188, %187 : vector<16x128xf32>
      %193 = arith.addf %191, %192 : vector<16x128xf32>
      %194 = math.tanh %193 : vector<16x128xf32>
      %195 = arith.mulf %190, %194 : vector<16x128xf32>
      %196 = arith.truncf %195 : vector<16x128xf32> to vector<16x128xbf16>
      %197 = arith.index_cast %173 : i32 to index
      %c0_75 = arith.constant 0 : index
      %198 = vector.load %arg18[%197, %c0_75] : memref<128x128xbf16, #tpu.memory_space<vmem>>, vector<16x128xbf16>
      tpu.vector_store %arg18[%197, %c0_75], %196 {strides = array<i32>} : memref<128x128xbf16, #tpu.memory_space<vmem>>, vector<16x128xbf16>,
      %c6_i32 = arith.constant 6 : i32
      %c16_i32_76 = arith.constant 16 : i32
      %199 = arith.muli %c6_i32, %c16_i32_76 : i32
      %200 = tpu.assume_multiple %199, 16 : i32
      %201 = arith.index_cast %200 : i32 to index
      %c0_77 = arith.constant 0 : index
      %202 = vector.load %arg17[%201, %c0_77] : memref<128x512xf32, #tpu.memory_space<vmem>>, vector<16x512xf32>
      %203 = arith.truncf %195 : vector<16x128xf32> to vector<16x128xbf16>
      %c0_78 = arith.constant 0 : index
      %c0_79 = arith.constant 0 : index
      %204 = vector.load %arg7[%c0_78, %c0_79] : memref<128x512xbf16, #tpu.memory_space<vmem>>, vector<128x512xbf16>
      %cst_80 = arith.constant dense<0.000000e+00> : vector<16x512xf32>
      %205 = tpu.matmul %203, %204, %cst_80 {dimension_numbers = #tpu.dot_dimension_numbers<[1], [0], [0], [1], [0, 0, 1, 1], [], []>} : vector<16x128xbf16>, vector<128x512xbf16>, vector<16x512xf32> -> vector<16x512xf32>
      %206 = arith.addf %202, %205 : vector<16x512xf32>
      %207 = vector.extract_strided_slice %206 {offsets = [0, 0], sizes = [16, 384], strides = [1, 1]} : vector<16x512xf32> to vector<16x384xf32>
      %208 = arith.negf %207 : vector<16x384xf32>
      %209 = math.exp %208 : vector<16x384xf32>
      %cst_81 = arith.constant 1.000000e+00 : f32
      %210 = vector.broadcast %cst_81 : f32 to vector<16x384xf32>
      %211 = arith.addf %210, %209 : vector<16x384xf32>
      %212 = arith.divf %210, %211 : vector<16x384xf32>
      %213 = vector.extract_strided_slice %206 {offsets = [0, 384], sizes = [16, 128], strides = [1, 1]} : vector<16x512xf32> to vector<16x128xf32>
      %214 = math.tanh %213 : vector<16x128xf32>
      %215 = vector.extract_strided_slice %212 {offsets = [0, 0], sizes = [16, 128], strides = [1, 1]} : vector<16x384xf32> to vector<16x128xf32>
      %216 = vector.extract_strided_slice %212 {offsets = [0, 128], sizes = [16, 128], strides = [1, 1]} : vector<16x384xf32> to vector<16x128xf32>
      %217 = vector.extract_strided_slice %212 {offsets = [0, 256], sizes = [16, 128], strides = [1, 1]} : vector<16x384xf32> to vector<16x128xf32>
      %218 = arith.mulf %216, %193 : vector<16x128xf32>
      %219 = arith.mulf %215, %214 : vector<16x128xf32>
      %220 = arith.addf %218, %219 : vector<16x128xf32>
      %221 = math.tanh %220 : vector<16x128xf32>
      %222 = arith.mulf %217, %221 : vector<16x128xf32>
      %223 = arith.truncf %222 : vector<16x128xf32> to vector<16x128xbf16>
      %224 = arith.index_cast %200 : i32 to index
      %c0_82 = arith.constant 0 : index
      %225 = vector.load %arg18[%224, %c0_82] : memref<128x128xbf16, #tpu.memory_space<vmem>>, vector<16x128xbf16>
      tpu.vector_store %arg18[%224, %c0_82], %223 {strides = array<i32>} : memref<128x128xbf16, #tpu.memory_space<vmem>>, vector<16x128xbf16>,
      %c7_i32 = arith.constant 7 : i32
      %c16_i32_83 = arith.constant 16 : i32
      %226 = arith.muli %c7_i32, %c16_i32_83 : i32
      %227 = tpu.assume_multiple %226, 16 : i32
      %228 = arith.index_cast %227 : i32 to index
      %c0_84 = arith.constant 0 : index
      %229 = vector.load %arg17[%228, %c0_84] : memref<128x512xf32, #tpu.memory_space<vmem>>, vector<16x512xf32>
      %230 = arith.truncf %222 : vector<16x128xf32> to vector<16x128xbf16>
      %c0_85 = arith.constant 0 : index
      %c0_86 = arith.constant 0 : index
      %231 = vector.load %arg7[%c0_85, %c0_86] : memref<128x512xbf16, #tpu.memory_space<vmem>>, vector<128x512xbf16>
      %cst_87 = arith.constant dense<0.000000e+00> : vector<16x512xf32>
      %232 = tpu.matmul %230, %231, %cst_87 {dimension_numbers = #tpu.dot_dimension_numbers<[1], [0], [0], [1], [0, 0, 1, 1], [], []>} : vector<16x128xbf16>, vector<128x512xbf16>, vector<16x512xf32> -> vector<16x512xf32>
      %233 = arith.addf %229, %232 : vector<16x512xf32>
      %234 = vector.extract_strided_slice %233 {offsets = [0, 0], sizes = [16, 384], strides = [1, 1]} : vector<16x512xf32> to vector<16x384xf32>
      %235 = arith.negf %234 : vector<16x384xf32>
      %236 = math.exp %235 : vector<16x384xf32>
      %cst_88 = arith.constant 1.000000e+00 : f32
      %237 = vector.broadcast %cst_88 : f32 to vector<16x384xf32>
      %238 = arith.addf %237, %236 : vector<16x384xf32>
      %239 = arith.divf %237, %238 : vector<16x384xf32>
      %240 = vector.extract_strided_slice %233 {offsets = [0, 384], sizes = [16, 128], strides = [1, 1]} : vector<16x512xf32> to vector<16x128xf32>
      %241 = math.tanh %240 : vector<16x128xf32>
      %242 = vector.extract_strided_slice %239 {offsets = [0, 0], sizes = [16, 128], strides = [1, 1]} : vector<16x384xf32> to vector<16x128xf32>
      %243 = vector.extract_strided_slice %239 {offsets = [0, 128], sizes = [16, 128], strides = [1, 1]} : vector<16x384xf32> to vector<16x128xf32>
      %244 = vector.extract_strided_slice %239 {offsets = [0, 256], sizes = [16, 128], strides = [1, 1]} : vector<16x384xf32> to vector<16x128xf32>
      %245 = arith.mulf %243, %220 : vector<16x128xf32>
      %246 = arith.mulf %242, %241 : vector<16x128xf32>
      %247 = arith.addf %245, %246 : vector<16x128xf32>
      %248 = math.tanh %247 : vector<16x128xf32>
      %249 = arith.mulf %244, %248 : vector<16x128xf32>
      %250 = arith.truncf %249 : vector<16x128xf32> to vector<16x128xbf16>
      %251 = arith.index_cast %227 : i32 to index
      %c0_89 = arith.constant 0 : index
      %252 = vector.load %arg18[%251, %c0_89] : memref<128x128xbf16, #tpu.memory_space<vmem>>, vector<16x128xbf16>
      tpu.vector_store %arg18[%251, %c0_89], %250 {strides = array<i32>} : memref<128x128xbf16, #tpu.memory_space<vmem>>, vector<16x128xbf16>,
      %c8_i32 = arith.constant 8 : i32
      %c0_90 = arith.constant 0 : index
      %c0_91 = arith.constant 0 : index
      %253 = vector.load %arg18[%c0_90, %c0_91] : memref<128x128xbf16, #tpu.memory_space<vmem>>, vector<128x128xbf16>
      %c0_92 = arith.constant 0 : index
      %c0_93 = arith.constant 0 : index
      %254 = vector.load %arg10[%c0_92, %c0_93] : memref<128x256xbf16, #tpu.memory_space<vmem>>, vector<128x256xbf16>
      %cst_94 = arith.constant dense<0.000000e+00> : vector<128x256xf32>
      %255 = tpu.matmul %253, %254, %cst_94 {dimension_numbers = #tpu.dot_dimension_numbers<[1], [0], [0], [1], [0, 0, 1, 1], [], []>} : vector<128x128xbf16>, vector<128x256xbf16>, vector<128x256xf32> -> vector<128x256xf32>
      %256 = vector.shape_cast %255 : vector<128x256xf32> to vector<8x16x256xf32>
      %257 = vector.shape_cast %27 : vector<16x256xf32> to vector<1x16x256xf32>
      %258 = vector.broadcast %257 : vector<1x16x256xf32> to vector<8x16x256xf32>
      %259 = arith.addf %256, %258 : vector<8x16x256xf32>
      %cst_95 = arith.constant 0.000000e+00 : f32
      %260 = vector.broadcast %cst_95 : f32 to vector<8x16x256xf32>
      %261 = arith.cmpf ogt, %259, %260 : vector<8x16x256xf32>
      %cst_96 = arith.constant 0.00999999977 : f32
      %262 = vector.broadcast %cst_96 : f32 to vector<8x16x256xf32>
      %263 = arith.mulf %262, %259 : vector<8x16x256xf32>
      %264 = arith.select %261, %259, %263 : vector<8x16x256xi1>, vector<8x16x256xf32>
      %265 = vector.shape_cast %264 : vector<8x16x256xf32> to vector<128x256xf32>
      %266 = arith.truncf %265 : vector<128x256xf32> to vector<128x256xbf16>
      %c0_97 = arith.constant 0 : index
      %c0_98 = arith.constant 0 : index
      %267 = vector.load %arg12[%c0_97, %c0_98] : memref<256x256xbf16, #tpu.memory_space<vmem>>, vector<256x256xbf16>
      %cst_99 = arith.constant dense<0.000000e+00> : vector<128x256xf32>
      %268 = tpu.matmul %266, %267, %cst_99 {dimension_numbers = #tpu.dot_dimension_numbers<[1], [0], [0], [1], [0, 0, 1, 1], [], []>} : vector<128x256xbf16>, vector<256x256xbf16>, vector<128x256xf32> -> vector<128x256xf32>
      %c0_100 = arith.constant 0 : index
      %c0_101 = arith.constant 0 : index
      %269 = vector.load %arg13[%c0_100, %c0_101] : memref<1x256xf32, #tpu.memory_space<vmem>>, vector<1x256xf32>
      %270 = vector.broadcast %269 : vector<1x256xf32> to vector<128x256xf32>
      %271 = arith.addf %268, %270 : vector<128x256xf32>
      %cst_102 = arith.constant 0.000000e+00 : f32
      %272 = vector.broadcast %cst_102 : f32 to vector<128x256xf32>
      %273 = arith.cmpf ogt, %271, %272 : vector<128x256xf32>
      %cst_103 = arith.constant 0.00999999977 : f32
      %274 = vector.broadcast %cst_103 : f32 to vector<128x256xf32>
      %275 = arith.mulf %274, %271 : vector<128x256xf32>
      %276 = arith.select %273, %271, %275 : vector<128x256xi1>, vector<128x256xf32>
      %277 = arith.truncf %276 : vector<128x256xf32> to vector<128x256xbf16>
      %c0_104 = arith.constant 0 : index
      %c0_105 = arith.constant 0 : index
      %278 = vector.load %arg19[%c0_104, %c0_105] : memref<128x256xbf16, #tpu.memory_space<vmem>>, vector<128x256xbf16>
      tpu.vector_store %arg19[%c0_104, %c0_105], %277 {strides = array<i32>} : memref<128x256xbf16, #tpu.memory_space<vmem>>, vector<128x256xbf16>,
    } else {
    }
    %c0 = arith.constant 0 : index
    %c0_1 = arith.constant 0 : index
    %3 = vector.load %arg19[%c0, %c0_1] : memref<128x256xbf16, #tpu.memory_space<vmem>>, vector<128x256xbf16>
    %c0_2 = arith.constant 0 : index
    %c0_3 = arith.constant 0 : index
    %4 = vector.load %arg14[%c0_2, %c0_3] : memref<256x128xbf16, #tpu.memory_space<vmem>>, vector<256x128xbf16>
    %cst = arith.constant dense<0.000000e+00> : vector<128x128xf32>
    %5 = tpu.matmul %3, %4, %cst {dimension_numbers = #tpu.dot_dimension_numbers<[1], [0], [0], [1], [0, 0, 1, 1], [], []>} : vector<128x256xbf16>, vector<256x128xbf16>, vector<128x128xf32> -> vector<128x128xf32>
    %c0_4 = arith.constant 0 : index
    %c0_5 = arith.constant 0 : index
    %6 = vector.load %arg15[%c0_4, %c0_5] : memref<1x128xf32, #tpu.memory_space<vmem>>, vector<1x128xf32>
    %7 = vector.broadcast %6 : vector<1x128xf32> to vector<128x128xf32>
    %8 = arith.addf %5, %7 : vector<128x128xf32>
    %9 = vector.shape_cast %8 : vector<128x128xf32> to vector<8x16x128xf32>
    %c0_6 = arith.constant 0 : index
    %c0_7 = arith.constant 0 : index
    %c0_8 = arith.constant 0 : index
    %10 = vector.load %arg16[%c0_6, %c0_7, %c0_8] : memref<8x16x128xf32, #tpu.memory_space<vmem>>, vector<8x16x128xf32>
    tpu.vector_store %arg16[%c0_6, %c0_7, %c0_8], %9 {strides = array<i32>} : memref<8x16x128xf32, #tpu.memory_space<vmem>>, vector<8x16x128xf32>,
    return
  }
  func.func @transform_0(%arg0: i32, %arg1: i32) -> (i32, i32) {
    %c0_i32 = arith.constant 0 : i32
    %c0_i32_0 = arith.constant 0 : i32
    return %arg0, %c0_i32 : i32, i32
  }
  func.func @transform_1(%arg0: i32, %arg1: i32) -> (i32, i32, i32) {
    %c0_i32 = arith.constant 0 : i32
    %c0_i32_0 = arith.constant 0 : i32
    %c0_i32_1 = arith.constant 0 : i32
    return %c0_i32, %arg0, %c0_i32_0 : i32, i32, i32
  }
  func.func @transform_2(%arg0: i32, %arg1: i32) -> (i32, i32) {
    %c0_i32 = arith.constant 0 : i32
    %c0_i32_0 = arith.constant 0 : i32
    %c0_i32_1 = arith.constant 0 : i32
    return %c0_i32, %c0_i32_0 : i32, i32
  }
  func.func @transform_3(%arg0: i32, %arg1: i32) -> (i32, i32) {
    %c0_i32 = arith.constant 0 : i32
    %c0_i32_0 = arith.constant 0 : i32
    %c0_i32_1 = arith.constant 0 : i32
    return %c0_i32, %c0_i32_0 : i32, i32
  }
  func.func @transform_4(%arg0: i32, %arg1: i32) -> (i32, i32) {
    %c0_i32 = arith.constant 0 : i32
    %c0_i32_0 = arith.constant 0 : i32
    %c0_i32_1 = arith.constant 0 : i32
    return %c0_i32, %c0_i32_0 : i32, i32
  }
  func.func @transform_5(%arg0: i32, %arg1: i32) -> (i32, i32) {
    %c0_i32 = arith.constant 0 : i32
    %c0_i32_0 = arith.constant 0 : i32
    %c0_i32_1 = arith.constant 0 : i32
    return %c0_i32, %c0_i32_0 : i32, i32
  }
  func.func @transform_6(%arg0: i32, %arg1: i32) -> (i32, i32) {
    %c0_i32 = arith.constant 0 : i32
    %c0_i32_0 = arith.constant 0 : i32
    %c0_i32_1 = arith.constant 0 : i32
    return %c0_i32, %c0_i32_0 : i32, i32
  }
  func.func @transform_7(%arg0: i32, %arg1: i32) -> (i32, i32) {
    %c0_i32 = arith.constant 0 : i32
    %c0_i32_0 = arith.constant 0 : i32
    %c0_i32_1 = arith.constant 0 : i32
    return %c0_i32, %c0_i32_0 : i32, i32
  }
  func.func @transform_8(%arg0: i32, %arg1: i32) -> (i32, i32) {
    %c0_i32 = arith.constant 0 : i32
    %c0_i32_0 = arith.constant 0 : i32
    %c0_i32_1 = arith.constant 0 : i32
    return %c0_i32, %c0_i32_0 : i32, i32
  }
  func.func @transform_9(%arg0: i32, %arg1: i32) -> (i32, i32) {
    %c0_i32 = arith.constant 0 : i32
    %c0_i32_0 = arith.constant 0 : i32
    %c0_i32_1 = arith.constant 0 : i32
    return %c0_i32, %c0_i32_0 : i32, i32
  }
  func.func @transform_10(%arg0: i32, %arg1: i32) -> (i32, i32) {
    %c0_i32 = arith.constant 0 : i32
    %c0_i32_0 = arith.constant 0 : i32
    %c0_i32_1 = arith.constant 0 : i32
    return %c0_i32, %c0_i32_0 : i32, i32
  }
  func.func @transform_11(%arg0: i32, %arg1: i32) -> (i32, i32) {
    %c0_i32 = arith.constant 0 : i32
    %c0_i32_0 = arith.constant 0 : i32
    %c0_i32_1 = arith.constant 0 : i32
    return %c0_i32, %c0_i32_0 : i32, i32
  }
  func.func @transform_12(%arg0: i32, %arg1: i32) -> (i32, i32) {
    %c0_i32 = arith.constant 0 : i32
    %c0_i32_0 = arith.constant 0 : i32
    return %c0_i32, %arg1 : i32, i32
  }
  func.func @transform_13(%arg0: i32, %arg1: i32) -> (i32, i32) {
    %c0_i32 = arith.constant 0 : i32
    %c0_i32_0 = arith.constant 0 : i32
    return %c0_i32, %arg1 : i32, i32
  }
  func.func @transform_14(%arg0: i32, %arg1: i32) -> (i32, i32, i32) {
    %c0_i32 = arith.constant 0 : i32
    %c0_i32_0 = arith.constant 0 : i32
    return %c0_i32, %arg0, %arg1 : i32, i32, i32
  }
}

</mosaic_0001>

<llo_original>
// kernel: boke_forward.1
$region0: #{boke_forward.1}
  #allocation0 [shape = 'u32[]', space=smem, size = 0x4, offset = 0x4, fixed_abs, tag = 'smem constant byte address 0x4 - core index']
  #allocation1 [shape = 'u32[72,128]{1,0:T(1,128)}', space=vmem, size = 0x9000, scoped, tag = 'internal scratch']
  #allocation2 [shape = 'f32[128,512]{1,0:T(8,128)}', space=vmem, size = 0x40000, scoped, tag = 'scratch operand']
  #allocation3 [shape = 'bf16[128,128]{1,0:T(8,128)(2,1)}', space=vmem, size = 0x8000, scoped, tag = 'scratch operand']
  #allocation4 [shape = 'bf16[128,256]{1,0:T(8,128)(2,1)}', space=vmem, size = 0x10000, scoped, tag = 'scratch operand']
  %s0 = inlined_call_operand.vmem [shape: bf16[16,128], index: 0, kind: input, shape index: {}]
  %s1 = inlined_call_operand.vmem [shape: bf16[8,16,128], index: 1, kind: input, shape index: {}]
  %s2 = inlined_call_operand.vmem [shape: bf16[128,128], index: 2, kind: input, shape index: {}]
  %s3 = inlined_call_operand.vmem [shape: f32[1,128], index: 3, kind: input, shape index: {}]
  %s4 = inlined_call_operand.vmem [shape: bf16[128,512], index: 4, kind: input, shape index: {}]
  %s5 = inlined_call_operand.vmem [shape: bf16[128,512], index: 5, kind: input, shape index: {}]
  %s6 = inlined_call_operand.vmem [shape: f32[1,512], index: 6, kind: input, shape index: {}]
  %s7 = inlined_call_operand.vmem [shape: bf16[128,256], index: 7, kind: input, shape index: {}]
  %s8 = inlined_call_operand.vmem [shape: bf16[128,256], index: 8, kind: input, shape index: {}]
  %s9 = inlined_call_operand.vmem [shape: f32[1,256], index: 9, kind: input, shape index: {}]
  %s10 = inlined_call_operand.vmem [shape: bf16[256,256], index: 10, kind: input, shape index: {}]
  %s11 = inlined_call_operand.vmem [shape: f32[1,256], index: 11, kind: input, shape index: {}]
  %s12 = inlined_call_operand.vmem [shape: bf16[256,128], index: 12, kind: input, shape index: {}]
  %s13 = inlined_call_operand.vmem [shape: f32[1,128], index: 13, kind: input, shape index: {}]
  %s14 = inlined_call_operand.vmem [shape: f32[8,16,128], index: 14, kind: output, shape index: {}]
  %s15 = sld [smem:[#allocation0]]
  $region70: #{boke_forward.1} parent=0
    _
  %s17 = ssub.s32 1, %s15
  %s18 = scalar_select 0, %s17, %s15
  // Predicated region
  $region2: #{boke_forward.1} parent=0 // pred_check
    _
  $region3: #{boke_forward.1} parent=0 // pred_check_branch
    %20 = sbr.rel (0) target = $region5
  $region4: #{boke_forward.1} parent=0 // pred_region
    _
  $region5: #{boke_forward.1} parent=0 // pred_fallthru
    _
  // Predicated region
  $region6: #{boke_forward.1} parent=0 // pred_check
    _
  $region7: #{boke_forward.1} parent=0 // pred_check_branch
    %22 = sbr.rel (0) target = $region9
  $region8: #{boke_forward.1} parent=0 // pred_region
    _
  $region9: #{boke_forward.1} parent=0 // pred_fallthru
    _
  // Predicated region
  $region10: #{boke_forward.1} parent=0 // pred_check
    _
  $region11: #{boke_forward.1} parent=0 // pred_check_branch
    %24 = sbr.rel (0) target = $region13
  $region12: #{boke_forward.1} parent=0 // pred_region
    _
  $region13: #{boke_forward.1} parent=0 // pred_fallthru
    _
  // Predicated region
  $region14: #{boke_forward.1} parent=0 // pred_check
    _
  $region15: #{boke_forward.1} parent=0 // pred_check_branch
    %26 = sbr.rel (0) target = $region17
  $region16: #{boke_forward.1} parent=0 // pred_region
    _
  $region17: #{boke_forward.1} parent=0 // pred_fallthru
    _
  // Predicated region
  $region18: #{boke_forward.1} parent=0 // pred_check
    _
  $region19: #{boke_forward.1} parent=0 // pred_check_branch
    %28 = sbr.rel (0) target = $region21
  $region20: #{boke_forward.1} parent=0 // pred_region
    _
  $region21: #{boke_forward.1} parent=0 // pred_fallthru
    _
  // Predicated region
  $region22: #{boke_forward.1} parent=0 // pred_check
    _
  $region23: #{boke_forward.1} parent=0 // pred_check_branch
    %30 = sbr.rel (0) target = $region25
  $region24: #{boke_forward.1} parent=0 // pred_region
    _
  $region25: #{boke_forward.1} parent=0 // pred_fallthru
    _
  // Predicated region
  $region26: #{boke_forward.1} parent=0 // pred_check
    _
  $region27: #{boke_forward.1} parent=0 // pred_check_branch
    %32 = sbr.rel (0) target = $region29
  $region28: #{boke_forward.1} parent=0 // pred_region
    _
  $region29: #{boke_forward.1} parent=0 // pred_fallthru
    _
  // Predicated region
  $region30: #{boke_forward.1} parent=0 // pred_check
    _
  $region31: #{boke_forward.1} parent=0 // pred_check_branch
    %34 = sbr.rel (0) target = $region33
  $region32: #{boke_forward.1} parent=0 // pred_region
    _
  $region33: #{boke_forward.1} parent=0 // pred_fallthru
    _
  // Predicated region
  $region34: #{boke_forward.1} parent=0 // pred_check
    _
  $region35: #{boke_forward.1} parent=0 // pred_check_branch
    %36 = sbr.rel (0) target = $region37
  $region36: #{boke_forward.1} parent=0 // pred_region
    _
  $region37: #{boke_forward.1} parent=0 // pred_fallthru
    _
  // Predicated region
  $region38: #{boke_forward.1} parent=0 // pred_check
    _
  $region39: #{boke_forward.1} parent=0 // pred_check_branch
    %38 = sbr.rel (0) target = $region41
  $region40: #{boke_forward.1} parent=0 // pred_region
    _
  $region41: #{boke_forward.1} parent=0 // pred_fallthru
    _
  // Predicated region
  $region42: #{boke_forward.1} parent=0 // pred_check
    _
  $region43: #{boke_forward.1} parent=0 // pred_check_branch
    %40 = sbr.rel (0) target = $region45
  $region44: #{boke_forward.1} parent=0 // pred_region
    _
  $region45: #{boke_forward.1} parent=0 // pred_fallthru
    _
  // Predicated region
  $region46: #{boke_forward.1} parent=0 // pred_check
    _
  $region47: #{boke_forward.1} parent=0 // pred_check_branch
    %42 = sbr.rel (0) target = $region49
  $region48: #{boke_forward.1} parent=0 // pred_region
    _
  $region49: #{boke_forward.1} parent=0 // pred_fallthru
    _
  // Predicated region
  $region50: #{boke_forward.1} parent=0 // pred_check
    _
  $region51: #{boke_forward.1} parent=0 // pred_check_branch
    %44 = sbr.rel (0) target = $region53
  $region52: #{boke_forward.1} parent=0 // pred_region
    _
  $region53: #{boke_forward.1} parent=0 // pred_fallthru
    _
  // Predicated region
  $region54: #{boke_forward.1} parent=0 // pred_check
    _
  $region55: #{boke_forward.1} parent=0 // pred_check_branch
    %46 = sbr.rel (0) target = $region57
  $region56: #{boke_forward.1} parent=0 // pred_region
    _
  $region57: #{boke_forward.1} parent=0 // pred_fallthru
    _
  %p48 = scmp.eq.s32.totalorder 0, 0
  // Predicated region
  $region58: #{boke_forward.1} parent=0 // pred_check
    %p49 = pneg %p48
  $region59: #{boke_forward.1} parent=0 // pred_check_branch
    %51 = sbr.rel (%p49) target = $region61
  $region60: #{boke_forward.1} parent=0 // pred_region
    %v52 = vld [vmem:[%s0] sm:$0xf]
    %v53 = vld [vmem:[%s0 + $0x4] sm:$0xf]
    %v54 = vld [vmem:[%s2] sm:$0xf]
    %v55 = vld [vmem:[%s2 + $0x4] sm:$0xf]
    %v56 = vld [vmem:[%s2 + $0x8] sm:$0xf]
    %v57 = vld [vmem:[%s2 + $0xc] sm:$0xf]
    %v58 = vld [vmem:[%s2 + $0x10] sm:$0xf]
    %v59 = vld [vmem:[%s2 + $0x14] sm:$0xf]
    %v60 = vld [vmem:[%s2 + $0x18] sm:$0xf]
    %v61 = vld [vmem:[%s2 + $0x1c] sm:$0xf]
    %v62 = vld [vmem:[%s2 + $0x20] sm:$0xf]
    %v63 = vld [vmem:[%s2 + $0x24] sm:$0xf]
    %v64 = vld [vmem:[%s2 + $0x28] sm:$0xf]
    %v65 = vld [vmem:[%s2 + $0x2c] sm:$0xf]
    %v66 = vld [vmem:[%s2 + $0x30] sm:$0xf]
    %v67 = vld [vmem:[%s2 + $0x34] sm:$0xf]
    %v68 = vld [vmem:[%s2 + $0x38] sm:$0xf]
    %v69 = vld [vmem:[%s2 + $0x3c] sm:$0xf]
    %v70 = vld [vmem:[%s3] sm:$0x1]
    %v72 = vperm.slane %v70, 0
    %v76 = vunpack.c.l.b16 %v52
    %v77 = vunpack.c.l.b16 %v53
    %v78 = vpack.c.b16 %v77, %v76
    %v96 = vunpack.c.l.b16 %v54
    %v97 = vunpack.c.l.b16 %v55
    %v98 = vunpack.c.l.b16 %v56
    %v99 = vunpack.c.l.b16 %v57
    %v100 = vunpack.c.l.b16 %v58
    %v101 = vunpack.c.l.b16 %v59
    %v102 = vunpack.c.l.b16 %v60
    %v103 = vunpack.c.l.b16 %v61
    %v104 = vunpack.c.l.b16 %v62
    %v105 = vunpack.c.l.b16 %v63
    %v106 = vunpack.c.l.b16 %v64
    %v107 = vunpack.c.l.b16 %v65
    %v108 = vunpack.c.l.b16 %v66
    %v109 = vunpack.c.l.b16 %v67
    %v110 = vunpack.c.l.b16 %v68
    %v111 = vunpack.c.l.b16 %v69
    %v112 = vpack.c.b16 %v97, %v96
    %v113 = vpack.c.b16 %v99, %v98
    %v114 = vpack.c.b16 %v101, %v100
    %v115 = vpack.c.b16 %v103, %v102
    %v116 = vpack.c.b16 %v105, %v104
    %v117 = vpack.c.b16 %v107, %v106
    %v118 = vpack.c.b16 %v109, %v108
    %v119 = vpack.c.b16 %v111, %v110
    %128 = vmatpush.bf16.msra.mxu0 %v119
    %129 = vmatpush.bf16.msra.mxu0 %v118
    %130 = vmatpush.bf16.msra.mxu0 %v117
    %131 = vmatpush.bf16.msra.mxu0 %v116
    %132 = vmatpush.bf16.msra.mxu0 %v115
    %133 = vmatpush.bf16.msra.mxu0 %v114
    %134 = vmatpush.bf16.msra.mxu0 %v113
    %135 = vmatpush.bf16.msra.mxu0 %v112
    %136 = vmatmul.bf16.gmra.mxu0 %v78
    %v137 = vpop.f32.mrf.mxu0
    %v138 = vadd.f32 %v72, %v137
    %v139 = vpop.f32.mrf.mxu0
    %v140 = vadd.f32 %v72, %v139
    %141 = vdwg.mxu0
    %vm142 = vcmp.gt.f32.partialorder %v138, 0.0
    %vm143 = vcmp.gt.f32.partialorder %v140, 0.0
    %v144 = vmul.f32 %v138, 0.01
    %v145 = vmul.f32 %v140, 0.01
    %v146 = vsel %vm142, %v138, %v144
    %v147 = vsel %vm143, %v140, %v145
    %v148 = vpack.c.bf16 %v147, %v146
    %v149 = vld [vmem:[%s7] sm:$0xff]
    %v150 = vld [vmem:[%s7 + $0x8] sm:$0xff]
    %v151 = vld [vmem:[%s7 + $0x10] sm:$0xff]
    %v152 = vld [vmem:[%s7 + $0x18] sm:$0xff]
    %v153 = vld [vmem:[%s7 + $0x20] sm:$0xff]
    %v154 = vld [vmem:[%s7 + $0x28] sm:$0xff]
    %v155 = vld [vmem:[%s7 + $0x30] sm:$0xff]
    %v156 = vld [vmem:[%s7 + $0x38] sm:$0xff]
    %v157 = vld [vmem:[%s7 + $0x40] sm:$0xff]
    %v158 = vld [vmem:[%s7 + $0x48] sm:$0xff]
    %v159 = vld [vmem:[%s7 + $0x50] sm:$0xff]
    %v160 = vld [vmem:[%s7 + $0x58] sm:$0xff]
    %v161 = vld [vmem:[%s7 + $0x60] sm:$0xff]
    %v162 = vld [vmem:[%s7 + $0x68] sm:$0xff]
    %v163 = vld [vmem:[%s7 + $0x70] sm:$0xff]
    %v164 = vld [vmem:[%s7 + $0x78] sm:$0xff]
    %v165 = vld [vmem:[%s9] sm:$0x3]
    %v167 = vperm.slane %v165, 0
    %v168 = vperm.slane %v165, 1
    %v187 = vunpack.c.l.b16 %v149
    %v188 = vunpack.c.h.b16 %v149
    %v189 = vunpack.c.l.b16 %v150
    %v190 = vunpack.c.h.b16 %v150
    %v191 = vunpack.c.l.b16 %v151
    %v192 = vunpack.c.h.b16 %v151
    %v193 = vunpack.c.l.b16 %v152
    %v194 = vunpack.c.h.b16 %v152
    %v195 = vunpack.c.l.b16 %v153
    %v196 = vunpack.c.h.b16 %v153
    %v197 = vunpack.c.l.b16 %v154
    %v198 = vunpack.c.h.b16 %v154
    %v199 = vunpack.c.l.b16 %v155
    %v200 = vunpack.c.h.b16 %v155
    %v201 = vunpack.c.l.b16 %v156
    %v202 = vunpack.c.h.b16 %v156
    %v203 = vunpack.c.l.b16 %v157
    %v204 = vunpack.c.h.b16 %v157
    %v205 = vunpack.c.l.b16 %v158
    %v206 = vunpack.c.h.b16 %v158
    %v207 = vunpack.c.l.b16 %v159
    %v208 = vunpack.c.h.b16 %v159
    %v209 = vunpack.c.l.b16 %v160
    %v210 = vunpack.c.h.b16 %v160
    %v211 = vunpack.c.l.b16 %v161
    %v212 = vunpack.c.h.b16 %v161
    %v213 = vunpack.c.l.b16 %v162
    %v214 = vunpack.c.h.b16 %v162
    %v215 = vunpack.c.l.b16 %v163
    %v216 = vunpack.c.h.b16 %v163
    %v217 = vunpack.c.l.b16 %v164
    %v218 = vunpack.c.h.b16 %v164
    %v219 = vpack.c.b16 %v189, %v187
    %v220 = vpack.c.b16 %v190, %v188
    %v221 = vpack.c.b16 %v193, %v191
    %v222 = vpack.c.b16 %v194, %v192
    %v223 = vpack.c.b16 %v197, %v195
    %v224 = vpack.c.b16 %v198, %v196
    %v225 = vpack.c.b16 %v201, %v199
    %v226 = vpack.c.b16 %v202, %v200
    %v227 = vpack.c.b16 %v205, %v203
    %v228 = vpack.c.b16 %v206, %v204
    %v229 = vpack.c.b16 %v209, %v207
    %v230 = vpack.c.b16 %v210, %v208
    %v231 = vpack.c.b16 %v213, %v211
    %v232 = vpack.c.b16 %v214, %v212
    %v233 = vpack.c.b16 %v217, %v215
    %v234 = vpack.c.b16 %v218, %v216
    %251 = vmatpush.bf16.msra.mxu0 %v233
    %252 = vmatpush.bf16.msra.mxu0 %v231
    %253 = vmatpush.bf16.msra.mxu0 %v229
    %254 = vmatpush.bf16.msra.mxu0 %v227
    %255 = vmatpush.bf16.msra.mxu0 %v225
    %256 = vmatpush.bf16.msra.mxu0 %v223
    %257 = vmatpush.bf16.msra.mxu0 %v221
    %258 = vmatpush.bf16.msra.mxu0 %v219
    %259 = vmatmul.bf16.gmra.mxu0 %v148
    %v260 = vpop.f32.mrf.mxu0
    %v261 = vadd.f32 %v167, %v260
    %v262 = vpop.f32.mrf.mxu0
    %v263 = vadd.f32 %v167, %v262
    %264 = vdwg.mxu0
    %265 = vmatpush.bf16.msra.mxu0 %v234
    %266 = vmatpush.bf16.msra.mxu0 %v232
    %267 = vmatpush.bf16.msra.mxu0 %v230
    %268 = vmatpush.bf16.msra.mxu0 %v228
    %269 = vmatpush.bf16.msra.mxu0 %v226
    %270 = vmatpush.bf16.msra.mxu0 %v224
    %271 = vmatpush.bf16.msra.mxu0 %v222
    %272 = vmatpush.bf16.msra.mxu0 %v220
    %273 = vmatmul.bf16.gmra.mxu0 %v148
    %v274 = vpop.f32.mrf.mxu0
    %v275 = vadd.f32 %v168, %v274
    %v276 = vpop.f32.mrf.mxu0
    %v277 = vadd.f32 %v168, %v276
    %278 = vdwg.mxu0
    %v279 = vld [vmem:[%s1] sm:$0xf]
    %v280 = vld [vmem:[%s1 + $0x4] sm:$0xf]
    %v281 = vld [vmem:[%s1 + $0x8] sm:$0xf]
    %v282 = vld [vmem:[%s1 + $0xc] sm:$0xf]
    %v283 = vld [vmem:[%s1 + $0x10] sm:$0xf]
    %v284 = vld [vmem:[%s1 + $0x14] sm:$0xf]
    %v285 = vld [vmem:[%s1 + $0x18] sm:$0xf]
    %v286 = vld [vmem:[%s1 + $0x1c] sm:$0xf]
    %v287 = vld [vmem:[%s1 + $0x20] sm:$0xf]
    %v288 = vld [vmem:[%s1 + $0x24] sm:$0xf]
    %v289 = vld [vmem:[%s1 + $0x28] sm:$0xf]
    %v290 = vld [vmem:[%s1 + $0x2c] sm:$0xf]
    %v291 = vld [vmem:[%s1 + $0x30] sm:$0xf]
    %v292 = vld [vmem:[%s1 + $0x34] sm:$0xf]
    %v293 = vld [vmem:[%s1 + $0x38] sm:$0xf]
    %v294 = vld [vmem:[%s1 + $0x3c] sm:$0xf]
    %v295 = vld [vmem:[%s4] sm:$0xff]
    %v296 = vld [vmem:[%s4 + $0x8] sm:$0xff]
    %v297 = vld [vmem:[%s4 + $0x10] sm:$0xff]
    %v298 = vld [vmem:[%s4 + $0x18] sm:$0xff]
    %v299 = vld [vmem:[%s4 + $0x20] sm:$0xff]
    %v300 = vld [vmem:[%s4 + $0x28] sm:$0xff]
    %v301 = vld [vmem:[%s4 + $0x30] sm:$0xff]
    %v302 = vld [vmem:[%s4 + $0x38] sm:$0xff]
    %v303 = vld [vmem:[%s4 + $0x40] sm:$0xff]
    %v304 = vld [vmem:[%s4 + $0x48] sm:$0xff]
    %v305 = vld [vmem:[%s4 + $0x50] sm:$0xff]
    %v306 = vld [vmem:[%s4 + $0x58] sm:$0xff]
    %v307 = vld [vmem:[%s4 + $0x60] sm:$0xff]
    %v308 = vld [vmem:[%s4 + $0x68] sm:$0xff]
    %v309 = vld [vmem:[%s4 + $0x70] sm:$0xff]
    %v310 = vld [vmem:[%s4 + $0x78] sm:$0xff]
    %v311 = vld [vmem:[%s4 + $0x80] sm:$0xff]
    %v312 = vld [vmem:[%s4 + $0x88] sm:$0xff]
    %v313 = vld [vmem:[%s4 + $0x90] sm:$0xff]
    %v314 = vld [vmem:[%s4 + $0x98] sm:$0xff]
    %v315 = vld [vmem:[%s4 + $0xa0] sm:$0xff]
    %v316 = vld [vmem:[%s4 + $0xa8] sm:$0xff]
    %v317 = vld [vmem:[%s4 + $0xb0] sm:$0xff]
    %v318 = vld [vmem:[%s4 + $0xb8] sm:$0xff]
    %v319 = vld [vmem:[%s4 + $0xc0] sm:$0xff]
    %v320 = vld [vmem:[%s4 + $0xc8] sm:$0xff]
    %v321 = vld [vmem:[%s4 + $0xd0] sm:$0xff]
    %v322 = vld [vmem:[%s4 + $0xd8] sm:$0xff]
    %v323 = vld [vmem:[%s4 + $0xe0] sm:$0xff]
    %v324 = vld [vmem:[%s4 + $0xe8] sm:$0xff]
    %v325 = vld [vmem:[%s4 + $0xf0] sm:$0xff]
    %v326 = vld [vmem:[%s4 + $0xf8] sm:$0xff]
    %v327 = vld [vmem:[%s6] sm:$0xf]
    %v329 = vperm.slane %v327, 0
    %v330 = vperm.slane %v327, 1
    %v331 = vperm.slane %v327, 2
    %v332 = vperm.slane %v327, 3
    %v353 = vunpack.c.l.b16 %v279
    %v354 = vunpack.c.l.b16 %v280
    %v355 = vunpack.c.l.b16 %v281
    %v356 = vunpack.c.l.b16 %v282
    %v357 = vunpack.c.l.b16 %v283
    %v358 = vunpack.c.l.b16 %v284
    %v359 = vunpack.c.l.b16 %v285
    %v360 = vunpack.c.l.b16 %v286
    %v361 = vunpack.c.l.b16 %v287
    %v362 = vunpack.c.l.b16 %v288
    %v363 = vunpack.c.l.b16 %v289
    %v364 = vunpack.c.l.b16 %v290
    %v365 = vunpack.c.l.b16 %v291
    %v366 = vunpack.c.l.b16 %v292
    %v367 = vunpack.c.l.b16 %v293
    %v368 = vunpack.c.l.b16 %v294
    %v369 = vpack.c.b16 %v354, %v353
    %v370 = vpack.c.b16 %v356, %v355
    %v371 = vpack.c.b16 %v358, %v357
    %v372 = vpack.c.b16 %v360, %v359
    %v373 = vpack.c.b16 %v362, %v361
    %v374 = vpack.c.b16 %v364, %v363
    %v375 = vpack.c.b16 %v366, %v365
    %v376 = vpack.c.b16 %v368, %v367
    %v417 = vunpack.c.l.b16 %v295
    %v418 = vunpack.c.h.b16 %v295
    %v419 = vunpack.c.l.b16 %v296
    %v420 = vunpack.c.h.b16 %v296
    %v421 = vunpack.c.l.b16 %v297
    %v422 = vunpack.c.h.b16 %v297
    %v423 = vunpack.c.l.b16 %v298
    %v424 = vunpack.c.h.b16 %v298
    %v425 = vunpack.c.l.b16 %v299
    %v426 = vunpack.c.h.b16 %v299
    %v427 = vunpack.c.l.b16 %v300
    %v428 = vunpack.c.h.b16 %v300
    %v429 = vunpack.c.l.b16 %v301
    %v430 = vunpack.c.h.b16 %v301
    %v431 = vunpack.c.l.b16 %v302
    %v432 = vunpack.c.h.b16 %v302
    %v433 = vunpack.c.l.b16 %v303
    %v434 = vunpack.c.h.b16 %v303
    %v435 = vunpack.c.l.b16 %v304
    %v436 = vunpack.c.h.b16 %v304
    %v437 = vunpack.c.l.b16 %v305
    %v438 = vunpack.c.h.b16 %v305
    %v439 = vunpack.c.l.b16 %v306
    %v440 = vunpack.c.h.b16 %v306
    %v441 = vunpack.c.l.b16 %v307
    %v442 = vunpack.c.h.b16 %v307
    %v443 = vunpack.c.l.b16 %v308
    %v444 = vunpack.c.h.b16 %v308
    %v445 = vunpack.c.l.b16 %v309
    %v446 = vunpack.c.h.b16 %v309
    %v447 = vunpack.c.l.b16 %v310
    %v448 = vunpack.c.h.b16 %v310
    %v449 = vunpack.c.l.b16 %v311
    %v450 = vunpack.c.h.b16 %v311
    %v451 = vunpack.c.l.b16 %v312
    %v452 = vunpack.c.h.b16 %v312
    %v453 = vunpack.c.l.b16 %v313
    %v454 = vunpack.c.h.b16 %v313
    %v455 = vunpack.c.l.b16 %v314
    %v456 = vunpack.c.h.b16 %v314
    %v457 = vunpack.c.l.b16 %v315
    %v458 = vunpack.c.h.b16 %v315
    %v459 = vunpack.c.l.b16 %v316
    %v460 = vunpack.c.h.b16 %v316
    %v461 = vunpack.c.l.b16 %v317
    %v462 = vunpack.c.h.b16 %v317
    %v463 = vunpack.c.l.b16 %v318
    %v464 = vunpack.c.h.b16 %v318
    %v465 = vunpack.c.l.b16 %v319
    %v466 = vunpack.c.h.b16 %v319
    %v467 = vunpack.c.l.b16 %v320
    %v468 = vunpack.c.h.b16 %v320
    %v469 = vunpack.c.l.b16 %v321
    %v470 = vunpack.c.h.b16 %v321
    %v471 = vunpack.c.l.b16 %v322
    %v472 = vunpack.c.h.b16 %v322
    %v473 = vunpack.c.l.b16 %v323
    %v474 = vunpack.c.h.b16 %v323
    %v475 = vunpack.c.l.b16 %v324
    %v476 = vunpack.c.h.b16 %v324
    %v477 = vunpack.c.l.b16 %v325
    %v478 = vunpack.c.h.b16 %v325
    %v479 = vunpack.c.l.b16 %v326
    %v480 = vunpack.c.h.b16 %v326
    %v481 = vpack.c.b16 %v421, %v417
    %v482 = vpack.c.b16 %v422, %v418
    %v483 = vpack.c.b16 %v423, %v419
    %v484 = vpack.c.b16 %v424, %v420
    %v485 = vpack.c.b16 %v429, %v425
    %v486 = vpack.c.b16 %v430, %v426
    %v487 = vpack.c.b16 %v431, %v427
    %v488 = vpack.c.b16 %v432, %v428
    %v489 = vpack.c.b16 %v437, %v433
    %v490 = vpack.c.b16 %v438, %v434
    %v491 = vpack.c.b16 %v439, %v435
    %v492 = vpack.c.b16 %v440, %v436
    %v493 = vpack.c.b16 %v445, %v441
    %v494 = vpack.c.b16 %v446, %v442
    %v495 = vpack.c.b16 %v447, %v443
    %v496 = vpack.c.b16 %v448, %v444
    %v497 = vpack.c.b16 %v453, %v449
    %v498 = vpack.c.b16 %v454, %v450
    %v499 = vpack.c.b16 %v455, %v451
    %v500 = vpack.c.b16 %v456, %v452
    %v501 = vpack.c.b16 %v461, %v457
    %v502 = vpack.c.b16 %v462, %v458
    %v503 = vpack.c.b16 %v463, %v459
    %v504 = vpack.c.b16 %v464, %v460
    %v505 = vpack.c.b16 %v469, %v465
    %v506 = vpack.c.b16 %v470, %v466
    %v507 = vpack.c.b16 %v471, %v467
    %v508 = vpack.c.b16 %v472, %v468
    %v509 = vpack.c.b16 %v477, %v473
    %v510 = vpack.c.b16 %v478, %v474
    %v511 = vpack.c.b16 %v479, %v475
    %v512 = vpack.c.b16 %v480, %v476
    %545 = vmatpush.bf16.msra.mxu0 %v509
    %546 = vmatpush.bf16.msra.mxu0 %v505
    %547 = vmatpush.bf16.msra.mxu0 %v501
    %548 = vmatpush.bf16.msra.mxu0 %v497
    %549 = vmatpush.bf16.msra.mxu0 %v493
    %550 = vmatpush.bf16.msra.mxu0 %v489
    %551 = vmatpush.bf16.msra.mxu0 %v485
    %552 = vmatpush.bf16.msra.mxu0 %v481
    %553 = vmatmul.bf16.gmra.mxu0 %v369
    %v554 = vpop.f32.mrf.mxu0
    %v555 = vadd.f32 %v329, %v554
    %v556 = vpop.f32.mrf.mxu0
    %v557 = vadd.f32 %v329, %v556
    %558 = vmatmul.bf16.gmra.mxu0 %v370
    %v559 = vpop.f32.mrf.mxu0
    %v560 = vadd.f32 %v329, %v559
    %v561 = vpop.f32.mrf.mxu0
    %v562 = vadd.f32 %v329, %v561
    %563 = vmatmul.bf16.gmra.mxu0 %v371
    %v564 = vpop.f32.mrf.mxu0
    %v565 = vadd.f32 %v329, %v564
    %v566 = vpop.f32.mrf.mxu0
    %v567 = vadd.f32 %v329, %v566
    %568 = vmatmul.bf16.gmra.mxu0 %v372
    %v569 = vpop.f32.mrf.mxu0
    %v570 = vadd.f32 %v329, %v569
    %v571 = vpop.f32.mrf.mxu0
    %v572 = vadd.f32 %v329, %v571
    %573 = vmatmul.bf16.gmra.mxu0 %v373
    %v574 = vpop.f32.mrf.mxu0
    %v575 = vadd.f32 %v329, %v574
    %v576 = vpop.f32.mrf.mxu0
    %v577 = vadd.f32 %v329, %v576
    %578 = vmatmul.bf16.gmra.mxu0 %v374
    %v579 = vpop.f32.mrf.mxu0
    %v580 = vadd.f32 %v329, %v579
    %v581 = vpop.f32.mrf.mxu0
    %v582 = vadd.f32 %v329, %v581
    %583 = vmatmul.bf16.gmra.mxu0 %v375
    %v584 = vpop.f32.mrf.mxu0
    %v585 = vadd.f32 %v329, %v584
    %v586 = vpop.f32.mrf.mxu0
    %v587 = vadd.f32 %v329, %v586
    %588 = vmatmul.bf16.gmra.mxu0 %v376
    %v589 = vpop.f32.mrf.mxu0
    %v590 = vadd.f32 %v329, %v589
    %v591 = vpop.f32.mrf.mxu0
    %v592 = vadd.f32 %v329, %v591
    %593 = vdwg.mxu0
    %594 = vmatpush.bf16.msra.mxu0 %v510
    %595 = vmatpush.bf16.msra.mxu0 %v506
    %596 = vmatpush.bf16.msra.mxu0 %v502
    %597 = vmatpush.bf16.msra.mxu0 %v498
    %598 = vmatpush.bf16.msra.mxu0 %v494
    %599 = vmatpush.bf16.msra.mxu0 %v490
    %600 = vmatpush.bf16.msra.mxu0 %v486
    %601 = vmatpush.bf16.msra.mxu0 %v482
    %602 = vmatmul.bf16.gmra.mxu0 %v369
    %v603 = vpop.f32.mrf.mxu0
    %v604 = vadd.f32 %v330, %v603
    %v605 = vpop.f32.mrf.mxu0
    %v606 = vadd.f32 %v330, %v605
    %607 = vmatmul.bf16.gmra.mxu0 %v370
    %v608 = vpop.f32.mrf.mxu0
    %v609 = vadd.f32 %v330, %v608
    %v610 = vpop.f32.mrf.mxu0
    %v611 = vadd.f32 %v330, %v610
    %612 = vmatmul.bf16.gmra.mxu0 %v371
    %v613 = vpop.f32.mrf.mxu0
    %v614 = vadd.f32 %v330, %v613
    %v615 = vpop.f32.mrf.mxu0
    %v616 = vadd.f32 %v330, %v615
    %617 = vmatmul.bf16.gmra.mxu0 %v372
    %v618 = vpop.f32.mrf.mxu0
    %v619 = vadd.f32 %v330, %v618
    %v620 = vpop.f32.mrf.mxu0
    %v621 = vadd.f32 %v330, %v620
    %622 = vmatmul.bf16.gmra.mxu0 %v373
    %v623 = vpop.f32.mrf.mxu0
    %v624 = vadd.f32 %v330, %v623
    %v625 = vpop.f32.mrf.mxu0
    %v626 = vadd.f32 %v330, %v625
    %627 = vmatmul.bf16.gmra.mxu0 %v374
    %v628 = vpop.f32.mrf.mxu0
    %v629 = vadd.f32 %v330, %v628
    %v630 = vpop.f32.mrf.mxu0
    %v631 = vadd.f32 %v330, %v630
    %632 = vmatmul.bf16.gmra.mxu0 %v375
    %v633 = vpop.f32.mrf.mxu0
    %v634 = vadd.f32 %v330, %v633
    %v635 = vpop.f32.mrf.mxu0
    %v636 = vadd.f32 %v330, %v635
    %637 = vmatmul.bf16.gmra.mxu0 %v376
    %v638 = vpop.f32.mrf.mxu0
    %v639 = vadd.f32 %v330, %v638
    %v640 = vpop.f32.mrf.mxu0
    %v641 = vadd.f32 %v330, %v640
    %642 = vdwg.mxu0
    %643 = vmatpush.bf16.msra.mxu0 %v511
    %644 = vmatpush.bf16.msra.mxu0 %v507
    %645 = vmatpush.bf16.msra.mxu0 %v503
    %646 = vmatpush.bf16.msra.mxu0 %v499
    %647 = vmatpush.bf16.msra.mxu0 %v495
    %648 = vmatpush.bf16.msra.mxu0 %v491
    %649 = vmatpush.bf16.msra.mxu0 %v487
    %650 = vmatpush.bf16.msra.mxu0 %v483
    %651 = vmatmul.bf16.gmra.mxu0 %v369
    %v652 = vpop.f32.mrf.mxu0
    %v653 = vadd.f32 %v331, %v652
    %v654 = vpop.f32.mrf.mxu0
    %v655 = vadd.f32 %v331, %v654
    %656 = vmatmul.bf16.gmra.mxu0 %v370
    %v657 = vpop.f32.mrf.mxu0
    %v658 = vadd.f32 %v331, %v657
    %v659 = vpop.f32.mrf.mxu0
    %v660 = vadd.f32 %v331, %v659
    %661 = vmatmul.bf16.gmra.mxu0 %v371
    %v662 = vpop.f32.mrf.mxu0
    %v663 = vadd.f32 %v331, %v662
    %v664 = vpop.f32.mrf.mxu0
    %v665 = vadd.f32 %v331, %v664
    %666 = vmatmul.bf16.gmra.mxu0 %v372
    %v667 = vpop.f32.mrf.mxu0
    %v668 = vadd.f32 %v331, %v667
    %v669 = vpop.f32.mrf.mxu0
    %v670 = vadd.f32 %v331, %v669
    %671 = vmatmul.bf16.gmra.mxu0 %v373
    %v672 = vpop.f32.mrf.mxu0
    %v673 = vadd.f32 %v331, %v672
    %v674 = vpop.f32.mrf.mxu0
    %v675 = vadd.f32 %v331, %v674
    %676 = vmatmul.bf16.gmra.mxu0 %v374
    %v677 = vpop.f32.mrf.mxu0
    %v678 = vadd.f32 %v331, %v677
    %v679 = vpop.f32.mrf.mxu0
    %v680 = vadd.f32 %v331, %v679
    %681 = vmatmul.bf16.gmra.mxu0 %v375
    %v682 = vpop.f32.mrf.mxu0
    %v683 = vadd.f32 %v331, %v682
    %v684 = vpop.f32.mrf.mxu0
    %v685 = vadd.f32 %v331, %v684
    %686 = vmatmul.bf16.gmra.mxu0 %v376
    %v687 = vpop.f32.mrf.mxu0
    %v688 = vadd.f32 %v331, %v687
    %v689 = vpop.f32.mrf.mxu0
    %v690 = vadd.f32 %v331, %v689
    %691 = vdwg.mxu0
    %692 = vmatpush.bf16.msra.mxu0 %v512
    %693 = vmatpush.bf16.msra.mxu0 %v508
    %694 = vmatpush.bf16.msra.mxu0 %v504
    %695 = vmatpush.bf16.msra.mxu0 %v500
    %696 = vmatpush.bf16.msra.mxu0 %v496
    %697 = vmatpush.bf16.msra.mxu0 %v492
    %698 = vmatpush.bf16.msra.mxu0 %v488
    %699 = vmatpush.bf16.msra.mxu0 %v484
    %700 = vmatmul.bf16.gmra.mxu0 %v369
    %v701 = vpop.f32.mrf.mxu0
    %v702 = vadd.f32 %v332, %v701
    %v703 = vpop.f32.mrf.mxu0
    %v704 = vadd.f32 %v332, %v703
    %705 = vmatmul.bf16.gmra.mxu0 %v370
    %v706 = vpop.f32.mrf.mxu0
    %v707 = vadd.f32 %v332, %v706
    %v708 = vpop.f32.mrf.mxu0
    %v709 = vadd.f32 %v332, %v708
    %710 = vmatmul.bf16.gmra.mxu0 %v371
    %v711 = vpop.f32.mrf.mxu0
    %v712 = vadd.f32 %v332, %v711
    %v713 = vpop.f32.mrf.mxu0
    %v714 = vadd.f32 %v332, %v713
    %715 = vmatmul.bf16.gmra.mxu0 %v372
    %v716 = vpop.f32.mrf.mxu0
    %v717 = vadd.f32 %v332, %v716
    %v718 = vpop.f32.mrf.mxu0
    %v719 = vadd.f32 %v332, %v718
    %720 = vmatmul.bf16.gmra.mxu0 %v373
    %v721 = vpop.f32.mrf.mxu0
    %v722 = vadd.f32 %v332, %v721
    %v723 = vpop.f32.mrf.mxu0
    %v724 = vadd.f32 %v332, %v723
    %725 = vmatmul.bf16.gmra.mxu0 %v374
    %v726 = vpop.f32.mrf.mxu0
    %v727 = vadd.f32 %v332, %v726
    %v728 = vpop.f32.mrf.mxu0
    %v729 = vadd.f32 %v332, %v728
    %730 = vmatmul.bf16.gmra.mxu0 %v375
    %v731 = vpop.f32.mrf.mxu0
    %v732 = vadd.f32 %v332, %v731
    %v733 = vpop.f32.mrf.mxu0
    %v734 = vadd.f32 %v332, %v733
    %735 = vmatmul.bf16.gmra.mxu0 %v376
    %v736 = vpop.f32.mrf.mxu0
    %v737 = vadd.f32 %v332, %v736
    %v738 = vpop.f32.mrf.mxu0
    %v739 = vadd.f32 %v332, %v738
    %740 = vdwg.mxu0
    %741 = vst [vmem:[#allocation2] sm:$0xff] %v555
    %742 = vst [vmem:[#allocation2 + $0x8] sm:$0xff] %v604
    %743 = vst [vmem:[#allocation2 + $0x10] sm:$0xff] %v653
    %744 = vst [vmem:[#allocation2 + $0x18] sm:$0xff] %v702
    %745 = vst [vmem:[#allocation2 + $0x20] sm:$0xff] %v557
    %746 = vst [vmem:[#allocation2 + $0x28] sm:$0xff] %v606
    %747 = vst [vmem:[#allocation2 + $0x30] sm:$0xff] %v655
    %748 = vst [vmem:[#allocation2 + $0x38] sm:$0xff] %v704
    %749 = vst [vmem:[#allocation2 + $0x40] sm:$0xff] %v560
    %750 = vst [vmem:[#allocation2 + $0x48] sm:$0xff] %v609
    %751 = vst [vmem:[#allocation2 + $0x50] sm:$0xff] %v658
    %752 = vst [vmem:[#allocation2 + $0x58] sm:$0xff] %v707
    %753 = vst [vmem:[#allocation2 + $0x60] sm:$0xff] %v562
    %754 = vst [vmem:[#allocation2 + $0x68] sm:$0xff] %v611
    %755 = vst [vmem:[#allocation2 + $0x70] sm:$0xff] %v660
    %756 = vst [vmem:[#allocation2 + $0x78] sm:$0xff] %v709
    %757 = vst [vmem:[#allocation2 + $0x80] sm:$0xff] %v565
    %758 = vst [vmem:[#allocation2 + $0x88] sm:$0xff] %v614
    %759 = vst [vmem:[#allocation2 + $0x90] sm:$0xff] %v663
    %760 = vst [vmem:[#allocation2 + $0x98] sm:$0xff] %v712
    %761 = vst [vmem:[#allocation2 + $0xa0] sm:$0xff] %v567
    %762 = vst [vmem:[#allocation2 + $0xa8] sm:$0xff] %v616
    %763 = vst [vmem:[#allocation2 + $0xb0] sm:$0xff] %v665
    %764 = vst [vmem:[#allocation2 + $0xb8] sm:$0xff] %v714
    %765 = vst [vmem:[#allocation2 + $0xc0] sm:$0xff] %v570
    %766 = vst [vmem:[#allocation2 + $0xc8] sm:$0xff] %v619
    %767 = vst [vmem:[#allocation2 + $0xd0] sm:$0xff] %v668
    %768 = vst [vmem:[#allocation2 + $0xd8] sm:$0xff] %v717
    %769 = vst [vmem:[#allocation2 + $0xe0] sm:$0xff] %v572
    %770 = vst [vmem:[#allocation2 + $0xe8] sm:$0xff] %v621
    %771 = vst [vmem:[#allocation2 + $0xf0] sm:$0xff] %v670
    %772 = vst [vmem:[#allocation2 + $0xf8] sm:$0xff] %v719
    %773 = vst [vmem:[#allocation2 + $0x100] sm:$0xff] %v575
    %774 = vst [vmem:[#allocation2 + $0x108] sm:$0xff] %v624
    %775 = vst [vmem:[#allocation2 + $0x110] sm:$0xff] %v673
    %776 = vst [vmem:[#allocation2 + $0x118] sm:$0xff] %v722
    %777 = vst [vmem:[#allocation2 + $0x120] sm:$0xff] %v577
    %778 = vst [vmem:[#allocation2 + $0x128] sm:$0xff] %v626
    %779 = vst [vmem:[#allocation2 + $0x130] sm:$0xff] %v675
    %780 = vst [vmem:[#allocation2 + $0x138] sm:$0xff] %v724
    %781 = vst [vmem:[#allocation2 + $0x140] sm:$0xff] %v580
    %782 = vst [vmem:[#allocation2 + $0x148] sm:$0xff] %v629
    %783 = vst [vmem:[#allocation2 + $0x150] sm:$0xff] %v678
    %784 = vst [vmem:[#allocation2 + $0x158] sm:$0xff] %v727
    %785 = vst [vmem:[#allocation2 + $0x160] sm:$0xff] %v582
    %786 = vst [vmem:[#allocation2 + $0x168] sm:$0xff] %v631
    %787 = vst [vmem:[#allocation2 + $0x170] sm:$0xff] %v680
    %788 = vst [vmem:[#allocation2 + $0x178] sm:$0xff] %v729
    %789 = vst [vmem:[#allocation2 + $0x180] sm:$0xff] %v585
    %790 = vst [vmem:[#allocation2 + $0x188] sm:$0xff] %v634
    %791 = vst [vmem:[#allocation2 + $0x190] sm:$0xff] %v683
    %792 = vst [vmem:[#allocation2 + $0x198] sm:$0xff] %v732
    %793 = vst [vmem:[#allocation2 + $0x1a0] sm:$0xff] %v587
    %794 = vst [vmem:[#allocation2 + $0x1a8] sm:$0xff] %v636
    %795 = vst [vmem:[#allocation2 + $0x1b0] sm:$0xff] %v685
    %796 = vst [vmem:[#allocation2 + $0x1b8] sm:$0xff] %v734
    %797 = vst [vmem:[#allocation2 + $0x1c0] sm:$0xff] %v590
    %798 = vst [vmem:[#allocation2 + $0x1c8] sm:$0xff] %v639
    %799 = vst [vmem:[#allocation2 + $0x1d0] sm:$0xff] %v688
    %800 = vst [vmem:[#allocation2 + $0x1d8] sm:$0xff] %v737
    %801 = vst [vmem:[#allocation2 + $0x1e0] sm:$0xff] %v592
    %802 = vst [vmem:[#allocation2 + $0x1e8] sm:$0xff] %v641
    %803 = vst [vmem:[#allocation2 + $0x1f0] sm:$0xff] %v690
    %804 = vst [vmem:[#allocation2 + $0x1f8] sm:$0xff] %v739
    %s805 = smul.u32 0, 4
    %s806 = smul.addr %s805, 8
    %s807 = scalar_lea.vmem [#allocation2], %s806
    %v808 = vld [vmem:[%s807] sm:$0xff]
    %v809 = vld [vmem:[%s807 + $0x8] sm:$0xff]
    %v810 = vld [vmem:[%s807 + $0x10] sm:$0xff]
    %v811 = vld [vmem:[%s807 + $0x18] sm:$0xff]
    %v812 = vld [vmem:[%s807 + $0x20] sm:$0xff]
    %v813 = vld [vmem:[%s807 + $0x28] sm:$0xff]
    %v814 = vld [vmem:[%s807 + $0x30] sm:$0xff]
    %v815 = vld [vmem:[%s807 + $0x38] sm:$0xff]
    %v816 = vld [vmem:[%s5] sm:$0xff]
    %v817 = vld [vmem:[%s5 + $0x8] sm:$0xff]
    %v818 = vld [vmem:[%s5 + $0x10] sm:$0xff]
    %v819 = vld [vmem:[%s5 + $0x18] sm:$0xff]
    %v820 = vld [vmem:[%s5 + $0x20] sm:$0xff]
    %v821 = vld [vmem:[%s5 + $0x28] sm:$0xff]
    %v822 = vld [vmem:[%s5 + $0x30] sm:$0xff]
    %v823 = vld [vmem:[%s5 + $0x38] sm:$0xff]
    %v824 = vld [vmem:[%s5 + $0x40] sm:$0xff]
    %v825 = vld [vmem:[%s5 + $0x48] sm:$0xff]
    %v826 = vld [vmem:[%s5 + $0x50] sm:$0xff]
    %v827 = vld [vmem:[%s5 + $0x58] sm:$0xff]
    %v828 = vld [vmem:[%s5 + $0x60] sm:$0xff]
    %v829 = vld [vmem:[%s5 + $0x68] sm:$0xff]
    %v830 = vld [vmem:[%s5 + $0x70] sm:$0xff]
    %v831 = vld [vmem:[%s5 + $0x78] sm:$0xff]
    %v832 = vld [vmem:[%s5 + $0x80] sm:$0xff]
    %v833 = vld [vmem:[%s5 + $0x88] sm:$0xff]
    %v834 = vld [vmem:[%s5 + $0x90] sm:$0xff]
    %v835 = vld [vmem:[%s5 + $0x98] sm:$0xff]
    %v836 = vld [vmem:[%s5 + $0xa0] sm:$0xff]
    %v837 = vld [vmem:[%s5 + $0xa8] sm:$0xff]
    %v838 = vld [vmem:[%s5 + $0xb0] sm:$0xff]
    %v839 = vld [vmem:[%s5 + $0xb8] sm:$0xff]
    %v840 = vld [vmem:[%s5 + $0xc0] sm:$0xff]
    %v841 = vld [vmem:[%s5 + $0xc8] sm:$0xff]
    %v842 = vld [vmem:[%s5 + $0xd0] sm:$0xff]
    %v843 = vld [vmem:[%s5 + $0xd8] sm:$0xff]
    %v844 = vld [vmem:[%s5 + $0xe0] sm:$0xff]
    %v845 = vld [vmem:[%s5 + $0xe8] sm:$0xff]
    %v846 = vld [vmem:[%s5 + $0xf0] sm:$0xff]
    %v847 = vld [vmem:[%s5 + $0xf8] sm:$0xff]
    %v880 = vunpack.c.l.b16 %v816
    %v881 = vunpack.c.h.b16 %v816
    %v882 = vunpack.c.l.b16 %v817
    %v883 = vunpack.c.h.b16 %v817
    %v884 = vunpack.c.l.b16 %v818
    %v885 = vunpack.c.h.b16 %v818
    %v886 = vunpack.c.l.b16 %v819
    %v887 = vunpack.c.h.b16 %v819
    %v888 = vunpack.c.l.b16 %v820
    %v889 = vunpack.c.h.b16 %v820
    %v890 = vunpack.c.l.b16 %v821
    %v891 = vunpack.c.h.b16 %v821
    %v892 = vunpack.c.l.b16 %v822
    %v893 = vunpack.c.h.b16 %v822
    %v894 = vunpack.c.l.b16 %v823
    %v895 = vunpack.c.h.b16 %v823
    %v896 = vunpack.c.l.b16 %v824
    %v897 = vunpack.c.h.b16 %v824
    %v898 = vunpack.c.l.b16 %v825
    %v899 = vunpack.c.h.b16 %v825
    %v900 = vunpack.c.l.b16 %v826
    %v901 = vunpack.c.h.b16 %v826
    %v902 = vunpack.c.l.b16 %v827
    %v903 = vunpack.c.h.b16 %v827
    %v904 = vunpack.c.l.b16 %v828
    %v905 = vunpack.c.h.b16 %v828
    %v906 = vunpack.c.l.b16 %v829
    %v907 = vunpack.c.h.b16 %v829
    %v908 = vunpack.c.l.b16 %v830
    %v909 = vunpack.c.h.b16 %v830
    %v910 = vunpack.c.l.b16 %v831
    %v911 = vunpack.c.h.b16 %v831
    %v912 = vunpack.c.l.b16 %v832
    %v913 = vunpack.c.h.b16 %v832
    %v914 = vunpack.c.l.b16 %v833
    %v915 = vunpack.c.h.b16 %v833
    %v916 = vunpack.c.l.b16 %v834
    %v917 = vunpack.c.h.b16 %v834
    %v918 = vunpack.c.l.b16 %v835
    %v919 = vunpack.c.h.b16 %v835
    %v920 = vunpack.c.l.b16 %v836
    %v921 = vunpack.c.h.b16 %v836
    %v922 = vunpack.c.l.b16 %v837
    %v923 = vunpack.c.h.b16 %v837
    %v924 = vunpack.c.l.b16 %v838
    %v925 = vunpack.c.h.b16 %v838
    %v926 = vunpack.c.l.b16 %v839
    %v927 = vunpack.c.h.b16 %v839
    %v928 = vunpack.c.l.b16 %v840
    %v929 = vunpack.c.h.b16 %v840
    %v930 = vunpack.c.l.b16 %v841
    %v931 = vunpack.c.h.b16 %v841
    %v932 = vunpack.c.l.b16 %v842
    %v933 = vunpack.c.h.b16 %v842
    %v934 = vunpack.c.l.b16 %v843
    %v935 = vunpack.c.h.b16 %v843
    %v936 = vunpack.c.l.b16 %v844
    %v937 = vunpack.c.h.b16 %v844
    %v938 = vunpack.c.l.b16 %v845
    %v939 = vunpack.c.h.b16 %v845
    %v940 = vunpack.c.l.b16 %v846
    %v941 = vunpack.c.h.b16 %v846
    %v942 = vunpack.c.l.b16 %v847
    %v943 = vunpack.c.h.b16 %v847
    %v944 = vpack.c.b16 %v884, %v880
    %v945 = vpack.c.b16 %v885, %v881
    %v946 = vpack.c.b16 %v886, %v882
    %v947 = vpack.c.b16 %v887, %v883
    %v948 = vpack.c.b16 %v892, %v888
    %v949 = vpack.c.b16 %v893, %v889
    %v950 = vpack.c.b16 %v894, %v890
    %v951 = vpack.c.b16 %v895, %v891
    %v952 = vpack.c.b16 %v900, %v896
    %v953 = vpack.c.b16 %v901, %v897
    %v954 = vpack.c.b16 %v902, %v898
    %v955 = vpack.c.b16 %v903, %v899
    %v956 = vpack.c.b16 %v908, %v904
    %v957 = vpack.c.b16 %v909, %v905
    %v958 = vpack.c.b16 %v910, %v906
    %v959 = vpack.c.b16 %v911, %v907
    %v960 = vpack.c.b16 %v916, %v912
    %v961 = vpack.c.b16 %v917, %v913
    %v962 = vpack.c.b16 %v918, %v914
    %v963 = vpack.c.b16 %v919, %v915
    %v964 = vpack.c.b16 %v924, %v920
    %v965 = vpack.c.b16 %v925, %v921
    %v966 = vpack.c.b16 %v926, %v922
    %v967 = vpack.c.b16 %v927, %v923
    %v968 = vpack.c.b16 %v932, %v928
    %v969 = vpack.c.b16 %v933, %v929
    %v970 = vpack.c.b16 %v934, %v930
    %v971 = vpack.c.b16 %v935, %v931
    %v972 = vpack.c.b16 %v940, %v936
    %v973 = vpack.c.b16 %v941, %v937
    %v974 = vpack.c.b16 %v942, %v938
    %v975 = vpack.c.b16 %v943, %v939
    %1008 = vmatpush.bf16.msra.mxu0 %v972
    %1009 = vmatpush.bf16.msra.mxu0 %v968
    %1010 = vmatpush.bf16.msra.mxu0 %v964
    %1011 = vmatpush.bf16.msra.mxu0 %v960
    %1012 = vmatpush.bf16.msra.mxu0 %v956
    %1013 = vmatpush.bf16.msra.mxu0 %v952
    %1014 = vmatpush.bf16.msra.mxu0 %v948
    %1015 = vmatpush.bf16.msra.mxu0 %v944
    %1016 = vmatmul.bf16.gmra.mxu0 0
    %v1017 = vpop.f32.mrf.mxu0
    %v1018 = vadd.f32 0.0, %v1017
    %v1019 = vpop.f32.mrf.mxu0
    %v1020 = vadd.f32 0.0, %v1019
    %1021 = vdwg.mxu0
    %1022 = vmatpush.bf16.msra.mxu0 %v973
    %1023 = vmatpush.bf16.msra.mxu0 %v969
    %1024 = vmatpush.bf16.msra.mxu0 %v965
    %1025 = vmatpush.bf16.msra.mxu0 %v961
    %1026 = vmatpush.bf16.msra.mxu0 %v957
    %1027 = vmatpush.bf16.msra.mxu0 %v953
    %1028 = vmatpush.bf16.msra.mxu0 %v949
    %1029 = vmatpush.bf16.msra.mxu0 %v945
    %1030 = vmatmul.bf16.gmra.mxu0 0
    %v1031 = vpop.f32.mrf.mxu0
    %v1032 = vadd.f32 0.0, %v1031
    %v1033 = vpop.f32.mrf.mxu0
    %v1034 = vadd.f32 0.0, %v1033
    %1035 = vdwg.mxu0
    %1036 = vmatpush.bf16.msra.mxu0 %v974
    %1037 = vmatpush.bf16.msra.mxu0 %v970
    %1038 = vmatpush.bf16.msra.mxu0 %v966
    %1039 = vmatpush.bf16.msra.mxu0 %v962
    %1040 = vmatpush.bf16.msra.mxu0 %v958
    %1041 = vmatpush.bf16.msra.mxu0 %v954
    %1042 = vmatpush.bf16.msra.mxu0 %v950
    %1043 = vmatpush.bf16.msra.mxu0 %v946
    %1044 = vmatmul.bf16.gmra.mxu0 0
    %v1045 = vpop.f32.mrf.mxu0
    %v1046 = vadd.f32 0.0, %v1045
    %v1047 = vpop.f32.mrf.mxu0
    %v1048 = vadd.f32 0.0, %v1047
    %1049 = vdwg.mxu0
    %1050 = vmatpush.bf16.msra.mxu0 %v975
    %1051 = vmatpush.bf16.msra.mxu0 %v971
    %1052 = vmatpush.bf16.msra.mxu0 %v967
    %1053 = vmatpush.bf16.msra.mxu0 %v963
    %1054 = vmatpush.bf16.msra.mxu0 %v959
    %1055 = vmatpush.bf16.msra.mxu0 %v955
    %1056 = vmatpush.bf16.msra.mxu0 %v951
    %1057 = vmatpush.bf16.msra.mxu0 %v947
    %1058 = vmatmul.bf16.gmra.mxu0 0
    %v1059 = vpop.f32.mrf.mxu0
    %v1060 = vadd.f32 0.0, %v1059
    %v1061 = vpop.f32.mrf.mxu0
    %v1062 = vadd.f32 0.0, %v1061
    %1063 = vdwg.mxu0
    %v1064 = vadd.f32 %v808, %v1018
    %v1065 = vadd.f32 %v809, %v1032
    %v1066 = vadd.f32 %v810, %v1046
    %v1067 = vadd.f32 %v811, %v1060
    %v1068 = vadd.f32 %v812, %v1020
    %v1069 = vadd.f32 %v813, %v1034
    %v1070 = vadd.f32 %v814, %v1048
    %v1071 = vadd.f32 %v815, %v1062
    %v1072 = vxor.u32 %v1064, 2147483648
    %v1073 = vxor.u32 %v1065, 2147483648
    %v1074 = vxor.u32 %v1066, 2147483648
    %v1075 = vxor.u32 %v1068, 2147483648
    %v1076 = vxor.u32 %v1069, 2147483648
    %v1077 = vxor.u32 %v1070, 2147483648
    %v1078 = vmul.f32 %v1072, 1.442695
    %v1079 = vpow.pop %v1078
    %v1080 = vmul.f32 %v1073, 1.442695
    %v1081 = vpow.pop %v1080
    %v1082 = vmul.f32 %v1074, 1.442695
    %v1083 = vpow.pop %v1082
    %v1084 = vmul.f32 %v1075, 1.442695
    %v1085 = vpow.pop %v1084
    %v1086 = vmul.f32 %v1076, 1.442695
    %v1087 = vpow.pop %v1086
    %v1088 = vmul.f32 %v1077, 1.442695
    %v1089 = vpow.pop %v1088
    %v1090 = vadd.f32 %v1079, 1.0
    %v1091 = vadd.f32 %v1081, 1.0
    %v1092 = vadd.f32 %v1083, 1.0
    %v1093 = vadd.f32 %v1085, 1.0
    %v1094 = vadd.f32 %v1087, 1.0
    %v1095 = vadd.f32 %v1089, 1.0
    %v1096 = vrcp.pop %v1090
    %v1097 = vmul.f32 %v1090, %v1096
    %v1098 = vsub.f32 1.0, %v1097
    %v1099 = vmul.f32 %v1096, %v1098
    %v1100 = vadd.f32 %v1096, %v1099
    %vm1101 = vweird.f32 %v1090
    %vm1102 = vweird.f32 %v1096
    %vm1103 = vmor %vm1101, %vm1102
    %v1104 = vsel %vm1103, %v1096, %v1100
    %v1105 = vand.u32 2147483647, %v1090
    %vm1106 = vcmp.eq.f32.partialorder %v1105, 8.507059e+37
    %v1107 = vand.u32 %v1090, 2147483648
    %v1108 = vor.u32 1.1754944e-38, %v1107
    %v1109 = vsel %vm1106, %v1108, %v1104
    %v1110 = vmul.f32 1.0, %v1109
    %v1111 = vrcp.pop %v1091
    %v1112 = vmul.f32 %v1091, %v1111
    %v1113 = vsub.f32 1.0, %v1112
    %v1114 = vmul.f32 %v1111, %v1113
    %v1115 = vadd.f32 %v1111, %v1114
    %vm1116 = vweird.f32 %v1091
    %vm1117 = vweird.f32 %v1111
    %vm1118 = vmor %vm1116, %vm1117
    %v1119 = vsel %vm1118, %v1111, %v1115
    %v1120 = vand.u32 2147483647, %v1091
    %vm1121 = vcmp.eq.f32.partialorder %v1120, 8.507059e+37
    %v1122 = vand.u32 %v1091, 2147483648
    %v1123 = vor.u32 1.1754944e-38, %v1122
    %v1124 = vsel %vm1121, %v1123, %v1119
    %v1125 = vmul.f32 1.0, %v1124
    %v1126 = vrcp.pop %v1092
    %v1127 = vmul.f32 %v1092, %v1126
    %v1128 = vsub.f32 1.0, %v1127
    %v1129 = vmul.f32 %v1126, %v1128
    %v1130 = vadd.f32 %v1126, %v1129
    %vm1131 = vweird.f32 %v1092
    %vm1132 = vweird.f32 %v1126
    %vm1133 = vmor %vm1131, %vm1132
    %v1134 = vsel %vm1133, %v1126, %v1130
    %v1135 = vand.u32 2147483647, %v1092
    %vm1136 = vcmp.eq.f32.partialorder %v1135, 8.507059e+37
    %v1137 = vand.u32 %v1092, 2147483648
    %v1138 = vor.u32 1.1754944e-38, %v1137
    %v1139 = vsel %vm1136, %v1138, %v1134
    %v1140 = vmul.f32 1.0, %v1139
    %v1141 = vrcp.pop %v1093
    %v1142 = vmul.f32 %v1093, %v1141
    %v1143 = vsub.f32 1.0, %v1142
    %v1144 = vmul.f32 %v1141, %v1143
    %v1145 = vadd.f32 %v1141, %v1144
    %vm1146 = vweird.f32 %v1093
    %vm1147 = vweird.f32 %v1141
    %vm1148 = vmor %vm1146, %vm1147
    %v1149 = vsel %vm1148, %v1141, %v1145
    %v1150 = vand.u32 2147483647, %v1093
    %vm1151 = vcmp.eq.f32.partialorder %v1150, 8.507059e+37
    %v1152 = vand.u32 %v1093, 2147483648
    %v1153 = vor.u32 1.1754944e-38, %v1152
    %v1154 = vsel %vm1151, %v1153, %v1149
    %v1155 = vmul.f32 1.0, %v1154
    %v1156 = vrcp.pop %v1094
    %v1157 = vmul.f32 %v1094, %v1156
    %v1158 = vsub.f32 1.0, %v1157
    %v1159 = vmul.f32 %v1156, %v1158
    %v1160 = vadd.f32 %v1156, %v1159
    %vm1161 = vweird.f32 %v1094
    %vm1162 = vweird.f32 %v1156
    %vm1163 = vmor %vm1161, %vm1162
    %v1164 = vsel %vm1163, %v1156, %v1160
    %v1165 = vand.u32 2147483647, %v1094
    %vm1166 = vcmp.eq.f32.partialorder %v1165, 8.507059e+37
    %v1167 = vand.u32 %v1094, 2147483648
    %v1168 = vor.u32 1.1754944e-38, %v1167
    %v1169 = vsel %vm1166, %v1168, %v1164
    %v1170 = vmul.f32 1.0, %v1169
    %v1171 = vrcp.pop %v1095
    %v1172 = vmul.f32 %v1095, %v1171
    %v1173 = vsub.f32 1.0, %v1172
    %v1174 = vmul.f32 %v1171, %v1173
    %v1175 = vadd.f32 %v1171, %v1174
    %vm1176 = vweird.f32 %v1095
    %vm1177 = vweird.f32 %v1171
    %vm1178 = vmor %vm1176, %vm1177
    %v1179 = vsel %vm1178, %v1171, %v1175
    %v1180 = vand.u32 2147483647, %v1095
    %vm1181 = vcmp.eq.f32.partialorder %v1180, 8.507059e+37
    %v1182 = vand.u32 %v1095, 2147483648
    %v1183 = vor.u32 1.1754944e-38, %v1182
    %v1184 = vsel %vm1181, %v1183, %v1179
    %v1185 = vmul.f32 1.0, %v1184
    %v1186 = vtanh.pop %v1067
    %v1187 = vtanh.pop %v1071
    %v1188 = vmul.f32 %v1125, 0.0
    %v1189 = vmul.f32 %v1170, 0.0
    %v1190 = vmul.f32 %v1110, %v1186
    %v1191 = vmul.f32 %v1155, %v1187
    %v1192 = vadd.f32 %v1188, %v1190
    %v1193 = vadd.f32 %v1189, %v1191
    %v1194 = vtanh.pop %v1192
    %v1195 = vtanh.pop %v1193
    %v1196 = vmul.f32 %v1140, %v1194
    %v1197 = vmul.f32 %v1185, %v1195
    %v1198 = vpack.c.bf16 %v1196, %v1196
    %v1199 = vpack.c.bf16 %v1197, %v1197
    %1200 = vst [vmem:[#allocation3] sm:$0xf] %v1198
    %1201 = vst [vmem:[#allocation3 + $0x4] sm:$0xf] %v1199
    %s1202 = smul.u32 2, 4
    %s1203 = smul.addr %s1202, 8
    %s1204 = scalar_lea.vmem [#allocation2], %s1203
    %v1205 = vld [vmem:[%s1204] sm:$0xff]
    %v1206 = vld [vmem:[%s1204 + $0x8] sm:$0xff]
    %v1207 = vld [vmem:[%s1204 + $0x10] sm:$0xff]
    %v1208 = vld [vmem:[%s1204 + $0x18] sm:$0xff]
    %v1209 = vld [vmem:[%s1204 + $0x20] sm:$0xff]
    %v1210 = vld [vmem:[%s1204 + $0x28] sm:$0xff]
    %v1211 = vld [vmem:[%s1204 + $0x30] sm:$0xff]
    %v1212 = vld [vmem:[%s1204 + $0x38] sm:$0xff]
    %v1213 = vld [vmem:[%s5] sm:$0xff]
    %v1214 = vld [vmem:[%s5 + $0x8] sm:$0xff]
    %v1215 = vld [vmem:[%s5 + $0x10] sm:$0xff]
    %v1216 = vld [vmem:[%s5 + $0x18] sm:$0xff]
    %v1217 = vld [vmem:[%s5 + $0x20] sm:$0xff]
    %v1218 = vld [vmem:[%s5 + $0x28] sm:$0xff]
    %v1219 = vld [vmem:[%s5 + $0x30] sm:$0xff]
    %v1220 = vld [vmem:[%s5 + $0x38] sm:$0xff]
    %v1221 = vld [vmem:[%s5 + $0x40] sm:$0xff]
    %v1222 = vld [vmem:[%s5 + $0x48] sm:$0xff]
    %v1223 = vld [vmem:[%s5 + $0x50] sm:$0xff]
    %v1224 = vld [vmem:[%s5 + $0x58] sm:$0xff]
    %v1225 = vld [vmem:[%s5 + $0x60] sm:$0xff]
    %v1226 = vld [vmem:[%s5 + $0x68] sm:$0xff]
    %v1227 = vld [vmem:[%s5 + $0x70] sm:$0xff]
    %v1228 = vld [vmem:[%s5 + $0x78] sm:$0xff]
    %v1229 = vld [vmem:[%s5 + $0x80] sm:$0xff]
    %v1230 = vld [vmem:[%s5 + $0x88] sm:$0xff]
    %v1231 = vld [vmem:[%s5 + $0x90] sm:$0xff]
    %v1232 = vld [vmem:[%s5 + $0x98] sm:$0xff]
    %v1233 = vld [vmem:[%s5 + $0xa0] sm:$0xff]
    %v1234 = vld [vmem:[%s5 + $0xa8] sm:$0xff]
    %v1235 = vld [vmem:[%s5 + $0xb0] sm:$0xff]
    %v1236 = vld [vmem:[%s5 + $0xb8] sm:$0xff]
    %v1237 = vld [vmem:[%s5 + $0xc0] sm:$0xff]
    %v1238 = vld [vmem:[%s5 + $0xc8] sm:$0xff]
    %v1239 = vld [vmem:[%s5 + $0xd0] sm:$0xff]
    %v1240 = vld [vmem:[%s5 + $0xd8] sm:$0xff]
    %v1241 = vld [vmem:[%s5 + $0xe0] sm:$0xff]
    %v1242 = vld [vmem:[%s5 + $0xe8] sm:$0xff]
    %v1243 = vld [vmem:[%s5 + $0xf0] sm:$0xff]
    %v1244 = vld [vmem:[%s5 + $0xf8] sm:$0xff]
    %v1247 = vunpack.c.l.b16 %v1198
    %v1248 = vunpack.c.l.b16 %v1199
    %v1249 = vpack.c.b16 %v1248, %v1247
    %v1283 = vunpack.c.l.b16 %v1213
    %v1284 = vunpack.c.h.b16 %v1213
    %v1285 = vunpack.c.l.b16 %v1214
    %v1286 = vunpack.c.h.b16 %v1214
    %v1287 = vunpack.c.l.b16 %v1215
    %v1288 = vunpack.c.h.b16 %v1215
    %v1289 = vunpack.c.l.b16 %v1216
    %v1290 = vunpack.c.h.b16 %v1216
    %v1291 = vunpack.c.l.b16 %v1217
    %v1292 = vunpack.c.h.b16 %v1217
    %v1293 = vunpack.c.l.b16 %v1218
    %v1294 = vunpack.c.h.b16 %v1218
    %v1295 = vunpack.c.l.b16 %v1219
    %v1296 = vunpack.c.h.b16 %v1219
    %v1297 = vunpack.c.l.b16 %v1220
    %v1298 = vunpack.c.h.b16 %v1220
    %v1299 = vunpack.c.l.b16 %v1221
    %v1300 = vunpack.c.h.b16 %v1221
    %v1301 = vunpack.c.l.b16 %v1222
    %v1302 = vunpack.c.h.b16 %v1222
    %v1303 = vunpack.c.l.b16 %v1223
    %v1304 = vunpack.c.h.b16 %v1223
    %v1305 = vunpack.c.l.b16 %v1224
    %v1306 = vunpack.c.h.b16 %v1224
    %v1307 = vunpack.c.l.b16 %v1225
    %v1308 = vunpack.c.h.b16 %v1225
    %v1309 = vunpack.c.l.b16 %v1226
    %v1310 = vunpack.c.h.b16 %v1226
    %v1311 = vunpack.c.l.b16 %v1227
    %v1312 = vunpack.c.h.b16 %v1227
    %v1313 = vunpack.c.l.b16 %v1228
    %v1314 = vunpack.c.h.b16 %v1228
    %v1315 = vunpack.c.l.b16 %v1229
    %v1316 = vunpack.c.h.b16 %v1229
    %v1317 = vunpack.c.l.b16 %v1230
    %v1318 = vunpack.c.h.b16 %v1230
    %v1319 = vunpack.c.l.b16 %v1231
    %v1320 = vunpack.c.h.b16 %v1231
    %v1321 = vunpack.c.l.b16 %v1232
    %v1322 = vunpack.c.h.b16 %v1232
    %v1323 = vunpack.c.l.b16 %v1233
    %v1324 = vunpack.c.h.b16 %v1233
    %v1325 = vunpack.c.l.b16 %v1234
    %v1326 = vunpack.c.h.b16 %v1234
    %v1327 = vunpack.c.l.b16 %v1235
    %v1328 = vunpack.c.h.b16 %v1235
    %v1329 = vunpack.c.l.b16 %v1236
    %v1330 = vunpack.c.h.b16 %v1236
    %v1331 = vunpack.c.l.b16 %v1237
    %v1332 = vunpack.c.h.b16 %v1237
    %v1333 = vunpack.c.l.b16 %v1238
    %v1334 = vunpack.c.h.b16 %v1238
    %v1335 = vunpack.c.l.b16 %v1239
    %v1336 = vunpack.c.h.b16 %v1239
    %v1337 = vunpack.c.l.b16 %v1240
    %v1338 = vunpack.c.h.b16 %v1240
    %v1339 = vunpack.c.l.b16 %v1241
    %v1340 = vunpack.c.h.b16 %v1241
    %v1341 = vunpack.c.l.b16 %v1242
    %v1342 = vunpack.c.h.b16 %v1242
    %v1343 = vunpack.c.l.b16 %v1243
    %v1344 = vunpack.c.h.b16 %v1243
    %v1345 = vunpack.c.l.b16 %v1244
    %v1346 = vunpack.c.h.b16 %v1244
    %v1347 = vpack.c.b16 %v1287, %v1283
    %v1348 = vpack.c.b16 %v1288, %v1284
    %v1349 = vpack.c.b16 %v1289, %v1285
    %v1350 = vpack.c.b16 %v1290, %v1286
    %v1351 = vpack.c.b16 %v1295, %v1291
    %v1352 = vpack.c.b16 %v1296, %v1292
    %v1353 = vpack.c.b16 %v1297, %v1293
    %v1354 = vpack.c.b16 %v1298, %v1294
    %v1355 = vpack.c.b16 %v1303, %v1299
    %v1356 = vpack.c.b16 %v1304, %v1300
    %v1357 = vpack.c.b16 %v1305, %v1301
    %v1358 = vpack.c.b16 %v1306, %v1302
    %v1359 = vpack.c.b16 %v1311, %v1307
    %v1360 = vpack.c.b16 %v1312, %v1308
    %v1361 = vpack.c.b16 %v1313, %v1309
    %v1362 = vpack.c.b16 %v1314, %v1310
    %v1363 = vpack.c.b16 %v1319, %v1315
    %v1364 = vpack.c.b16 %v1320, %v1316
    %v1365 = vpack.c.b16 %v1321, %v1317
    %v1366 = vpack.c.b16 %v1322, %v1318
    %v1367 = vpack.c.b16 %v1327, %v1323
    %v1368 = vpack.c.b16 %v1328, %v1324
    %v1369 = vpack.c.b16 %v1329, %v1325
    %v1370 = vpack.c.b16 %v1330, %v1326
    %v1371 = vpack.c.b16 %v1335, %v1331
    %v1372 = vpack.c.b16 %v1336, %v1332
    %v1373 = vpack.c.b16 %v1337, %v1333
    %v1374 = vpack.c.b16 %v1338, %v1334
    %v1375 = vpack.c.b16 %v1343, %v1339
    %v1376 = vpack.c.b16 %v1344, %v1340
    %v1377 = vpack.c.b16 %v1345, %v1341
    %v1378 = vpack.c.b16 %v1346, %v1342
    %1411 = vmatpush.bf16.msra.mxu0 %v1375
    %1412 = vmatpush.bf16.msra.mxu0 %v1371
    %1413 = vmatpush.bf16.msra.mxu0 %v1367
    %1414 = vmatpush.bf16.msra.mxu0 %v1363
    %1415 = vmatpush.bf16.msra.mxu0 %v1359
    %1416 = vmatpush.bf16.msra.mxu0 %v1355
    %1417 = vmatpush.bf16.msra.mxu0 %v1351
    %1418 = vmatpush.bf16.msra.mxu0 %v1347
    %1419 = vmatmul.bf16.gmra.mxu0 %v1249
    %v1420 = vpop.f32.mrf.mxu0
    %v1421 = vadd.f32 0.0, %v1420
    %v1422 = vpop.f32.mrf.mxu0
    %v1423 = vadd.f32 0.0, %v1422
    %1424 = vdwg.mxu0
    %1425 = vmatpush.bf16.msra.mxu0 %v1376
    %1426 = vmatpush.bf16.msra.mxu0 %v1372
    %1427 = vmatpush.bf16.msra.mxu0 %v1368
    %1428 = vmatpush.bf16.msra.mxu0 %v1364
    %1429 = vmatpush.bf16.msra.mxu0 %v1360
    %1430 = vmatpush.bf16.msra.mxu0 %v1356
    %1431 = vmatpush.bf16.msra.mxu0 %v1352
    %1432 = vmatpush.bf16.msra.mxu0 %v1348
    %1433 = vmatmul.bf16.gmra.mxu0 %v1249
    %v1434 = vpop.f32.mrf.mxu0
    %v1435 = vadd.f32 0.0, %v1434
    %v1436 = vpop.f32.mrf.mxu0
    %v1437 = vadd.f32 0.0, %v1436
    %1438 = vdwg.mxu0
    %1439 = vmatpush.bf16.msra.mxu0 %v1377
    %1440 = vmatpush.bf16.msra.mxu0 %v1373
    %1441 = vmatpush.bf16.msra.mxu0 %v1369
    %1442 = vmatpush.bf16.msra.mxu0 %v1365
    %1443 = vmatpush.bf16.msra.mxu0 %v1361
    %1444 = vmatpush.bf16.msra.mxu0 %v1357
    %1445 = vmatpush.bf16.msra.mxu0 %v1353
    %1446 = vmatpush.bf16.msra.mxu0 %v1349
    %1447 = vmatmul.bf16.gmra.mxu0 %v1249
    %v1448 = vpop.f32.mrf.mxu0
    %v1449 = vadd.f32 0.0, %v1448
    %v1450 = vpop.f32.mrf.mxu0
    %v1451 = vadd.f32 0.0, %v1450
    %1452 = vdwg.mxu0
    %1453 = vmatpush.bf16.msra.mxu0 %v1378
    %1454 = vmatpush.bf16.msra.mxu0 %v1374
    %1455 = vmatpush.bf16.msra.mxu0 %v1370
    %1456 = vmatpush.bf16.msra.mxu0 %v1366
    %1457 = vmatpush.bf16.msra.mxu0 %v1362
    %1458 = vmatpush.bf16.msra.mxu0 %v1358
    %1459 = vmatpush.bf16.msra.mxu0 %v1354
    %1460 = vmatpush.bf16.msra.mxu0 %v1350
    %1461 = vmatmul.bf16.gmra.mxu0 %v1249
    %v1462 = vpop.f32.mrf.mxu0
    %v1463 = vadd.f32 0.0, %v1462
    %v1464 = vpop.f32.mrf.mxu0
    %v1465 = vadd.f32 0.0, %v1464
    %1466 = vdwg.mxu0
    %v1467 = vadd.f32 %v1205, %v1421
    %v1468 = vadd.f32 %v1206, %v1435
    %v1469 = vadd.f32 %v1207, %v1449
    %v1470 = vadd.f32 %v1208, %v1463
    %v1471 = vadd.f32 %v1209, %v1423
    %v1472 = vadd.f32 %v1210, %v1437
    %v1473 = vadd.f32 %v1211, %v1451
    %v1474 = vadd.f32 %v1212, %v1465
    %v1475 = vxor.u32 %v1467, 2147483648
    %v1476 = vxor.u32 %v1468, 2147483648
    %v1477 = vxor.u32 %v1469, 2147483648
    %v1478 = vxor.u32 %v1471, 2147483648
    %v1479 = vxor.u32 %v1472, 2147483648
    %v1480 = vxor.u32 %v1473, 2147483648
    %v1481 = vmul.f32 %v1475, 1.442695
    %v1482 = vpow.pop %v1481
    %v1483 = vmul.f32 %v1476, 1.442695
    %v1484 = vpow.pop %v1483
    %v1485 = vmul.f32 %v1477, 1.442695
    %v1486 = vpow.pop %v1485
    %v1487 = vmul.f32 %v1478, 1.442695
    %v1488 = vpow.pop %v1487
    %v1489 = vmul.f32 %v1479, 1.442695
    %v1490 = vpow.pop %v1489
    %v1491 = vmul.f32 %v1480, 1.442695
    %v1492 = vpow.pop %v1491
    %v1493 = vadd.f32 %v1482, 1.0
    %v1494 = vadd.f32 %v1484, 1.0
    %v1495 = vadd.f32 %v1486, 1.0
    %v1496 = vadd.f32 %v1488, 1.0
    %v1497 = vadd.f32 %v1490, 1.0
    %v1498 = vadd.f32 %v1492, 1.0
    %v1499 = vrcp.pop %v1493
    %v1500 = vmul.f32 %v1493, %v1499
    %v1501 = vsub.f32 1.0, %v1500
    %v1502 = vmul.f32 %v1499, %v1501
    %v1503 = vadd.f32 %v1499, %v1502
    %vm1504 = vweird.f32 %v1493
    %vm1505 = vweird.f32 %v1499
    %vm1506 = vmor %vm1504, %vm1505
    %v1507 = vsel %vm1506, %v1499, %v1503
    %v1508 = vand.u32 2147483647, %v1493
    %vm1509 = vcmp.eq.f32.partialorder %v1508, 8.507059e+37
    %v1510 = vand.u32 %v1493, 2147483648
    %v1511 = vor.u32 1.1754944e-38, %v1510
    %v1512 = vsel %vm1509, %v1511, %v1507
    %v1513 = vmul.f32 1.0, %v1512
    %v1514 = vrcp.pop %v1494
    %v1515 = vmul.f32 %v1494, %v1514
    %v1516 = vsub.f32 1.0, %v1515
    %v1517 = vmul.f32 %v1514, %v1516
    %v1518 = vadd.f32 %v1514, %v1517
    %vm1519 = vweird.f32 %v1494
    %vm1520 = vweird.f32 %v1514
    %vm1521 = vmor %vm1519, %vm1520
    %v1522 = vsel %vm1521, %v1514, %v1518
    %v1523 = vand.u32 2147483647, %v1494
    %vm1524 = vcmp.eq.f32.partialorder %v1523, 8.507059e+37
    %v1525 = vand.u32 %v1494, 2147483648
    %v1526 = vor.u32 1.1754944e-38, %v1525
    %v1527 = vsel %vm1524, %v1526, %v1522
    %v1528 = vmul.f32 1.0, %v1527
    %v1529 = vrcp.pop %v1495
    %v1530 = vmul.f32 %v1495, %v1529
    %v1531 = vsub.f32 1.0, %v1530
    %v1532 = vmul.f32 %v1529, %v1531
    %v1533 = vadd.f32 %v1529, %v1532
    %vm1534 = vweird.f32 %v1495
    %vm1535 = vweird.f32 %v1529
    %vm1536 = vmor %vm1534, %vm1535
    %v1537 = vsel %vm1536, %v1529, %v1533
    %v1538 = vand.u32 2147483647, %v1495
    %vm1539 = vcmp.eq.f32.partialorder %v1538, 8.507059e+37
    %v1540 = vand.u32 %v1495, 2147483648
    %v1541 = vor.u32 1.1754944e-38, %v1540
    %v1542 = vsel %vm1539, %v1541, %v1537
    %v1543 = vmul.f32 1.0, %v1542
    %v1544 = vrcp.pop %v1496
    %v1545 = vmul.f32 %v1496, %v1544
    %v1546 = vsub.f32 1.0, %v1545
    %v1547 = vmul.f32 %v1544, %v1546
    %v1548 = vadd.f32 %v1544, %v1547
    %vm1549 = vweird.f32 %v1496
    %vm1550 = vweird.f32 %v1544
    %vm1551 = vmor %vm1549, %vm1550
    %v1552 = vsel %vm1551, %v1544, %v1548
    %v1553 = vand.u32 2147483647, %v1496
    %vm1554 = vcmp.eq.f32.partialorder %v1553, 8.507059e+37
    %v1555 = vand.u32 %v1496, 2147483648
    %v1556 = vor.u32 1.1754944e-38, %v1555
    %v1557 = vsel %vm1554, %v1556, %v1552
    %v1558 = vmul.f32 1.0, %v1557
    %v1559 = vrcp.pop %v1497
    %v1560 = vmul.f32 %v1497, %v1559
    %v1561 = vsub.f32 1.0, %v1560
    %v1562 = vmul.f32 %v1559, %v1561
    %v1563 = vadd.f32 %v1559, %v1562
    %vm1564 = vweird.f32 %v1497
    %vm1565 = vweird.f32 %v1559
    %vm1566 = vmor %vm1564, %vm1565
    %v1567 = vsel %vm1566, %v1559, %v1563
    %v1568 = vand.u32 2147483647, %v1497
    %vm1569 = vcmp.eq.f32.partialorder %v1568, 8.507059e+37
    %v1570 = vand.u32 %v1497, 2147483648
    %v1571 = vor.u32 1.1754944e-38, %v1570
    %v1572 = vsel %vm1569, %v1571, %v1567
    %v1573 = vmul.f32 1.0, %v1572
    %v1574 = vrcp.pop %v1498
    %v1575 = vmul.f32 %v1498, %v1574
    %v1576 = vsub.f32 1.0, %v1575
    %v1577 = vmul.f32 %v1574, %v1576
    %v1578 = vadd.f32 %v1574, %v1577
    %vm1579 = vweird.f32 %v1498
    %vm1580 = vweird.f32 %v1574
    %vm1581 = vmor %vm1579, %vm1580
    %v1582 = vsel %vm1581, %v1574, %v1578
    %v1583 = vand.u32 2147483647, %v1498
    %vm1584 = vcmp.eq.f32.partialorder %v1583, 8.507059e+37
    %v1585 = vand.u32 %v1498, 2147483648
    %v1586 = vor.u32 1.1754944e-38, %v1585
    %v1587 = vsel %vm1584, %v1586, %v1582
    %v1588 = vmul.f32 1.0, %v1587
    %v1589 = vtanh.pop %v1470
    %v1590 = vtanh.pop %v1474
    %v1591 = vmul.f32 %v1528, %v1192
    %v1592 = vmul.f32 %v1573, %v1193
    %v1593 = vmul.f32 %v1513, %v1589
    %v1594 = vmul.f32 %v1558, %v1590
    %v1595 = vadd.f32 %v1591, %v1593
    %v1596 = vadd.f32 %v1592, %v1594
    %v1597 = vtanh.pop %v1595
    %v1598 = vtanh.pop %v1596
    %v1599 = vmul.f32 %v1543, %v1597
    %v1600 = vmul.f32 %v1588, %v1598
    %v1601 = vpack.c.bf16 %v1599, %v1599
    %v1602 = vpack.c.bf16 %v1600, %v1600
    %s1603 = scalar_lea.vmem [#allocation3], 8
    %1604 = vst [vmem:[%s1603] sm:$0xf] %v1601
    %1605 = vst [vmem:[%s1603 + $0x4] sm:$0xf] %v1602
    %s1606 = smul.u32 4, 4
    %s1607 = smul.addr %s1606, 8
    %s1608 = scalar_lea.vmem [#allocation2], %s1607
    %v1609 = vld [vmem:[%s1608] sm:$0xff]
    %v1610 = vld [vmem:[%s1608 + $0x8] sm:$0xff]
    %v1611 = vld [vmem:[%s1608 + $0x10] sm:$0xff]
    %v1612 = vld [vmem:[%s1608 + $0x18] sm:$0xff]
    %v1613 = vld [vmem:[%s1608 + $0x20] sm:$0xff]
    %v1614 = vld [vmem:[%s1608 + $0x28] sm:$0xff]
    %v1615 = vld [vmem:[%s1608 + $0x30] sm:$0xff]
    %v1616 = vld [vmem:[%s1608 + $0x38] sm:$0xff]
    %v1617 = vld [vmem:[%s5] sm:$0xff]
    %v1618 = vld [vmem:[%s5 + $0x8] sm:$0xff]
    %v1619 = vld [vmem:[%s5 + $0x10] sm:$0xff]
    %v1620 = vld [vmem:[%s5 + $0x18] sm:$0xff]
    %v1621 = vld [vmem:[%s5 + $0x20] sm:$0xff]
    %v1622 = vld [vmem:[%s5 + $0x28] sm:$0xff]
    %v1623 = vld [vmem:[%s5 + $0x30] sm:$0xff]
    %v1624 = vld [vmem:[%s5 + $0x38] sm:$0xff]
    %v1625 = vld [vmem:[%s5 + $0x40] sm:$0xff]
    %v1626 = vld [vmem:[%s5 + $0x48] sm:$0xff]
    %v1627 = vld [vmem:[%s5 + $0x50] sm:$0xff]
    %v1628 = vld [vmem:[%s5 + $0x58] sm:$0xff]
    %v1629 = vld [vmem:[%s5 + $0x60] sm:$0xff]
    %v1630 = vld [vmem:[%s5 + $0x68] sm:$0xff]
    %v1631 = vld [vmem:[%s5 + $0x70] sm:$0xff]
    %v1632 = vld [vmem:[%s5 + $0x78] sm:$0xff]
    %v1633 = vld [vmem:[%s5 + $0x80] sm:$0xff]
    %v1634 = vld [vmem:[%s5 + $0x88] sm:$0xff]
    %v1635 = vld [vmem:[%s5 + $0x90] sm:$0xff]
    %v1636 = vld [vmem:[%s5 + $0x98] sm:$0xff]
    %v1637 = vld [vmem:[%s5 + $0xa0] sm:$0xff]
    %v1638 = vld [vmem:[%s5 + $0xa8] sm:$0xff]
    %v1639 = vld [vmem:[%s5 + $0xb0] sm:$0xff]
    %v1640 = vld [vmem:[%s5 + $0xb8] sm:$0xff]
    %v1641 = vld [vmem:[%s5 + $0xc0] sm:$0xff]
    %v1642 = vld [vmem:[%s5 + $0xc8] sm:$0xff]
    %v1643 = vld [vmem:[%s5 + $0xd0] sm:$0xff]
    %v1644 = vld [vmem:[%s5 + $0xd8] sm:$0xff]
    %v1645 = vld [vmem:[%s5 + $0xe0] sm:$0xff]
    %v1646 = vld [vmem:[%s5 + $0xe8] sm:$0xff]
    %v1647 = vld [vmem:[%s5 + $0xf0] sm:$0xff]
    %v1648 = vld [vmem:[%s5 + $0xf8] sm:$0xff]
    %v1651 = vunpack.c.l.b16 %v1601
    %v1652 = vunpack.c.l.b16 %v1602
    %v1653 = vpack.c.b16 %v1652, %v1651
    %v1687 = vunpack.c.l.b16 %v1617
    %v1688 = vunpack.c.h.b16 %v1617
    %v1689 = vunpack.c.l.b16 %v1618
    %v1690 = vunpack.c.h.b16 %v1618
    %v1691 = vunpack.c.l.b16 %v1619
    %v1692 = vunpack.c.h.b16 %v1619
    %v1693 = vunpack.c.l.b16 %v1620
    %v1694 = vunpack.c.h.b16 %v1620
    %v1695 = vunpack.c.l.b16 %v1621
    %v1696 = vunpack.c.h.b16 %v1621
    %v1697 = vunpack.c.l.b16 %v1622
    %v1698 = vunpack.c.h.b16 %v1622
    %v1699 = vunpack.c.l.b16 %v1623
    %v1700 = vunpack.c.h.b16 %v1623
    %v1701 = vunpack.c.l.b16 %v1624
    %v1702 = vunpack.c.h.b16 %v1624
    %v1703 = vunpack.c.l.b16 %v1625
    %v1704 = vunpack.c.h.b16 %v1625
    %v1705 = vunpack.c.l.b16 %v1626
    %v1706 = vunpack.c.h.b16 %v1626
    %v1707 = vunpack.c.l.b16 %v1627
    %v1708 = vunpack.c.h.b16 %v1627
    %v1709 = vunpack.c.l.b16 %v1628
    %v1710 = vunpack.c.h.b16 %v1628
    %v1711 = vunpack.c.l.b16 %v1629
    %v1712 = vunpack.c.h.b16 %v1629
    %v1713 = vunpack.c.l.b16 %v1630
    %v1714 = vunpack.c.h.b16 %v1630
    %v1715 = vunpack.c.l.b16 %v1631
    %v1716 = vunpack.c.h.b16 %v1631
    %v1717 = vunpack.c.l.b16 %v1632
    %v1718 = vunpack.c.h.b16 %v1632
    %v1719 = vunpack.c.l.b16 %v1633
    %v1720 = vunpack.c.h.b16 %v1633
    %v1721 = vunpack.c.l.b16 %v1634
    %v1722 = vunpack.c.h.b16 %v1634
    %v1723 = vunpack.c.l.b16 %v1635
    %v1724 = vunpack.c.h.b16 %v1635
    %v1725 = vunpack.c.l.b16 %v1636
    %v1726 = vunpack.c.h.b16 %v1636
    %v1727 = vunpack.c.l.b16 %v1637
    %v1728 = vunpack.c.h.b16 %v1637
    %v1729 = vunpack.c.l.b16 %v1638
    %v1730 = vunpack.c.h.b16 %v1638
    %v1731 = vunpack.c.l.b16 %v1639
    %v1732 = vunpack.c.h.b16 %v1639
    %v1733 = vunpack.c.l.b16 %v1640
    %v1734 = vunpack.c.h.b16 %v1640
    %v1735 = vunpack.c.l.b16 %v1641
    %v1736 = vunpack.c.h.b16 %v1641
    %v1737 = vunpack.c.l.b16 %v1642
    %v1738 = vunpack.c.h.b16 %v1642
    %v1739 = vunpack.c.l.b16 %v1643
    %v1740 = vunpack.c.h.b16 %v1643
    %v1741 = vunpack.c.l.b16 %v1644
    %v1742 = vunpack.c.h.b16 %v1644
    %v1743 = vunpack.c.l.b16 %v1645
    %v1744 = vunpack.c.h.b16 %v1645
    %v1745 = vunpack.c.l.b16 %v1646
    %v1746 = vunpack.c.h.b16 %v1646
    %v1747 = vunpack.c.l.b16 %v1647
    %v1748 = vunpack.c.h.b16 %v1647
    %v1749 = vunpack.c.l.b16 %v1648
    %v1750 = vunpack.c.h.b16 %v1648
    %v1751 = vpack.c.b16 %v1691, %v1687
    %v1752 = vpack.c.b16 %v1692, %v1688
    %v1753 = vpack.c.b16 %v1693, %v1689
    %v1754 = vpack.c.b16 %v1694, %v1690
    %v1755 = vpack.c.b16 %v1699, %v1695
    %v1756 = vpack.c.b16 %v1700, %v1696
    %v1757 = vpack.c.b16 %v1701, %v1697
    %v1758 = vpack.c.b16 %v1702, %v1698
    %v1759 = vpack.c.b16 %v1707, %v1703
    %v1760 = vpack.c.b16 %v1708, %v1704
    %v1761 = vpack.c.b16 %v1709, %v1705
    %v1762 = vpack.c.b16 %v1710, %v1706
    %v1763 = vpack.c.b16 %v1715, %v1711
    %v1764 = vpack.c.b16 %v1716, %v1712
    %v1765 = vpack.c.b16 %v1717, %v1713
    %v1766 = vpack.c.b16 %v1718, %v1714
    %v1767 = vpack.c.b16 %v1723, %v1719
    %v1768 = vpack.c.b16 %v1724, %v1720
    %v1769 = vpack.c.b16 %v1725, %v1721
    %v1770 = vpack.c.b16 %v1726, %v1722
    %v1771 = vpack.c.b16 %v1731, %v1727
    %v1772 = vpack.c.b16 %v1732, %v1728
    %v1773 = vpack.c.b16 %v1733, %v1729
    %v1774 = vpack.c.b16 %v1734, %v1730
    %v1775 = vpack.c.b16 %v1739, %v1735
    %v1776 = vpack.c.b16 %v1740, %v1736
    %v1777 = vpack.c.b16 %v1741, %v1737
    %v1778 = vpack.c.b16 %v1742, %v1738
    %v1779 = vpack.c.b16 %v1747, %v1743
    %v1780 = vpack.c.b16 %v1748, %v1744
    %v1781 = vpack.c.b16 %v1749, %v1745
    %v1782 = vpack.c.b16 %v1750, %v1746
    %1815 = vmatpush.bf16.msra.mxu0 %v1779
    %1816 = vmatpush.bf16.msra.mxu0 %v1775
    %1817 = vmatpush.bf16.msra.mxu0 %v1771
    %1818 = vmatpush.bf16.msra.mxu0 %v1767
    %1819 = vmatpush.bf16.msra.mxu0 %v1763
    %1820 = vmatpush.bf16.msra.mxu0 %v1759
    %1821 = vmatpush.bf16.msra.mxu0 %v1755
    %1822 = vmatpush.bf16.msra.mxu0 %v1751
    %1823 = vmatmul.bf16.gmra.mxu0 %v1653
    %v1824 = vpop.f32.mrf.mxu0
    %v1825 = vadd.f32 0.0, %v1824
    %v1826 = vpop.f32.mrf.mxu0
    %v1827 = vadd.f32 0.0, %v1826
    %1828 = vdwg.mxu0
    %1829 = vmatpush.bf16.msra.mxu0 %v1780
    %1830 = vmatpush.bf16.msra.mxu0 %v1776
    %1831 = vmatpush.bf16.msra.mxu0 %v1772
    %1832 = vmatpush.bf16.msra.mxu0 %v1768
    %1833 = vmatpush.bf16.msra.mxu0 %v1764
    %1834 = vmatpush.bf16.msra.mxu0 %v1760
    %1835 = vmatpush.bf16.msra.mxu0 %v1756
    %1836 = vmatpush.bf16.msra.mxu0 %v1752
    %1837 = vmatmul.bf16.gmra.mxu0 %v1653
    %v1838 = vpop.f32.mrf.mxu0
    %v1839 = vadd.f32 0.0, %v1838
    %v1840 = vpop.f32.mrf.mxu0
    %v1841 = vadd.f32 0.0, %v1840
    %1842 = vdwg.mxu0
    %1843 = vmatpush.bf16.msra.mxu0 %v1781
    %1844 = vmatpush.bf16.msra.mxu0 %v1777
    %1845 = vmatpush.bf16.msra.mxu0 %v1773
    %1846 = vmatpush.bf16.msra.mxu0 %v1769
    %1847 = vmatpush.bf16.msra.mxu0 %v1765
    %1848 = vmatpush.bf16.msra.mxu0 %v1761
    %1849 = vmatpush.bf16.msra.mxu0 %v1757
    %1850 = vmatpush.bf16.msra.mxu0 %v1753
    %1851 = vmatmul.bf16.gmra.mxu0 %v1653
    %v1852 = vpop.f32.mrf.mxu0
    %v1853 = vadd.f32 0.0, %v1852
    %v1854 = vpop.f32.mrf.mxu0
    %v1855 = vadd.f32 0.0, %v1854
    %1856 = vdwg.mxu0
    %1857 = vmatpush.bf16.msra.mxu0 %v1782
    %1858 = vmatpush.bf16.msra.mxu0 %v1778
    %1859 = vmatpush.bf16.msra.mxu0 %v1774
    %1860 = vmatpush.bf16.msra.mxu0 %v1770
    %1861 = vmatpush.bf16.msra.mxu0 %v1766
    %1862 = vmatpush.bf16.msra.mxu0 %v1762
    %1863 = vmatpush.bf16.msra.mxu0 %v1758
    %1864 = vmatpush.bf16.msra.mxu0 %v1754
    %1865 = vmatmul.bf16.gmra.mxu0 %v1653
    %v1866 = vpop.f32.mrf.mxu0
    %v1867 = vadd.f32 0.0, %v1866
    %v1868 = vpop.f32.mrf.mxu0
    %v1869 = vadd.f32 0.0, %v1868
    %1870 = vdwg.mxu0
    %v1871 = vadd.f32 %v1609, %v1825
    %v1872 = vadd.f32 %v1610, %v1839
    %v1873 = vadd.f32 %v1611, %v1853
    %v1874 = vadd.f32 %v1612, %v1867
    %v1875 = vadd.f32 %v1613, %v1827
    %v1876 = vadd.f32 %v1614, %v1841
    %v1877 = vadd.f32 %v1615, %v1855
    %v1878 = vadd.f32 %v1616, %v1869
    %v1879 = vxor.u32 %v1871, 2147483648
    %v1880 = vxor.u32 %v1872, 2147483648
    %v1881 = vxor.u32 %v1873, 2147483648
    %v1882 = vxor.u32 %v1875, 2147483648
    %v1883 = vxor.u32 %v1876, 2147483648
    %v1884 = vxor.u32 %v1877, 2147483648
    %v1885 = vmul.f32 %v1879, 1.442695
    %v1886 = vpow.pop %v1885
    %v1887 = vmul.f32 %v1880, 1.442695
    %v1888 = vpow.pop %v1887
    %v1889 = vmul.f32 %v1881, 1.442695
    %v1890 = vpow.pop %v1889
    %v1891 = vmul.f32 %v1882, 1.442695
    %v1892 = vpow.pop %v1891
    %v1893 = vmul.f32 %v1883, 1.442695
    %v1894 = vpow.pop %v1893
    %v1895 = vmul.f32 %v1884, 1.442695
    %v1896 = vpow.pop %v1895
    %v1897 = vadd.f32 %v1886, 1.0
    %v1898 = vadd.f32 %v1888, 1.0
    %v1899 = vadd.f32 %v1890, 1.0
    %v1900 = vadd.f32 %v1892, 1.0
    %v1901 = vadd.f32 %v1894, 1.0
    %v1902 = vadd.f32 %v1896, 1.0
    %v1903 = vrcp.pop %v1897
    %v1904 = vmul.f32 %v1897, %v1903
    %v1905 = vsub.f32 1.0, %v1904
    %v1906 = vmul.f32 %v1903, %v1905
    %v1907 = vadd.f32 %v1903, %v1906
    %vm1908 = vweird.f32 %v1897
    %vm1909 = vweird.f32 %v1903
    %vm1910 = vmor %vm1908, %vm1909
    %v1911 = vsel %vm1910, %v1903, %v1907
    %v1912 = vand.u32 2147483647, %v1897
    %vm1913 = vcmp.eq.f32.partialorder %v1912, 8.507059e+37
    %v1914 = vand.u32 %v1897, 2147483648
    %v1915 = vor.u32 1.1754944e-38, %v1914
    %v1916 = vsel %vm1913, %v1915, %v1911
    %v1917 = vmul.f32 1.0, %v1916
    %v1918 = vrcp.pop %v1898
    %v1919 = vmul.f32 %v1898, %v1918
    %v1920 = vsub.f32 1.0, %v1919
    %v1921 = vmul.f32 %v1918, %v1920
    %v1922 = vadd.f32 %v1918, %v1921
    %vm1923 = vweird.f32 %v1898
    %vm1924 = vweird.f32 %v1918
    %vm1925 = vmor %vm1923, %vm1924
    %v1926 = vsel %vm1925, %v1918, %v1922
    %v1927 = vand.u32 2147483647, %v1898
    %vm1928 = vcmp.eq.f32.partialorder %v1927, 8.507059e+37
    %v1929 = vand.u32 %v1898, 2147483648
    %v1930 = vor.u32 1.1754944e-38, %v1929
    %v1931 = vsel %vm1928, %v1930, %v1926
    %v1932 = vmul.f32 1.0, %v1931
    %v1933 = vrcp.pop %v1899
    %v1934 = vmul.f32 %v1899, %v1933
    %v1935 = vsub.f32 1.0, %v1934
    %v1936 = vmul.f32 %v1933, %v1935
    %v1937 = vadd.f32 %v1933, %v1936
    %vm1938 = vweird.f32 %v1899
    %vm1939 = vweird.f32 %v1933
    %vm1940 = vmor %vm1938, %vm1939
    %v1941 = vsel %vm1940, %v1933, %v1937
    %v1942 = vand.u32 2147483647, %v1899
    %vm1943 = vcmp.eq.f32.partialorder %v1942, 8.507059e+37
    %v1944 = vand.u32 %v1899, 2147483648
    %v1945 = vor.u32 1.1754944e-38, %v1944
    %v1946 = vsel %vm1943, %v1945, %v1941
    %v1947 = vmul.f32 1.0, %v1946
    %v1948 = vrcp.pop %v1900
    %v1949 = vmul.f32 %v1900, %v1948
    %v1950 = vsub.f32 1.0, %v1949
    %v1951 = vmul.f32 %v1948, %v1950
    %v1952 = vadd.f32 %v1948, %v1951
    %vm1953 = vweird.f32 %v1900
    %vm1954 = vweird.f32 %v1948
    %vm1955 = vmor %vm1953, %vm1954
    %v1956 = vsel %vm1955, %v1948, %v1952
    %v1957 = vand.u32 2147483647, %v1900
    %vm1958 = vcmp.eq.f32.partialorder %v1957, 8.507059e+37
    %v1959 = vand.u32 %v1900, 2147483648
    %v1960 = vor.u32 1.1754944e-38, %v1959
    %v1961 = vsel %vm1958, %v1960, %v1956
    %v1962 = vmul.f32 1.0, %v1961
    %v1963 = vrcp.pop %v1901
    %v1964 = vmul.f32 %v1901, %v1963
    %v1965 = vsub.f32 1.0, %v1964
    %v1966 = vmul.f32 %v1963, %v1965
    %v1967 = vadd.f32 %v1963, %v1966
    %vm1968 = vweird.f32 %v1901
    %vm1969 = vweird.f32 %v1963
    %vm1970 = vmor %vm1968, %vm1969
    %v1971 = vsel %vm1970, %v1963, %v1967
    %v1972 = vand.u32 2147483647, %v1901
    %vm1973 = vcmp.eq.f32.partialorder %v1972, 8.507059e+37
    %v1974 = vand.u32 %v1901, 2147483648
    %v1975 = vor.u32 1.1754944e-38, %v1974
    %v1976 = vsel %vm1973, %v1975, %v1971
    %v1977 = vmul.f32 1.0, %v1976
    %v1978 = vrcp.pop %v1902
    %v1979 = vmul.f32 %v1902, %v1978
    %v1980 = vsub.f32 1.0, %v1979
    %v1981 = vmul.f32 %v1978, %v1980
    %v1982 = vadd.f32 %v1978, %v1981
    %vm1983 = vweird.f32 %v1902
    %vm1984 = vweird.f32 %v1978
    %vm1985 = vmor %vm1983, %vm1984
    %v1986 = vsel %vm1985, %v1978, %v1982
    %v1987 = vand.u32 2147483647, %v1902
    %vm1988 = vcmp.eq.f32.partialorder %v1987, 8.507059e+37
    %v1989 = vand.u32 %v1902, 2147483648
    %v1990 = vor.u32 1.1754944e-38, %v1989
    %v1991 = vsel %vm1988, %v1990, %v1986
    %v1992 = vmul.f32 1.0, %v1991
    %v1993 = vtanh.pop %v1874
    %v1994 = vtanh.pop %v1878
    %v1995 = vmul.f32 %v1932, %v1595
    %v1996 = vmul.f32 %v1977, %v1596
    %v1997 = vmul.f32 %v1917, %v1993
    %v1998 = vmul.f32 %v1962, %v1994
    %v1999 = vadd.f32 %v1995, %v1997
    %v2000 = vadd.f32 %v1996, %v1998
    %v2001 = vtanh.pop %v1999
    %v2002 = vtanh.pop %v2000
    %v2003 = vmul.f32 %v1947, %v2001
    %v2004 = vmul.f32 %v1992, %v2002
    %v2005 = vpack.c.bf16 %v2003, %v2003
    %v2006 = vpack.c.bf16 %v2004, %v2004
    %s2007 = scalar_lea.vmem [#allocation3], 16
    %2008 = vst [vmem:[%s2007] sm:$0xf] %v2005
    %2009 = vst [vmem:[%s2007 + $0x4] sm:$0xf] %v2006
    %s2010 = smul.u32 6, 4
    %s2011 = smul.addr %s2010, 8
    %s2012 = scalar_lea.vmem [#allocation2], %s2011
    %v2013 = vld [vmem:[%s2012] sm:$0xff]
    %v2014 = vld [vmem:[%s2012 + $0x8] sm:$0xff]
    %v2015 = vld [vmem:[%s2012 + $0x10] sm:$0xff]
    %v2016 = vld [vmem:[%s2012 + $0x18] sm:$0xff]
    %v2017 = vld [vmem:[%s2012 + $0x20] sm:$0xff]
    %v2018 = vld [vmem:[%s2012 + $0x28] sm:$0xff]
    %v2019 = vld [vmem:[%s2012 + $0x30] sm:$0xff]
    %v2020 = vld [vmem:[%s2012 + $0x38] sm:$0xff]
    %v2021 = vld [vmem:[%s5] sm:$0xff]
    %v2022 = vld [vmem:[%s5 + $0x8] sm:$0xff]
    %v2023 = vld [vmem:[%s5 + $0x10] sm:$0xff]
    %v2024 = vld [vmem:[%s5 + $0x18] sm:$0xff]
    %v2025 = vld [vmem:[%s5 + $0x20] sm:$0xff]
    %v2026 = vld [vmem:[%s5 + $0x28] sm:$0xff]
    %v2027 = vld [vmem:[%s5 + $0x30] sm:$0xff]
    %v2028 = vld [vmem:[%s5 + $0x38] sm:$0xff]
    %v2029 = vld [vmem:[%s5 + $0x40] sm:$0xff]
    %v2030 = vld [vmem:[%s5 + $0x48] sm:$0xff]
    %v2031 = vld [vmem:[%s5 + $0x50] sm:$0xff]
    %v2032 = vld [vmem:[%s5 + $0x58] sm:$0xff]
    %v2033 = vld [vmem:[%s5 + $0x60] sm:$0xff]
    %v2034 = vld [vmem:[%s5 + $0x68] sm:$0xff]
    %v2035 = vld [vmem:[%s5 + $0x70] sm:$0xff]
    %v2036 = vld [vmem:[%s5 + $0x78] sm:$0xff]
    %v2037 = vld [vmem:[%s5 + $0x80] sm:$0xff]
    %v2038 = vld [vmem:[%s5 + $0x88] sm:$0xff]
    %v2039 = vld [vmem:[%s5 + $0x90] sm:$0xff]
    %v2040 = vld [vmem:[%s5 + $0x98] sm:$0xff]
    %v2041 = vld [vmem:[%s5 + $0xa0] sm:$0xff]
    %v2042 = vld [vmem:[%s5 + $0xa8] sm:$0xff]
    %v2043 = vld [vmem:[%s5 + $0xb0] sm:$0xff]
    %v2044 = vld [vmem:[%s5 + $0xb8] sm:$0xff]
    %v2045 = vld [vmem:[%s5 + $0xc0] sm:$0xff]
    %v2046 = vld [vmem:[%s5 + $0xc8] sm:$0xff]
    %v2047 = vld [vmem:[%s5 + $0xd0] sm:$0xff]
    %v2048 = vld [vmem:[%s5 + $0xd8] sm:$0xff]
    %v2049 = vld [vmem:[%s5 + $0xe0] sm:$0xff]
    %v2050 = vld [vmem:[%s5 + $0xe8] sm:$0xff]
    %v2051 = vld [vmem:[%s5 + $0xf0] sm:$0xff]
    %v2052 = vld [vmem:[%s5 + $0xf8] sm:$0xff]
    %v2055 = vunpack.c.l.b16 %v2005
    %v2056 = vunpack.c.l.b16 %v2006
    %v2057 = vpack.c.b16 %v2056, %v2055
    %v2091 = vunpack.c.l.b16 %v2021
    %v2092 = vunpack.c.h.b16 %v2021
    %v2093 = vunpack.c.l.b16 %v2022
    %v2094 = vunpack.c.h.b16 %v2022
    %v2095 = vunpack.c.l.b16 %v2023
    %v2096 = vunpack.c.h.b16 %v2023
    %v2097 = vunpack.c.l.b16 %v2024
    %v2098 = vunpack.c.h.b16 %v2024
    %v2099 = vunpack.c.l.b16 %v2025
    %v2100 = vunpack.c.h.b16 %v2025
    %v2101 = vunpack.c.l.b16 %v2026
    %v2102 = vunpack.c.h.b16 %v2026
    %v2103 = vunpack.c.l.b16 %v2027
    %v2104 = vunpack.c.h.b16 %v2027
    %v2105 = vunpack.c.l.b16 %v2028
    %v2106 = vunpack.c.h.b16 %v2028
    %v2107 = vunpack.c.l.b16 %v2029
    %v2108 = vunpack.c.h.b16 %v2029
    %v2109 = vunpack.c.l.b16 %v2030
    %v2110 = vunpack.c.h.b16 %v2030
    %v2111 = vunpack.c.l.b16 %v2031
    %v2112 = vunpack.c.h.b16 %v2031
    %v2113 = vunpack.c.l.b16 %v2032
    %v2114 = vunpack.c.h.b16 %v2032
    %v2115 = vunpack.c.l.b16 %v2033
    %v2116 = vunpack.c.h.b16 %v2033
    %v2117 = vunpack.c.l.b16 %v2034
    %v2118 = vunpack.c.h.b16 %v2034
    %v2119 = vunpack.c.l.b16 %v2035
    %v2120 = vunpack.c.h.b16 %v2035
    %v2121 = vunpack.c.l.b16 %v2036
    %v2122 = vunpack.c.h.b16 %v2036
    %v2123 = vunpack.c.l.b16 %v2037
    %v2124 = vunpack.c.h.b16 %v2037
    %v2125 = vunpack.c.l.b16 %v2038
    %v2126 = vunpack.c.h.b16 %v2038
    %v2127 = vunpack.c.l.b16 %v2039
    %v2128 = vunpack.c.h.b16 %v2039
    %v2129 = vunpack.c.l.b16 %v2040
    %v2130 = vunpack.c.h.b16 %v2040
    %v2131 = vunpack.c.l.b16 %v2041
    %v2132 = vunpack.c.h.b16 %v2041
    %v2133 = vunpack.c.l.b16 %v2042
    %v2134 = vunpack.c.h.b16 %v2042
    %v2135 = vunpack.c.l.b16 %v2043
    %v2136 = vunpack.c.h.b16 %v2043
    %v2137 = vunpack.c.l.b16 %v2044
    %v2138 = vunpack.c.h.b16 %v2044
    %v2139 = vunpack.c.l.b16 %v2045
    %v2140 = vunpack.c.h.b16 %v2045
    %v2141 = vunpack.c.l.b16 %v2046
    %v2142 = vunpack.c.h.b16 %v2046
    %v2143 = vunpack.c.l.b16 %v2047
    %v2144 = vunpack.c.h.b16 %v2047
    %v2145 = vunpack.c.l.b16 %v2048
    %v2146 = vunpack.c.h.b16 %v2048
    %v2147 = vunpack.c.l.b16 %v2049
    %v2148 = vunpack.c.h.b16 %v2049
    %v2149 = vunpack.c.l.b16 %v2050
    %v2150 = vunpack.c.h.b16 %v2050
    %v2151 = vunpack.c.l.b16 %v2051
    %v2152 = vunpack.c.h.b16 %v2051
    %v2153 = vunpack.c.l.b16 %v2052
    %v2154 = vunpack.c.h.b16 %v2052
    %v2155 = vpack.c.b16 %v2095, %v2091
    %v2156 = vpack.c.b16 %v2096, %v2092
    %v2157 = vpack.c.b16 %v2097, %v2093
    %v2158 = vpack.c.b16 %v2098, %v2094
    %v2159 = vpack.c.b16 %v2103, %v2099
    %v2160 = vpack.c.b16 %v2104, %v2100
    %v2161 = vpack.c.b16 %v2105, %v2101
    %v2162 = vpack.c.b16 %v2106, %v2102
    %v2163 = vpack.c.b16 %v2111, %v2107
    %v2164 = vpack.c.b16 %v2112, %v2108
    %v2165 = vpack.c.b16 %v2113, %v2109
    %v2166 = vpack.c.b16 %v2114, %v2110
    %v2167 = vpack.c.b16 %v2119, %v2115
    %v2168 = vpack.c.b16 %v2120, %v2116
    %v2169 = vpack.c.b16 %v2121, %v2117
    %v2170 = vpack.c.b16 %v2122, %v2118
    %v2171 = vpack.c.b16 %v2127, %v2123
    %v2172 = vpack.c.b16 %v2128, %v2124
    %v2173 = vpack.c.b16 %v2129, %v2125
    %v2174 = vpack.c.b16 %v2130, %v2126
    %v2175 = vpack.c.b16 %v2135, %v2131
    %v2176 = vpack.c.b16 %v2136, %v2132
    %v2177 = vpack.c.b16 %v2137, %v2133
    %v2178 = vpack.c.b16 %v2138, %v2134
    %v2179 = vpack.c.b16 %v2143, %v2139
    %v2180 = vpack.c.b16 %v2144, %v2140
    %v2181 = vpack.c.b16 %v2145, %v2141
    %v2182 = vpack.c.b16 %v2146, %v2142
    %v2183 = vpack.c.b16 %v2151, %v2147
    %v2184 = vpack.c.b16 %v2152, %v2148
    %v2185 = vpack.c.b16 %v2153, %v2149
    %v2186 = vpack.c.b16 %v2154, %v2150
    %2219 = vmatpush.bf16.msra.mxu0 %v2183
    %2220 = vmatpush.bf16.msra.mxu0 %v2179
    %2221 = vmatpush.bf16.msra.mxu0 %v2175
    %2222 = vmatpush.bf16.msra.mxu0 %v2171
    %2223 = vmatpush.bf16.msra.mxu0 %v2167
    %2224 = vmatpush.bf16.msra.mxu0 %v2163
    %2225 = vmatpush.bf16.msra.mxu0 %v2159
    %2226 = vmatpush.bf16.msra.mxu0 %v2155
    %2227 = vmatmul.bf16.gmra.mxu0 %v2057
    %v2228 = vpop.f32.mrf.mxu0
    %v2229 = vadd.f32 0.0, %v2228
    %v2230 = vpop.f32.mrf.mxu0
    %v2231 = vadd.f32 0.0, %v2230
    %2232 = vdwg.mxu0
    %2233 = vmatpush.bf16.msra.mxu0 %v2184
    %2234 = vmatpush.bf16.msra.mxu0 %v2180
    %2235 = vmatpush.bf16.msra.mxu0 %v2176
    %2236 = vmatpush.bf16.msra.mxu0 %v2172
    %2237 = vmatpush.bf16.msra.mxu0 %v2168
    %2238 = vmatpush.bf16.msra.mxu0 %v2164
    %2239 = vmatpush.bf16.msra.mxu0 %v2160
    %2240 = vmatpush.bf16.msra.mxu0 %v2156
    %2241 = vmatmul.bf16.gmra.mxu0 %v2057
    %v2242 = vpop.f32.mrf.mxu0
    %v2243 = vadd.f32 0.0, %v2242
    %v2244 = vpop.f32.mrf.mxu0
    %v2245 = vadd.f32 0.0, %v2244
    %2246 = vdwg.mxu0
    %2247 = vmatpush.bf16.msra.mxu0 %v2185
    %2248 = vmatpush.bf16.msra.mxu0 %v2181
    %2249 = vmatpush.bf16.msra.mxu0 %v2177
    %2250 = vmatpush.bf16.msra.mxu0 %v2173
    %2251 = vmatpush.bf16.msra.mxu0 %v2169
    %2252 = vmatpush.bf16.msra.mxu0 %v2165
    %2253 = vmatpush.bf16.msra.mxu0 %v2161
    %2254 = vmatpush.bf16.msra.mxu0 %v2157
    %2255 = vmatmul.bf16.gmra.mxu0 %v2057
    %v2256 = vpop.f32.mrf.mxu0
    %v2257 = vadd.f32 0.0, %v2256
    %v2258 = vpop.f32.mrf.mxu0
    %v2259 = vadd.f32 0.0, %v2258
    %2260 = vdwg.mxu0
    %2261 = vmatpush.bf16.msra.mxu0 %v2186
    %2262 = vmatpush.bf16.msra.mxu0 %v2182
    %2263 = vmatpush.bf16.msra.mxu0 %v2178
    %2264 = vmatpush.bf16.msra.mxu0 %v2174
    %2265 = vmatpush.bf16.msra.mxu0 %v2170
    %2266 = vmatpush.bf16.msra.mxu0 %v2166
    %2267 = vmatpush.bf16.msra.mxu0 %v2162
    %2268 = vmatpush.bf16.msra.mxu0 %v2158
    %2269 = vmatmul.bf16.gmra.mxu0 %v2057
    %v2270 = vpop.f32.mrf.mxu0
    %v2271 = vadd.f32 0.0, %v2270
    %v2272 = vpop.f32.mrf.mxu0
    %v2273 = vadd.f32 0.0, %v2272
    %2274 = vdwg.mxu0
    %v2275 = vadd.f32 %v2013, %v2229
    %v2276 = vadd.f32 %v2014, %v2243
    %v2277 = vadd.f32 %v2015, %v2257
    %v2278 = vadd.f32 %v2016, %v2271
    %v2279 = vadd.f32 %v2017, %v2231
    %v2280 = vadd.f32 %v2018, %v2245
    %v2281 = vadd.f32 %v2019, %v2259
    %v2282 = vadd.f32 %v2020, %v2273
    %v2283 = vxor.u32 %v2275, 2147483648
    %v2284 = vxor.u32 %v2276, 2147483648
    %v2285 = vxor.u32 %v2277, 2147483648
    %v2286 = vxor.u32 %v2279, 2147483648
    %v2287 = vxor.u32 %v2280, 2147483648
    %v2288 = vxor.u32 %v2281, 2147483648
    %v2289 = vmul.f32 %v2283, 1.442695
    %v2290 = vpow.pop %v2289
    %v2291 = vmul.f32 %v2284, 1.442695
    %v2292 = vpow.pop %v2291
    %v2293 = vmul.f32 %v2285, 1.442695
    %v2294 = vpow.pop %v2293
    %v2295 = vmul.f32 %v2286, 1.442695
    %v2296 = vpow.pop %v2295
    %v2297 = vmul.f32 %v2287, 1.442695
    %v2298 = vpow.pop %v2297
    %v2299 = vmul.f32 %v2288, 1.442695
    %v2300 = vpow.pop %v2299
    %v2301 = vadd.f32 %v2290, 1.0
    %v2302 = vadd.f32 %v2292, 1.0
    %v2303 = vadd.f32 %v2294, 1.0
    %v2304 = vadd.f32 %v2296, 1.0
    %v2305 = vadd.f32 %v2298, 1.0
    %v2306 = vadd.f32 %v2300, 1.0
    %v2307 = vrcp.pop %v2301
    %v2308 = vmul.f32 %v2301, %v2307
    %v2309 = vsub.f32 1.0, %v2308
    %v2310 = vmul.f32 %v2307, %v2309
    %v2311 = vadd.f32 %v2307, %v2310
    %vm2312 = vweird.f32 %v2301
    %vm2313 = vweird.f32 %v2307
    %vm2314 = vmor %vm2312, %vm2313
    %v2315 = vsel %vm2314, %v2307, %v2311
    %v2316 = vand.u32 2147483647, %v2301
    %vm2317 = vcmp.eq.f32.partialorder %v2316, 8.507059e+37
    %v2318 = vand.u32 %v2301, 2147483648
    %v2319 = vor.u32 1.1754944e-38, %v2318
    %v2320 = vsel %vm2317, %v2319, %v2315
    %v2321 = vmul.f32 1.0, %v2320
    %v2322 = vrcp.pop %v2302
    %v2323 = vmul.f32 %v2302, %v2322
    %v2324 = vsub.f32 1.0, %v2323
    %v2325 = vmul.f32 %v2322, %v2324
    %v2326 = vadd.f32 %v2322, %v2325
    %vm2327 = vweird.f32 %v2302
    %vm2328 = vweird.f32 %v2322
    %vm2329 = vmor %vm2327, %vm2328
    %v2330 = vsel %vm2329, %v2322, %v2326
    %v2331 = vand.u32 2147483647, %v2302
    %vm2332 = vcmp.eq.f32.partialorder %v2331, 8.507059e+37
    %v2333 = vand.u32 %v2302, 2147483648
    %v2334 = vor.u32 1.1754944e-38, %v2333
    %v2335 = vsel %vm2332, %v2334, %v2330
    %v2336 = vmul.f32 1.0, %v2335
    %v2337 = vrcp.pop %v2303
    %v2338 = vmul.f32 %v2303, %v2337
    %v2339 = vsub.f32 1.0, %v2338
    %v2340 = vmul.f32 %v2337, %v2339
    %v2341 = vadd.f32 %v2337, %v2340
    %vm2342 = vweird.f32 %v2303
    %vm2343 = vweird.f32 %v2337
    %vm2344 = vmor %vm2342, %vm2343
    %v2345 = vsel %vm2344, %v2337, %v2341
    %v2346 = vand.u32 2147483647, %v2303
    %vm2347 = vcmp.eq.f32.partialorder %v2346, 8.507059e+37
    %v2348 = vand.u32 %v2303, 2147483648
    %v2349 = vor.u32 1.1754944e-38, %v2348
    %v2350 = vsel %vm2347, %v2349, %v2345
    %v2351 = vmul.f32 1.0, %v2350
    %v2352 = vrcp.pop %v2304
    %v2353 = vmul.f32 %v2304, %v2352
    %v2354 = vsub.f32 1.0, %v2353
    %v2355 = vmul.f32 %v2352, %v2354
    %v2356 = vadd.f32 %v2352, %v2355
    %vm2357 = vweird.f32 %v2304
    %vm2358 = vweird.f32 %v2352
    %vm2359 = vmor %vm2357, %vm2358
    %v2360 = vsel %vm2359, %v2352, %v2356
    %v2361 = vand.u32 2147483647, %v2304
    %vm2362 = vcmp.eq.f32.partialorder %v2361, 8.507059e+37
    %v2363 = vand.u32 %v2304, 2147483648
    %v2364 = vor.u32 1.1754944e-38, %v2363
    %v2365 = vsel %vm2362, %v2364, %v2360
    %v2366 = vmul.f32 1.0, %v2365
    %v2367 = vrcp.pop %v2305
    %v2368 = vmul.f32 %v2305, %v2367
    %v2369 = vsub.f32 1.0, %v2368
    %v2370 = vmul.f32 %v2367, %v2369
    %v2371 = vadd.f32 %v2367, %v2370
    %vm2372 = vweird.f32 %v2305
    %vm2373 = vweird.f32 %v2367
    %vm2374 = vmor %vm2372, %vm2373
    %v2375 = vsel %vm2374, %v2367, %v2371
    %v2376 = vand.u32 2147483647, %v2305
    %vm2377 = vcmp.eq.f32.partialorder %v2376, 8.507059e+37
    %v2378 = vand.u32 %v2305, 2147483648
    %v2379 = vor.u32 1.1754944e-38, %v2378
    %v2380 = vsel %vm2377, %v2379, %v2375
    %v2381 = vmul.f32 1.0, %v2380
    %v2382 = vrcp.pop %v2306
    %v2383 = vmul.f32 %v2306, %v2382
    %v2384 = vsub.f32 1.0, %v2383
    %v2385 = vmul.f32 %v2382, %v2384
    %v2386 = vadd.f32 %v2382, %v2385
    %vm2387 = vweird.f32 %v2306
    %vm2388 = vweird.f32 %v2382
    %vm2389 = vmor %vm2387, %vm2388
    %v2390 = vsel %vm2389, %v2382, %v2386
    %v2391 = vand.u32 2147483647, %v2306
    %vm2392 = vcmp.eq.f32.partialorder %v2391, 8.507059e+37
    %v2393 = vand.u32 %v2306, 2147483648
    %v2394 = vor.u32 1.1754944e-38, %v2393
    %v2395 = vsel %vm2392, %v2394, %v2390
    %v2396 = vmul.f32 1.0, %v2395
    %v2397 = vtanh.pop %v2278
    %v2398 = vtanh.pop %v2282
    %v2399 = vmul.f32 %v2336, %v1999
    %v2400 = vmul.f32 %v2381, %v2000
    %v2401 = vmul.f32 %v2321, %v2397
    %v2402 = vmul.f32 %v2366, %v2398
    %v2403 = vadd.f32 %v2399, %v2401
    %v2404 = vadd.f32 %v2400, %v2402
    %v2405 = vtanh.pop %v2403
    %v2406 = vtanh.pop %v2404
    %v2407 = vmul.f32 %v2351, %v2405
    %v2408 = vmul.f32 %v2396, %v2406
    %v2409 = vpack.c.bf16 %v2407, %v2407
    %v2410 = vpack.c.bf16 %v2408, %v2408
    %s2411 = scalar_lea.vmem [#allocation3], 24
    %2412 = vst [vmem:[%s2411] sm:$0xf] %v2409
    %2413 = vst [vmem:[%s2411 + $0x4] sm:$0xf] %v2410
    %s2414 = smul.u32 8, 4
    %s2415 = smul.addr %s2414, 8
    %s2416 = scalar_lea.vmem [#allocation2], %s2415
    %v2417 = vld [vmem:[%s2416] sm:$0xff]
    %v2418 = vld [vmem:[%s2416 + $0x8] sm:$0xff]
    %v2419 = vld [vmem:[%s2416 + $0x10] sm:$0xff]
    %v2420 = vld [vmem:[%s2416 + $0x18] sm:$0xff]
    %v2421 = vld [vmem:[%s2416 + $0x20] sm:$0xff]
    %v2422 = vld [vmem:[%s2416 + $0x28] sm:$0xff]
    %v2423 = vld [vmem:[%s2416 + $0x30] sm:$0xff]
    %v2424 = vld [vmem:[%s2416 + $0x38] sm:$0xff]
    %v2425 = vld [vmem:[%s5] sm:$0xff]
    %v2426 = vld [vmem:[%s5 + $0x8] sm:$0xff]
    %v2427 = vld [vmem:[%s5 + $0x10] sm:$0xff]
    %v2428 = vld [vmem:[%s5 + $0x18] sm:$0xff]
    %v2429 = vld [vmem:[%s5 + $0x20] sm:$0xff]
    %v2430 = vld [vmem:[%s5 + $0x28] sm:$0xff]
    %v2431 = vld [vmem:[%s5 + $0x30] sm:$0xff]
    %v2432 = vld [vmem:[%s5 + $0x38] sm:$0xff]
    %v2433 = vld [vmem:[%s5 + $0x40] sm:$0xff]
    %v2434 = vld [vmem:[%s5 + $0x48] sm:$0xff]
    %v2435 = vld [vmem:[%s5 + $0x50] sm:$0xff]
    %v2436 = vld [vmem:[%s5 + $0x58] sm:$0xff]
    %v2437 = vld [vmem:[%s5 + $0x60] sm:$0xff]
    %v2438 = vld [vmem:[%s5 + $0x68] sm:$0xff]
    %v2439 = vld [vmem:[%s5 + $0x70] sm:$0xff]
    %v2440 = vld [vmem:[%s5 + $0x78] sm:$0xff]
    %v2441 = vld [vmem:[%s5 + $0x80] sm:$0xff]
    %v2442 = vld [vmem:[%s5 + $0x88] sm:$0xff]
    %v2443 = vld [vmem:[%s5 + $0x90] sm:$0xff]
    %v2444 = vld [vmem:[%s5 + $0x98] sm:$0xff]
    %v2445 = vld [vmem:[%s5 + $0xa0] sm:$0xff]
    %v2446 = vld [vmem:[%s5 + $0xa8] sm:$0xff]
    %v2447 = vld [vmem:[%s5 + $0xb0] sm:$0xff]
    %v2448 = vld [vmem:[%s5 + $0xb8] sm:$0xff]
    %v2449 = vld [vmem:[%s5 + $0xc0] sm:$0xff]
    %v2450 = vld [vmem:[%s5 + $0xc8] sm:$0xff]
    %v2451 = vld [vmem:[%s5 + $0xd0] sm:$0xff]
    %v2452 = vld [vmem:[%s5 + $0xd8] sm:$0xff]
    %v2453 = vld [vmem:[%s5 + $0xe0] sm:$0xff]
    %v2454 = vld [vmem:[%s5 + $0xe8] sm:$0xff]
    %v2455 = vld [vmem:[%s5 + $0xf0] sm:$0xff]
    %v2456 = vld [vmem:[%s5 + $0xf8] sm:$0xff]
    %v2459 = vunpack.c.l.b16 %v2409
    %v2460 = vunpack.c.l.b16 %v2410
    %v2461 = vpack.c.b16 %v2460, %v2459
    %v2495 = vunpack.c.l.b16 %v2425
    %v2496 = vunpack.c.h.b16 %v2425
    %v2497 = vunpack.c.l.b16 %v2426
    %v2498 = vunpack.c.h.b16 %v2426
    %v2499 = vunpack.c.l.b16 %v2427
    %v2500 = vunpack.c.h.b16 %v2427
    %v2501 = vunpack.c.l.b16 %v2428
    %v2502 = vunpack.c.h.b16 %v2428
    %v2503 = vunpack.c.l.b16 %v2429
    %v2504 = vunpack.c.h.b16 %v2429
    %v2505 = vunpack.c.l.b16 %v2430
    %v2506 = vunpack.c.h.b16 %v2430
    %v2507 = vunpack.c.l.b16 %v2431
    %v2508 = vunpack.c.h.b16 %v2431
    %v2509 = vunpack.c.l.b16 %v2432
    %v2510 = vunpack.c.h.b16 %v2432
    %v2511 = vunpack.c.l.b16 %v2433
    %v2512 = vunpack.c.h.b16 %v2433
    %v2513 = vunpack.c.l.b16 %v2434
    %v2514 = vunpack.c.h.b16 %v2434
    %v2515 = vunpack.c.l.b16 %v2435
    %v2516 = vunpack.c.h.b16 %v2435
    %v2517 = vunpack.c.l.b16 %v2436
    %v2518 = vunpack.c.h.b16 %v2436
    %v2519 = vunpack.c.l.b16 %v2437
    %v2520 = vunpack.c.h.b16 %v2437
    %v2521 = vunpack.c.l.b16 %v2438
    %v2522 = vunpack.c.h.b16 %v2438
    %v2523 = vunpack.c.l.b16 %v2439
    %v2524 = vunpack.c.h.b16 %v2439
    %v2525 = vunpack.c.l.b16 %v2440
    %v2526 = vunpack.c.h.b16 %v2440
    %v2527 = vunpack.c.l.b16 %v2441
    %v2528 = vunpack.c.h.b16 %v2441
    %v2529 = vunpack.c.l.b16 %v2442
    %v2530 = vunpack.c.h.b16 %v2442
    %v2531 = vunpack.c.l.b16 %v2443
    %v2532 = vunpack.c.h.b16 %v2443
    %v2533 = vunpack.c.l.b16 %v2444
    %v2534 = vunpack.c.h.b16 %v2444
    %v2535 = vunpack.c.l.b16 %v2445
    %v2536 = vunpack.c.h.b16 %v2445
    %v2537 = vunpack.c.l.b16 %v2446
    %v2538 = vunpack.c.h.b16 %v2446
    %v2539 = vunpack.c.l.b16 %v2447
    %v2540 = vunpack.c.h.b16 %v2447
    %v2541 = vunpack.c.l.b16 %v2448
    %v2542 = vunpack.c.h.b16 %v2448
    %v2543 = vunpack.c.l.b16 %v2449
    %v2544 = vunpack.c.h.b16 %v2449
    %v2545 = vunpack.c.l.b16 %v2450
    %v2546 = vunpack.c.h.b16 %v2450
    %v2547 = vunpack.c.l.b16 %v2451
    %v2548 = vunpack.c.h.b16 %v2451
    %v2549 = vunpack.c.l.b16 %v2452
    %v2550 = vunpack.c.h.b16 %v2452
    %v2551 = vunpack.c.l.b16 %v2453
    %v2552 = vunpack.c.h.b16 %v2453
    %v2553 = vunpack.c.l.b16 %v2454
    %v2554 = vunpack.c.h.b16 %v2454
    %v2555 = vunpack.c.l.b16 %v2455
    %v2556 = vunpack.c.h.b16 %v2455
    %v2557 = vunpack.c.l.b16 %v2456
    %v2558 = vunpack.c.h.b16 %v2456
    %v2559 = vpack.c.b16 %v2499, %v2495
    %v2560 = vpack.c.b16 %v2500, %v2496
    %v2561 = vpack.c.b16 %v2501, %v2497
    %v2562 = vpack.c.b16 %v2502, %v2498
    %v2563 = vpack.c.b16 %v2507, %v2503
    %v2564 = vpack.c.b16 %v2508, %v2504
    %v2565 = vpack.c.b16 %v2509, %v2505
    %v2566 = vpack.c.b16 %v2510, %v2506
    %v2567 = vpack.c.b16 %v2515, %v2511
    %v2568 = vpack.c.b16 %v2516, %v2512
    %v2569 = vpack.c.b16 %v2517, %v2513
    %v2570 = vpack.c.b16 %v2518, %v2514
    %v2571 = vpack.c.b16 %v2523, %v2519
    %v2572 = vpack.c.b16 %v2524, %v2520
    %v2573 = vpack.c.b16 %v2525, %v2521
    %v2574 = vpack.c.b16 %v2526, %v2522
    %v2575 = vpack.c.b16 %v2531, %v2527
    %v2576 = vpack.c.b16 %v2532, %v2528
    %v2577 = vpack.c.b16 %v2533, %v2529
    %v2578 = vpack.c.b16 %v2534, %v2530
    %v2579 = vpack.c.b16 %v2539, %v2535
    %v2580 = vpack.c.b16 %v2540, %v2536
    %v2581 = vpack.c.b16 %v2541, %v2537
    %v2582 = vpack.c.b16 %v2542, %v2538
    %v2583 = vpack.c.b16 %v2547, %v2543
    %v2584 = vpack.c.b16 %v2548, %v2544
    %v2585 = vpack.c.b16 %v2549, %v2545
    %v2586 = vpack.c.b16 %v2550, %v2546
    %v2587 = vpack.c.b16 %v2555, %v2551
    %v2588 = vpack.c.b16 %v2556, %v2552
    %v2589 = vpack.c.b16 %v2557, %v2553
    %v2590 = vpack.c.b16 %v2558, %v2554
    %2623 = vmatpush.bf16.msra.mxu0 %v2587
    %2624 = vmatpush.bf16.msra.mxu0 %v2583
    %2625 = vmatpush.bf16.msra.mxu0 %v2579
    %2626 = vmatpush.bf16.msra.mxu0 %v2575
    %2627 = vmatpush.bf16.msra.mxu0 %v2571
    %2628 = vmatpush.bf16.msra.mxu0 %v2567
    %2629 = vmatpush.bf16.msra.mxu0 %v2563
    %2630 = vmatpush.bf16.msra.mxu0 %v2559
    %2631 = vmatmul.bf16.gmra.mxu0 %v2461
    %v2632 = vpop.f32.mrf.mxu0
    %v2633 = vadd.f32 0.0, %v2632
    %v2634 = vpop.f32.mrf.mxu0
    %v2635 = vadd.f32 0.0, %v2634
    %2636 = vdwg.mxu0
    %2637 = vmatpush.bf16.msra.mxu0 %v2588
    %2638 = vmatpush.bf16.msra.mxu0 %v2584
    %2639 = vmatpush.bf16.msra.mxu0 %v2580
    %2640 = vmatpush.bf16.msra.mxu0 %v2576
    %2641 = vmatpush.bf16.msra.mxu0 %v2572
    %2642 = vmatpush.bf16.msra.mxu0 %v2568
    %2643 = vmatpush.bf16.msra.mxu0 %v2564
    %2644 = vmatpush.bf16.msra.mxu0 %v2560
    %2645 = vmatmul.bf16.gmra.mxu0 %v2461
    %v2646 = vpop.f32.mrf.mxu0
    %v2647 = vadd.f32 0.0, %v2646
    %v2648 = vpop.f32.mrf.mxu0
    %v2649 = vadd.f32 0.0, %v2648
    %2650 = vdwg.mxu0
    %2651 = vmatpush.bf16.msra.mxu0 %v2589
    %2652 = vmatpush.bf16.msra.mxu0 %v2585
    %2653 = vmatpush.bf16.msra.mxu0 %v2581
    %2654 = vmatpush.bf16.msra.mxu0 %v2577
    %2655 = vmatpush.bf16.msra.mxu0 %v2573
    %2656 = vmatpush.bf16.msra.mxu0 %v2569
    %2657 = vmatpush.bf16.msra.mxu0 %v2565
    %2658 = vmatpush.bf16.msra.mxu0 %v2561
    %2659 = vmatmul.bf16.gmra.mxu0 %v2461
    %v2660 = vpop.f32.mrf.mxu0
    %v2661 = vadd.f32 0.0, %v2660
    %v2662 = vpop.f32.mrf.mxu0
    %v2663 = vadd.f32 0.0, %v2662
    %2664 = vdwg.mxu0
    %2665 = vmatpush.bf16.msra.mxu0 %v2590
    %2666 = vmatpush.bf16.msra.mxu0 %v2586
    %2667 = vmatpush.bf16.msra.mxu0 %v2582
    %2668 = vmatpush.bf16.msra.mxu0 %v2578
    %2669 = vmatpush.bf16.msra.mxu0 %v2574
    %2670 = vmatpush.bf16.msra.mxu0 %v2570
    %2671 = vmatpush.bf16.msra.mxu0 %v2566
    %2672 = vmatpush.bf16.msra.mxu0 %v2562
    %2673 = vmatmul.bf16.gmra.mxu0 %v2461
    %v2674 = vpop.f32.mrf.mxu0
    %v2675 = vadd.f32 0.0, %v2674
    %v2676 = vpop.f32.mrf.mxu0
    %v2677 = vadd.f32 0.0, %v2676
    %2678 = vdwg.mxu0
    %v2679 = vadd.f32 %v2417, %v2633
    %v2680 = vadd.f32 %v2418, %v2647
    %v2681 = vadd.f32 %v2419, %v2661
    %v2682 = vadd.f32 %v2420, %v2675
    %v2683 = vadd.f32 %v2421, %v2635
    %v2684 = vadd.f32 %v2422, %v2649
    %v2685 = vadd.f32 %v2423, %v2663
    %v2686 = vadd.f32 %v2424, %v2677
    %v2687 = vxor.u32 %v2679, 2147483648
    %v2688 = vxor.u32 %v2680, 2147483648
    %v2689 = vxor.u32 %v2681, 2147483648
    %v2690 = vxor.u32 %v2683, 2147483648
    %v2691 = vxor.u32 %v2684, 2147483648
    %v2692 = vxor.u32 %v2685, 2147483648
    %v2693 = vmul.f32 %v2687, 1.442695
    %v2694 = vpow.pop %v2693
    %v2695 = vmul.f32 %v2688, 1.442695
    %v2696 = vpow.pop %v2695
    %v2697 = vmul.f32 %v2689, 1.442695
    %v2698 = vpow.pop %v2697
    %v2699 = vmul.f32 %v2690, 1.442695
    %v2700 = vpow.pop %v2699
    %v2701 = vmul.f32 %v2691, 1.442695
    %v2702 = vpow.pop %v2701
    %v2703 = vmul.f32 %v2692, 1.442695
    %v2704 = vpow.pop %v2703
    %v2705 = vadd.f32 %v2694, 1.0
    %v2706 = vadd.f32 %v2696, 1.0
    %v2707 = vadd.f32 %v2698, 1.0
    %v2708 = vadd.f32 %v2700, 1.0
    %v2709 = vadd.f32 %v2702, 1.0
    %v2710 = vadd.f32 %v2704, 1.0
    %v2711 = vrcp.pop %v2705
    %v2712 = vmul.f32 %v2705, %v2711
    %v2713 = vsub.f32 1.0, %v2712
    %v2714 = vmul.f32 %v2711, %v2713
    %v2715 = vadd.f32 %v2711, %v2714
    %vm2716 = vweird.f32 %v2705
    %vm2717 = vweird.f32 %v2711
    %vm2718 = vmor %vm2716, %vm2717
    %v2719 = vsel %vm2718, %v2711, %v2715
    %v2720 = vand.u32 2147483647, %v2705
    %vm2721 = vcmp.eq.f32.partialorder %v2720, 8.507059e+37
    %v2722 = vand.u32 %v2705, 2147483648
    %v2723 = vor.u32 1.1754944e-38, %v2722
    %v2724 = vsel %vm2721, %v2723, %v2719
    %v2725 = vmul.f32 1.0, %v2724
    %v2726 = vrcp.pop %v2706
    %v2727 = vmul.f32 %v2706, %v2726
    %v2728 = vsub.f32 1.0, %v2727
    %v2729 = vmul.f32 %v2726, %v2728
    %v2730 = vadd.f32 %v2726, %v2729
    %vm2731 = vweird.f32 %v2706
    %vm2732 = vweird.f32 %v2726
    %vm2733 = vmor %vm2731, %vm2732
    %v2734 = vsel %vm2733, %v2726, %v2730
    %v2735 = vand.u32 2147483647, %v2706
    %vm2736 = vcmp.eq.f32.partialorder %v2735, 8.507059e+37
    %v2737 = vand.u32 %v2706, 2147483648
    %v2738 = vor.u32 1.1754944e-38, %v2737
    %v2739 = vsel %vm2736, %v2738, %v2734
    %v2740 = vmul.f32 1.0, %v2739
    %v2741 = vrcp.pop %v2707
    %v2742 = vmul.f32 %v2707, %v2741
    %v2743 = vsub.f32 1.0, %v2742
    %v2744 = vmul.f32 %v2741, %v2743
    %v2745 = vadd.f32 %v2741, %v2744
    %vm2746 = vweird.f32 %v2707
    %vm2747 = vweird.f32 %v2741
    %vm2748 = vmor %vm2746, %vm2747
    %v2749 = vsel %vm2748, %v2741, %v2745
    %v2750 = vand.u32 2147483647, %v2707
    %vm2751 = vcmp.eq.f32.partialorder %v2750, 8.507059e+37
    %v2752 = vand.u32 %v2707, 2147483648
    %v2753 = vor.u32 1.1754944e-38, %v2752
    %v2754 = vsel %vm2751, %v2753, %v2749
    %v2755 = vmul.f32 1.0, %v2754
    %v2756 = vrcp.pop %v2708
    %v2757 = vmul.f32 %v2708, %v2756
    %v2758 = vsub.f32 1.0, %v2757
    %v2759 = vmul.f32 %v2756, %v2758
    %v2760 = vadd.f32 %v2756, %v2759
    %vm2761 = vweird.f32 %v2708
    %vm2762 = vweird.f32 %v2756
    %vm2763 = vmor %vm2761, %vm2762
    %v2764 = vsel %vm2763, %v2756, %v2760
    %v2765 = vand.u32 2147483647, %v2708
    %vm2766 = vcmp.eq.f32.partialorder %v2765, 8.507059e+37
    %v2767 = vand.u32 %v2708, 2147483648
    %v2768 = vor.u32 1.1754944e-38, %v2767
    %v2769 = vsel %vm2766, %v2768, %v2764
    %v2770 = vmul.f32 1.0, %v2769
    %v2771 = vrcp.pop %v2709
    %v2772 = vmul.f32 %v2709, %v2771
    %v2773 = vsub.f32 1.0, %v2772
    %v2774 = vmul.f32 %v2771, %v2773
    %v2775 = vadd.f32 %v2771, %v2774
    %vm2776 = vweird.f32 %v2709
    %vm2777 = vweird.f32 %v2771
    %vm2778 = vmor %vm2776, %vm2777
    %v2779 = vsel %vm2778, %v2771, %v2775
    %v2780 = vand.u32 2147483647, %v2709
    %vm2781 = vcmp.eq.f32.partialorder %v2780, 8.507059e+37
    %v2782 = vand.u32 %v2709, 2147483648
    %v2783 = vor.u32 1.1754944e-38, %v2782
    %v2784 = vsel %vm2781, %v2783, %v2779
    %v2785 = vmul.f32 1.0, %v2784
    %v2786 = vrcp.pop %v2710
    %v2787 = vmul.f32 %v2710, %v2786
    %v2788 = vsub.f32 1.0, %v2787
    %v2789 = vmul.f32 %v2786, %v2788
    %v2790 = vadd.f32 %v2786, %v2789
    %vm2791 = vweird.f32 %v2710
    %vm2792 = vweird.f32 %v2786
    %vm2793 = vmor %vm2791, %vm2792
    %v2794 = vsel %vm2793, %v2786, %v2790
    %v2795 = vand.u32 2147483647, %v2710
    %vm2796 = vcmp.eq.f32.partialorder %v2795, 8.507059e+37
    %v2797 = vand.u32 %v2710, 2147483648
    %v2798 = vor.u32 1.1754944e-38, %v2797
    %v2799 = vsel %vm2796, %v2798, %v2794
    %v2800 = vmul.f32 1.0, %v2799
    %v2801 = vtanh.pop %v2682
    %v2802 = vtanh.pop %v2686
    %v2803 = vmul.f32 %v2740, %v2403
    %v2804 = vmul.f32 %v2785, %v2404
    %v2805 = vmul.f32 %v2725, %v2801
    %v2806 = vmul.f32 %v2770, %v2802
    %v2807 = vadd.f32 %v2803, %v2805
    %v2808 = vadd.f32 %v2804, %v2806
    %v2809 = vtanh.pop %v2807
    %v2810 = vtanh.pop %v2808
    %v2811 = vmul.f32 %v2755, %v2809
    %v2812 = vmul.f32 %v2800, %v2810
    %v2813 = vpack.c.bf16 %v2811, %v2811
    %v2814 = vpack.c.bf16 %v2812, %v2812
    %s2815 = scalar_lea.vmem [#allocation3], 32
    %2816 = vst [vmem:[%s2815] sm:$0xf] %v2813
    %2817 = vst [vmem:[%s2815 + $0x4] sm:$0xf] %v2814
    %s2818 = smul.u32 10, 4
    %s2819 = smul.addr %s2818, 8
    %s2820 = scalar_lea.vmem [#allocation2], %s2819
    %v2821 = vld [vmem:[%s2820] sm:$0xff]
    %v2822 = vld [vmem:[%s2820 + $0x8] sm:$0xff]
    %v2823 = vld [vmem:[%s2820 + $0x10] sm:$0xff]
    %v2824 = vld [vmem:[%s2820 + $0x18] sm:$0xff]
    %v2825 = vld [vmem:[%s2820 + $0x20] sm:$0xff]
    %v2826 = vld [vmem:[%s2820 + $0x28] sm:$0xff]
    %v2827 = vld [vmem:[%s2820 + $0x30] sm:$0xff]
    %v2828 = vld [vmem:[%s2820 + $0x38] sm:$0xff]
    %v2829 = vld [vmem:[%s5] sm:$0xff]
    %v2830 = vld [vmem:[%s5 + $0x8] sm:$0xff]
    %v2831 = vld [vmem:[%s5 + $0x10] sm:$0xff]
    %v2832 = vld [vmem:[%s5 + $0x18] sm:$0xff]
    %v2833 = vld [vmem:[%s5 + $0x20] sm:$0xff]
    %v2834 = vld [vmem:[%s5 + $0x28] sm:$0xff]
    %v2835 = vld [vmem:[%s5 + $0x30] sm:$0xff]
    %v2836 = vld [vmem:[%s5 + $0x38] sm:$0xff]
    %v2837 = vld [vmem:[%s5 + $0x40] sm:$0xff]
    %v2838 = vld [vmem:[%s5 + $0x48] sm:$0xff]
    %v2839 = vld [vmem:[%s5 + $0x50] sm:$0xff]
    %v2840 = vld [vmem:[%s5 + $0x58] sm:$0xff]
    %v2841 = vld [vmem:[%s5 + $0x60] sm:$0xff]
    %v2842 = vld [vmem:[%s5 + $0x68] sm:$0xff]
    %v2843 = vld [vmem:[%s5 + $0x70] sm:$0xff]
    %v2844 = vld [vmem:[%s5 + $0x78] sm:$0xff]
    %v2845 = vld [vmem:[%s5 + $0x80] sm:$0xff]
    %v2846 = vld [vmem:[%s5 + $0x88] sm:$0xff]
    %v2847 = vld [vmem:[%s5 + $0x90] sm:$0xff]
    %v2848 = vld [vmem:[%s5 + $0x98] sm:$0xff]
    %v2849 = vld [vmem:[%s5 + $0xa0] sm:$0xff]
    %v2850 = vld [vmem:[%s5 + $0xa8] sm:$0xff]
    %v2851 = vld [vmem:[%s5 + $0xb0] sm:$0xff]
    %v2852 = vld [vmem:[%s5 + $0xb8] sm:$0xff]
    %v2853 = vld [vmem:[%s5 + $0xc0] sm:$0xff]
    %v2854 = vld [vmem:[%s5 + $0xc8] sm:$0xff]
    %v2855 = vld [vmem:[%s5 + $0xd0] sm:$0xff]
    %v2856 = vld [vmem:[%s5 + $0xd8] sm:$0xff]
    %v2857 = vld [vmem:[%s5 + $0xe0] sm:$0xff]
    %v2858 = vld [vmem:[%s5 + $0xe8] sm:$0xff]
    %v2859 = vld [vmem:[%s5 + $0xf0] sm:$0xff]
    %v2860 = vld [vmem:[%s5 + $0xf8] sm:$0xff]
    %v2863 = vunpack.c.l.b16 %v2813
    %v2864 = vunpack.c.l.b16 %v2814
    %v2865 = vpack.c.b16 %v2864, %v2863
    %v2899 = vunpack.c.l.b16 %v2829
    %v2900 = vunpack.c.h.b16 %v2829
    %v2901 = vunpack.c.l.b16 %v2830
    %v2902 = vunpack.c.h.b16 %v2830
    %v2903 = vunpack.c.l.b16 %v2831
    %v2904 = vunpack.c.h.b16 %v2831
    %v2905 = vunpack.c.l.b16 %v2832
    %v2906 = vunpack.c.h.b16 %v2832
    %v2907 = vunpack.c.l.b16 %v2833
    %v2908 = vunpack.c.h.b16 %v2833
    %v2909 = vunpack.c.l.b16 %v2834
    %v2910 = vunpack.c.h.b16 %v2834
    %v2911 = vunpack.c.l.b16 %v2835
    %v2912 = vunpack.c.h.b16 %v2835
    %v2913 = vunpack.c.l.b16 %v2836
    %v2914 = vunpack.c.h.b16 %v2836
    %v2915 = vunpack.c.l.b16 %v2837
    %v2916 = vunpack.c.h.b16 %v2837
    %v2917 = vunpack.c.l.b16 %v2838
    %v2918 = vunpack.c.h.b16 %v2838
    %v2919 = vunpack.c.l.b16 %v2839
    %v2920 = vunpack.c.h.b16 %v2839
    %v2921 = vunpack.c.l.b16 %v2840
    %v2922 = vunpack.c.h.b16 %v2840
    %v2923 = vunpack.c.l.b16 %v2841
    %v2924 = vunpack.c.h.b16 %v2841
    %v2925 = vunpack.c.l.b16 %v2842
    %v2926 = vunpack.c.h.b16 %v2842
    %v2927 = vunpack.c.l.b16 %v2843
    %v2928 = vunpack.c.h.b16 %v2843
    %v2929 = vunpack.c.l.b16 %v2844
    %v2930 = vunpack.c.h.b16 %v2844
    %v2931 = vunpack.c.l.b16 %v2845
    %v2932 = vunpack.c.h.b16 %v2845
    %v2933 = vunpack.c.l.b16 %v2846
    %v2934 = vunpack.c.h.b16 %v2846
    %v2935 = vunpack.c.l.b16 %v2847
    %v2936 = vunpack.c.h.b16 %v2847
    %v2937 = vunpack.c.l.b16 %v2848
    %v2938 = vunpack.c.h.b16 %v2848
    %v2939 = vunpack.c.l.b16 %v2849
    %v2940 = vunpack.c.h.b16 %v2849
    %v2941 = vunpack.c.l.b16 %v2850
    %v2942 = vunpack.c.h.b16 %v2850
    %v2943 = vunpack.c.l.b16 %v2851
    %v2944 = vunpack.c.h.b16 %v2851
    %v2945 = vunpack.c.l.b16 %v2852
    %v2946 = vunpack.c.h.b16 %v2852
    %v2947 = vunpack.c.l.b16 %v2853
    %v2948 = vunpack.c.h.b16 %v2853
    %v2949 = vunpack.c.l.b16 %v2854
    %v2950 = vunpack.c.h.b16 %v2854
    %v2951 = vunpack.c.l.b16 %v2855
    %v2952 = vunpack.c.h.b16 %v2855
    %v2953 = vunpack.c.l.b16 %v2856
    %v2954 = vunpack.c.h.b16 %v2856
    %v2955 = vunpack.c.l.b16 %v2857
    %v2956 = vunpack.c.h.b16 %v2857
    %v2957 = vunpack.c.l.b16 %v2858
    %v2958 = vunpack.c.h.b16 %v2858
    %v2959 = vunpack.c.l.b16 %v2859
    %v2960 = vunpack.c.h.b16 %v2859
    %v2961 = vunpack.c.l.b16 %v2860
    %v2962 = vunpack.c.h.b16 %v2860
    %v2963 = vpack.c.b16 %v2903, %v2899
    %v2964 = vpack.c.b16 %v2904, %v2900
    %v2965 = vpack.c.b16 %v2905, %v2901
    %v2966 = vpack.c.b16 %v2906, %v2902
    %v2967 = vpack.c.b16 %v2911, %v2907
    %v2968 = vpack.c.b16 %v2912, %v2908
    %v2969 = vpack.c.b16 %v2913, %v2909
    %v2970 = vpack.c.b16 %v2914, %v2910
    %v2971 = vpack.c.b16 %v2919, %v2915
    %v2972 = vpack.c.b16 %v2920, %v2916
    %v2973 = vpack.c.b16 %v2921, %v2917
    %v2974 = vpack.c.b16 %v2922, %v2918
    %v2975 = vpack.c.b16 %v2927, %v2923
    %v2976 = vpack.c.b16 %v2928, %v2924
    %v2977 = vpack.c.b16 %v2929, %v2925
    %v2978 = vpack.c.b16 %v2930, %v2926
    %v2979 = vpack.c.b16 %v2935, %v2931
    %v2980 = vpack.c.b16 %v2936, %v2932
    %v2981 = vpack.c.b16 %v2937, %v2933
    %v2982 = vpack.c.b16 %v2938, %v2934
    %v2983 = vpack.c.b16 %v2943, %v2939
    %v2984 = vpack.c.b16 %v2944, %v2940
    %v2985 = vpack.c.b16 %v2945, %v2941
    %v2986 = vpack.c.b16 %v2946, %v2942
    %v2987 = vpack.c.b16 %v2951, %v2947
    %v2988 = vpack.c.b16 %v2952, %v2948
    %v2989 = vpack.c.b16 %v2953, %v2949
    %v2990 = vpack.c.b16 %v2954, %v2950
    %v2991 = vpack.c.b16 %v2959, %v2955
    %v2992 = vpack.c.b16 %v2960, %v2956
    %v2993 = vpack.c.b16 %v2961, %v2957
    %v2994 = vpack.c.b16 %v2962, %v2958
    %3027 = vmatpush.bf16.msra.mxu0 %v2991
    %3028 = vmatpush.bf16.msra.mxu0 %v2987
    %3029 = vmatpush.bf16.msra.mxu0 %v2983
    %3030 = vmatpush.bf16.msra.mxu0 %v2979
    %3031 = vmatpush.bf16.msra.mxu0 %v2975
    %3032 = vmatpush.bf16.msra.mxu0 %v2971
    %3033 = vmatpush.bf16.msra.mxu0 %v2967
    %3034 = vmatpush.bf16.msra.mxu0 %v2963
    %3035 = vmatmul.bf16.gmra.mxu0 %v2865
    %v3036 = vpop.f32.mrf.mxu0
    %v3037 = vadd.f32 0.0, %v3036
    %v3038 = vpop.f32.mrf.mxu0
    %v3039 = vadd.f32 0.0, %v3038
    %3040 = vdwg.mxu0
    %3041 = vmatpush.bf16.msra.mxu0 %v2992
    %3042 = vmatpush.bf16.msra.mxu0 %v2988
    %3043 = vmatpush.bf16.msra.mxu0 %v2984
    %3044 = vmatpush.bf16.msra.mxu0 %v2980
    %3045 = vmatpush.bf16.msra.mxu0 %v2976
    %3046 = vmatpush.bf16.msra.mxu0 %v2972
    %3047 = vmatpush.bf16.msra.mxu0 %v2968
    %3048 = vmatpush.bf16.msra.mxu0 %v2964
    %3049 = vmatmul.bf16.gmra.mxu0 %v2865
    %v3050 = vpop.f32.mrf.mxu0
    %v3051 = vadd.f32 0.0, %v3050
    %v3052 = vpop.f32.mrf.mxu0
    %v3053 = vadd.f32 0.0, %v3052
    %3054 = vdwg.mxu0
    %3055 = vmatpush.bf16.msra.mxu0 %v2993
    %3056 = vmatpush.bf16.msra.mxu0 %v2989
    %3057 = vmatpush.bf16.msra.mxu0 %v2985
    %3058 = vmatpush.bf16.msra.mxu0 %v2981
    %3059 = vmatpush.bf16.msra.mxu0 %v2977
    %3060 = vmatpush.bf16.msra.mxu0 %v2973
    %3061 = vmatpush.bf16.msra.mxu0 %v2969
    %3062 = vmatpush.bf16.msra.mxu0 %v2965
    %3063 = vmatmul.bf16.gmra.mxu0 %v2865
    %v3064 = vpop.f32.mrf.mxu0
    %v3065 = vadd.f32 0.0, %v3064
    %v3066 = vpop.f32.mrf.mxu0
    %v3067 = vadd.f32 0.0, %v3066
    %3068 = vdwg.mxu0
    %3069 = vmatpush.bf16.msra.mxu0 %v2994
    %3070 = vmatpush.bf16.msra.mxu0 %v2990
    %3071 = vmatpush.bf16.msra.mxu0 %v2986
    %3072 = vmatpush.bf16.msra.mxu0 %v2982
    %3073 = vmatpush.bf16.msra.mxu0 %v2978
    %3074 = vmatpush.bf16.msra.mxu0 %v2974
    %3075 = vmatpush.bf16.msra.mxu0 %v2970
    %3076 = vmatpush.bf16.msra.mxu0 %v2966
    %3077 = vmatmul.bf16.gmra.mxu0 %v2865
    %v3078 = vpop.f32.mrf.mxu0
    %v3079 = vadd.f32 0.0, %v3078
    %v3080 = vpop.f32.mrf.mxu0
    %v3081 = vadd.f32 0.0, %v3080
    %3082 = vdwg.mxu0
    %v3083 = vadd.f32 %v2821, %v3037
    %v3084 = vadd.f32 %v2822, %v3051
    %v3085 = vadd.f32 %v2823, %v3065
    %v3086 = vadd.f32 %v2824, %v3079
    %v3087 = vadd.f32 %v2825, %v3039
    %v3088 = vadd.f32 %v2826, %v3053
    %v3089 = vadd.f32 %v2827, %v3067
    %v3090 = vadd.f32 %v2828, %v3081
    %v3091 = vxor.u32 %v3083, 2147483648
    %v3092 = vxor.u32 %v3084, 2147483648
    %v3093 = vxor.u32 %v3085, 2147483648
    %v3094 = vxor.u32 %v3087, 2147483648
    %v3095 = vxor.u32 %v3088, 2147483648
    %v3096 = vxor.u32 %v3089, 2147483648
    %v3097 = vmul.f32 %v3091, 1.442695
    %v3098 = vpow.pop %v3097
    %v3099 = vmul.f32 %v3092, 1.442695
    %v3100 = vpow.pop %v3099
    %v3101 = vmul.f32 %v3093, 1.442695
    %v3102 = vpow.pop %v3101
    %v3103 = vmul.f32 %v3094, 1.442695
    %v3104 = vpow.pop %v3103
    %v3105 = vmul.f32 %v3095, 1.442695
    %v3106 = vpow.pop %v3105
    %v3107 = vmul.f32 %v3096, 1.442695
    %v3108 = vpow.pop %v3107
    %v3109 = vadd.f32 %v3098, 1.0
    %v3110 = vadd.f32 %v3100, 1.0
    %v3111 = vadd.f32 %v3102, 1.0
    %v3112 = vadd.f32 %v3104, 1.0
    %v3113 = vadd.f32 %v3106, 1.0
    %v3114 = vadd.f32 %v3108, 1.0
    %v3115 = vrcp.pop %v3109
    %v3116 = vmul.f32 %v3109, %v3115
    %v3117 = vsub.f32 1.0, %v3116
    %v3118 = vmul.f32 %v3115, %v3117
    %v3119 = vadd.f32 %v3115, %v3118
    %vm3120 = vweird.f32 %v3109
    %vm3121 = vweird.f32 %v3115
    %vm3122 = vmor %vm3120, %vm3121
    %v3123 = vsel %vm3122, %v3115, %v3119
    %v3124 = vand.u32 2147483647, %v3109
    %vm3125 = vcmp.eq.f32.partialorder %v3124, 8.507059e+37
    %v3126 = vand.u32 %v3109, 2147483648
    %v3127 = vor.u32 1.1754944e-38, %v3126
    %v3128 = vsel %vm3125, %v3127, %v3123
    %v3129 = vmul.f32 1.0, %v3128
    %v3130 = vrcp.pop %v3110
    %v3131 = vmul.f32 %v3110, %v3130
    %v3132 = vsub.f32 1.0, %v3131
    %v3133 = vmul.f32 %v3130, %v3132
    %v3134 = vadd.f32 %v3130, %v3133
    %vm3135 = vweird.f32 %v3110
    %vm3136 = vweird.f32 %v3130
    %vm3137 = vmor %vm3135, %vm3136
    %v3138 = vsel %vm3137, %v3130, %v3134
    %v3139 = vand.u32 2147483647, %v3110
    %vm3140 = vcmp.eq.f32.partialorder %v3139, 8.507059e+37
    %v3141 = vand.u32 %v3110, 2147483648
    %v3142 = vor.u32 1.1754944e-38, %v3141
    %v3143 = vsel %vm3140, %v3142, %v3138
    %v3144 = vmul.f32 1.0, %v3143
    %v3145 = vrcp.pop %v3111
    %v3146 = vmul.f32 %v3111, %v3145
    %v3147 = vsub.f32 1.0, %v3146
    %v3148 = vmul.f32 %v3145, %v3147
    %v3149 = vadd.f32 %v3145, %v3148
    %vm3150 = vweird.f32 %v3111
    %vm3151 = vweird.f32 %v3145
    %vm3152 = vmor %vm3150, %vm3151
    %v3153 = vsel %vm3152, %v3145, %v3149
    %v3154 = vand.u32 2147483647, %v3111
    %vm3155 = vcmp.eq.f32.partialorder %v3154, 8.507059e+37
    %v3156 = vand.u32 %v3111, 2147483648
    %v3157 = vor.u32 1.1754944e-38, %v3156
    %v3158 = vsel %vm3155, %v3157, %v3153
    %v3159 = vmul.f32 1.0, %v3158
    %v3160 = vrcp.pop %v3112
    %v3161 = vmul.f32 %v3112, %v3160
    %v3162 = vsub.f32 1.0, %v3161
    %v3163 = vmul.f32 %v3160, %v3162
    %v3164 = vadd.f32 %v3160, %v3163
    %vm3165 = vweird.f32 %v3112
    %vm3166 = vweird.f32 %v3160
    %vm3167 = vmor %vm3165, %vm3166
    %v3168 = vsel %vm3167, %v3160, %v3164
    %v3169 = vand.u32 2147483647, %v3112
    %vm3170 = vcmp.eq.f32.partialorder %v3169, 8.507059e+37
    %v3171 = vand.u32 %v3112, 2147483648
    %v3172 = vor.u32 1.1754944e-38, %v3171
    %v3173 = vsel %vm3170, %v3172, %v3168
    %v3174 = vmul.f32 1.0, %v3173
    %v3175 = vrcp.pop %v3113
    %v3176 = vmul.f32 %v3113, %v3175
    %v3177 = vsub.f32 1.0, %v3176
    %v3178 = vmul.f32 %v3175, %v3177
    %v3179 = vadd.f32 %v3175, %v3178
    %vm3180 = vweird.f32 %v3113
    %vm3181 = vweird.f32 %v3175
    %vm3182 = vmor %vm3180, %vm3181
    %v3183 = vsel %vm3182, %v3175, %v3179
    %v3184 = vand.u32 2147483647, %v3113
    %vm3185 = vcmp.eq.f32.partialorder %v3184, 8.507059e+37
    %v3186 = vand.u32 %v3113, 2147483648
    %v3187 = vor.u32 1.1754944e-38, %v3186
    %v3188 = vsel %vm3185, %v3187, %v3183
    %v3189 = vmul.f32 1.0, %v3188
    %v3190 = vrcp.pop %v3114
    %v3191 = vmul.f32 %v3114, %v3190
    %v3192 = vsub.f32 1.0, %v3191
    %v3193 = vmul.f32 %v3190, %v3192
    %v3194 = vadd.f32 %v3190, %v3193
    %vm3195 = vweird.f32 %v3114
    %vm3196 = vweird.f32 %v3190
    %vm3197 = vmor %vm3195, %vm3196
    %v3198 = vsel %vm3197, %v3190, %v3194
    %v3199 = vand.u32 2147483647, %v3114
    %vm3200 = vcmp.eq.f32.partialorder %v3199, 8.507059e+37
    %v3201 = vand.u32 %v3114, 2147483648
    %v3202 = vor.u32 1.1754944e-38, %v3201
    %v3203 = vsel %vm3200, %v3202, %v3198
    %v3204 = vmul.f32 1.0, %v3203
    %v3205 = vtanh.pop %v3086
    %v3206 = vtanh.pop %v3090
    %v3207 = vmul.f32 %v3144, %v2807
    %v3208 = vmul.f32 %v3189, %v2808
    %v3209 = vmul.f32 %v3129, %v3205
    %v3210 = vmul.f32 %v3174, %v3206
    %v3211 = vadd.f32 %v3207, %v3209
    %v3212 = vadd.f32 %v3208, %v3210
    %v3213 = vtanh.pop %v3211
    %v3214 = vtanh.pop %v3212
    %v3215 = vmul.f32 %v3159, %v3213
    %v3216 = vmul.f32 %v3204, %v3214
    %v3217 = vpack.c.bf16 %v3215, %v3215
    %v3218 = vpack.c.bf16 %v3216, %v3216
    %s3219 = scalar_lea.vmem [#allocation3], 40
    %3220 = vst [vmem:[%s3219] sm:$0xf] %v3217
    %3221 = vst [vmem:[%s3219 + $0x4] sm:$0xf] %v3218
    %s3222 = smul.u32 12, 4
    %s3223 = smul.addr %s3222, 8
    %s3224 = scalar_lea.vmem [#allocation2], %s3223
    %v3225 = vld [vmem:[%s3224] sm:$0xff]
    %v3226 = vld [vmem:[%s3224 + $0x8] sm:$0xff]
    %v3227 = vld [vmem:[%s3224 + $0x10] sm:$0xff]
    %v3228 = vld [vmem:[%s3224 + $0x18] sm:$0xff]
    %v3229 = vld [vmem:[%s3224 + $0x20] sm:$0xff]
    %v3230 = vld [vmem:[%s3224 + $0x28] sm:$0xff]
    %v3231 = vld [vmem:[%s3224 + $0x30] sm:$0xff]
    %v3232 = vld [vmem:[%s3224 + $0x38] sm:$0xff]
    %v3233 = vld [vmem:[%s5] sm:$0xff]
    %v3234 = vld [vmem:[%s5 + $0x8] sm:$0xff]
    %v3235 = vld [vmem:[%s5 + $0x10] sm:$0xff]
    %v3236 = vld [vmem:[%s5 + $0x18] sm:$0xff]
    %v3237 = vld [vmem:[%s5 + $0x20] sm:$0xff]
    %v3238 = vld [vmem:[%s5 + $0x28] sm:$0xff]
    %v3239 = vld [vmem:[%s5 + $0x30] sm:$0xff]
    %v3240 = vld [vmem:[%s5 + $0x38] sm:$0xff]
    %v3241 = vld [vmem:[%s5 + $0x40] sm:$0xff]
    %v3242 = vld [vmem:[%s5 + $0x48] sm:$0xff]
    %v3243 = vld [vmem:[%s5 + $0x50] sm:$0xff]
    %v3244 = vld [vmem:[%s5 + $0x58] sm:$0xff]
    %v3245 = vld [vmem:[%s5 + $0x60] sm:$0xff]
    %v3246 = vld [vmem:[%s5 + $0x68] sm:$0xff]
    %v3247 = vld [vmem:[%s5 + $0x70] sm:$0xff]
    %v3248 = vld [vmem:[%s5 + $0x78] sm:$0xff]
    %v3249 = vld [vmem:[%s5 + $0x80] sm:$0xff]
    %v3250 = vld [vmem:[%s5 + $0x88] sm:$0xff]
    %v3251 = vld [vmem:[%s5 + $0x90] sm:$0xff]
    %v3252 = vld [vmem:[%s5 + $0x98] sm:$0xff]
    %v3253 = vld [vmem:[%s5 + $0xa0] sm:$0xff]
    %v3254 = vld [vmem:[%s5 + $0xa8] sm:$0xff]
    %v3255 = vld [vmem:[%s5 + $0xb0] sm:$0xff]
    %v3256 = vld [vmem:[%s5 + $0xb8] sm:$0xff]
    %v3257 = vld [vmem:[%s5 + $0xc0] sm:$0xff]
    %v3258 = vld [vmem:[%s5 + $0xc8] sm:$0xff]
    %v3259 = vld [vmem:[%s5 + $0xd0] sm:$0xff]
    %v3260 = vld [vmem:[%s5 + $0xd8] sm:$0xff]
    %v3261 = vld [vmem:[%s5 + $0xe0] sm:$0xff]
    %v3262 = vld [vmem:[%s5 + $0xe8] sm:$0xff]
    %v3263 = vld [vmem:[%s5 + $0xf0] sm:$0xff]
    %v3264 = vld [vmem:[%s5 + $0xf8] sm:$0xff]
    %v3267 = vunpack.c.l.b16 %v3217
    %v3268 = vunpack.c.l.b16 %v3218
    %v3269 = vpack.c.b16 %v3268, %v3267
    %v3303 = vunpack.c.l.b16 %v3233
    %v3304 = vunpack.c.h.b16 %v3233
    %v3305 = vunpack.c.l.b16 %v3234
    %v3306 = vunpack.c.h.b16 %v3234
    %v3307 = vunpack.c.l.b16 %v3235
    %v3308 = vunpack.c.h.b16 %v3235
    %v3309 = vunpack.c.l.b16 %v3236
    %v3310 = vunpack.c.h.b16 %v3236
    %v3311 = vunpack.c.l.b16 %v3237
    %v3312 = vunpack.c.h.b16 %v3237
    %v3313 = vunpack.c.l.b16 %v3238
    %v3314 = vunpack.c.h.b16 %v3238
    %v3315 = vunpack.c.l.b16 %v3239
    %v3316 = vunpack.c.h.b16 %v3239
    %v3317 = vunpack.c.l.b16 %v3240
    %v3318 = vunpack.c.h.b16 %v3240
    %v3319 = vunpack.c.l.b16 %v3241
    %v3320 = vunpack.c.h.b16 %v3241
    %v3321 = vunpack.c.l.b16 %v3242
    %v3322 = vunpack.c.h.b16 %v3242
    %v3323 = vunpack.c.l.b16 %v3243
    %v3324 = vunpack.c.h.b16 %v3243
    %v3325 = vunpack.c.l.b16 %v3244
    %v3326 = vunpack.c.h.b16 %v3244
    %v3327 = vunpack.c.l.b16 %v3245
    %v3328 = vunpack.c.h.b16 %v3245
    %v3329 = vunpack.c.l.b16 %v3246
    %v3330 = vunpack.c.h.b16 %v3246
    %v3331 = vunpack.c.l.b16 %v3247
    %v3332 = vunpack.c.h.b16 %v3247
    %v3333 = vunpack.c.l.b16 %v3248
    %v3334 = vunpack.c.h.b16 %v3248
    %v3335 = vunpack.c.l.b16 %v3249
    %v3336 = vunpack.c.h.b16 %v3249
    %v3337 = vunpack.c.l.b16 %v3250
    %v3338 = vunpack.c.h.b16 %v3250
    %v3339 = vunpack.c.l.b16 %v3251
    %v3340 = vunpack.c.h.b16 %v3251
    %v3341 = vunpack.c.l.b16 %v3252
    %v3342 = vunpack.c.h.b16 %v3252
    %v3343 = vunpack.c.l.b16 %v3253
    %v3344 = vunpack.c.h.b16 %v3253
    %v3345 = vunpack.c.l.b16 %v3254
    %v3346 = vunpack.c.h.b16 %v3254
    %v3347 = vunpack.c.l.b16 %v3255
    %v3348 = vunpack.c.h.b16 %v3255
    %v3349 = vunpack.c.l.b16 %v3256
    %v3350 = vunpack.c.h.b16 %v3256
    %v3351 = vunpack.c.l.b16 %v3257
    %v3352 = vunpack.c.h.b16 %v3257
    %v3353 = vunpack.c.l.b16 %v3258
    %v3354 = vunpack.c.h.b16 %v3258
    %v3355 = vunpack.c.l.b16 %v3259
    %v3356 = vunpack.c.h.b16 %v3259
    %v3357 = vunpack.c.l.b16 %v3260
    %v3358 = vunpack.c.h.b16 %v3260
    %v3359 = vunpack.c.l.b16 %v3261
    %v3360 = vunpack.c.h.b16 %v3261
    %v3361 = vunpack.c.l.b16 %v3262
    %v3362 = vunpack.c.h.b16 %v3262
    %v3363 = vunpack.c.l.b16 %v3263
    %v3364 = vunpack.c.h.b16 %v3263
    %v3365 = vunpack.c.l.b16 %v3264
    %v3366 = vunpack.c.h.b16 %v3264
    %v3367 = vpack.c.b16 %v3307, %v3303
    %v3368 = vpack.c.b16 %v3308, %v3304
    %v3369 = vpack.c.b16 %v3309, %v3305
    %v3370 = vpack.c.b16 %v3310, %v3306
    %v3371 = vpack.c.b16 %v3315, %v3311
    %v3372 = vpack.c.b16 %v3316, %v3312
    %v3373 = vpack.c.b16 %v3317, %v3313
    %v3374 = vpack.c.b16 %v3318, %v3314
    %v3375 = vpack.c.b16 %v3323, %v3319
    %v3376 = vpack.c.b16 %v3324, %v3320
    %v3377 = vpack.c.b16 %v3325, %v3321
    %v3378 = vpack.c.b16 %v3326, %v3322
    %v3379 = vpack.c.b16 %v3331, %v3327
    %v3380 = vpack.c.b16 %v3332, %v3328
    %v3381 = vpack.c.b16 %v3333, %v3329
    %v3382 = vpack.c.b16 %v3334, %v3330
    %v3383 = vpack.c.b16 %v3339, %v3335
    %v3384 = vpack.c.b16 %v3340, %v3336
    %v3385 = vpack.c.b16 %v3341, %v3337
    %v3386 = vpack.c.b16 %v3342, %v3338
    %v3387 = vpack.c.b16 %v3347, %v3343
    %v3388 = vpack.c.b16 %v3348, %v3344
    %v3389 = vpack.c.b16 %v3349, %v3345
    %v3390 = vpack.c.b16 %v3350, %v3346
    %v3391 = vpack.c.b16 %v3355, %v3351
    %v3392 = vpack.c.b16 %v3356, %v3352
    %v3393 = vpack.c.b16 %v3357, %v3353
    %v3394 = vpack.c.b16 %v3358, %v3354
    %v3395 = vpack.c.b16 %v3363, %v3359
    %v3396 = vpack.c.b16 %v3364, %v3360
    %v3397 = vpack.c.b16 %v3365, %v3361
    %v3398 = vpack.c.b16 %v3366, %v3362
    %3431 = vmatpush.bf16.msra.mxu0 %v3395
    %3432 = vmatpush.bf16.msra.mxu0 %v3391
    %3433 = vmatpush.bf16.msra.mxu0 %v3387
    %3434 = vmatpush.bf16.msra.mxu0 %v3383
    %3435 = vmatpush.bf16.msra.mxu0 %v3379
    %3436 = vmatpush.bf16.msra.mxu0 %v3375
    %3437 = vmatpush.bf16.msra.mxu0 %v3371
    %3438 = vmatpush.bf16.msra.mxu0 %v3367
    %3439 = vmatmul.bf16.gmra.mxu0 %v3269
    %v3440 = vpop.f32.mrf.mxu0
    %v3441 = vadd.f32 0.0, %v3440
    %v3442 = vpop.f32.mrf.mxu0
    %v3443 = vadd.f32 0.0, %v3442
    %3444 = vdwg.mxu0
    %3445 = vmatpush.bf16.msra.mxu0 %v3396
    %3446 = vmatpush.bf16.msra.mxu0 %v3392
    %3447 = vmatpush.bf16.msra.mxu0 %v3388
    %3448 = vmatpush.bf16.msra.mxu0 %v3384
    %3449 = vmatpush.bf16.msra.mxu0 %v3380
    %3450 = vmatpush.bf16.msra.mxu0 %v3376
    %3451 = vmatpush.bf16.msra.mxu0 %v3372
    %3452 = vmatpush.bf16.msra.mxu0 %v3368
    %3453 = vmatmul.bf16.gmra.mxu0 %v3269
    %v3454 = vpop.f32.mrf.mxu0
    %v3455 = vadd.f32 0.0, %v3454
    %v3456 = vpop.f32.mrf.mxu0
    %v3457 = vadd.f32 0.0, %v3456
    %3458 = vdwg.mxu0
    %3459 = vmatpush.bf16.msra.mxu0 %v3397
    %3460 = vmatpush.bf16.msra.mxu0 %v3393
    %3461 = vmatpush.bf16.msra.mxu0 %v3389
    %3462 = vmatpush.bf16.msra.mxu0 %v3385
    %3463 = vmatpush.bf16.msra.mxu0 %v3381
    %3464 = vmatpush.bf16.msra.mxu0 %v3377
    %3465 = vmatpush.bf16.msra.mxu0 %v3373
    %3466 = vmatpush.bf16.msra.mxu0 %v3369
    %3467 = vmatmul.bf16.gmra.mxu0 %v3269
    %v3468 = vpop.f32.mrf.mxu0
    %v3469 = vadd.f32 0.0, %v3468
    %v3470 = vpop.f32.mrf.mxu0
    %v3471 = vadd.f32 0.0, %v3470
    %3472 = vdwg.mxu0
    %3473 = vmatpush.bf16.msra.mxu0 %v3398
    %3474 = vmatpush.bf16.msra.mxu0 %v3394
    %3475 = vmatpush.bf16.msra.mxu0 %v3390
    %3476 = vmatpush.bf16.msra.mxu0 %v3386
    %3477 = vmatpush.bf16.msra.mxu0 %v3382
    %3478 = vmatpush.bf16.msra.mxu0 %v3378
    %3479 = vmatpush.bf16.msra.mxu0 %v3374
    %3480 = vmatpush.bf16.msra.mxu0 %v3370
    %3481 = vmatmul.bf16.gmra.mxu0 %v3269
    %v3482 = vpop.f32.mrf.mxu0
    %v3483 = vadd.f32 0.0, %v3482
    %v3484 = vpop.f32.mrf.mxu0
    %v3485 = vadd.f32 0.0, %v3484
    %3486 = vdwg.mxu0
    %v3487 = vadd.f32 %v3225, %v3441
    %v3488 = vadd.f32 %v3226, %v3455
    %v3489 = vadd.f32 %v3227, %v3469
    %v3490 = vadd.f32 %v3228, %v3483
    %v3491 = vadd.f32 %v3229, %v3443
    %v3492 = vadd.f32 %v3230, %v3457
    %v3493 = vadd.f32 %v3231, %v3471
    %v3494 = vadd.f32 %v3232, %v3485
    %v3495 = vxor.u32 %v3487, 2147483648
    %v3496 = vxor.u32 %v3488, 2147483648
    %v3497 = vxor.u32 %v3489, 2147483648
    %v3498 = vxor.u32 %v3491, 2147483648
    %v3499 = vxor.u32 %v3492, 2147483648
    %v3500 = vxor.u32 %v3493, 2147483648
    %v3501 = vmul.f32 %v3495, 1.442695
    %v3502 = vpow.pop %v3501
    %v3503 = vmul.f32 %v3496, 1.442695
    %v3504 = vpow.pop %v3503
    %v3505 = vmul.f32 %v3497, 1.442695
    %v3506 = vpow.pop %v3505
    %v3507 = vmul.f32 %v3498, 1.442695
    %v3508 = vpow.pop %v3507
    %v3509 = vmul.f32 %v3499, 1.442695
    %v3510 = vpow.pop %v3509
    %v3511 = vmul.f32 %v3500, 1.442695
    %v3512 = vpow.pop %v3511
    %v3513 = vadd.f32 %v3502, 1.0
    %v3514 = vadd.f32 %v3504, 1.0
    %v3515 = vadd.f32 %v3506, 1.0
    %v3516 = vadd.f32 %v3508, 1.0
    %v3517 = vadd.f32 %v3510, 1.0
    %v3518 = vadd.f32 %v3512, 1.0
    %v3519 = vrcp.pop %v3513
    %v3520 = vmul.f32 %v3513, %v3519
    %v3521 = vsub.f32 1.0, %v3520
    %v3522 = vmul.f32 %v3519, %v3521
    %v3523 = vadd.f32 %v3519, %v3522
    %vm3524 = vweird.f32 %v3513
    %vm3525 = vweird.f32 %v3519
    %vm3526 = vmor %vm3524, %vm3525
    %v3527 = vsel %vm3526, %v3519, %v3523
    %v3528 = vand.u32 2147483647, %v3513
    %vm3529 = vcmp.eq.f32.partialorder %v3528, 8.507059e+37
    %v3530 = vand.u32 %v3513, 2147483648
    %v3531 = vor.u32 1.1754944e-38, %v3530
    %v3532 = vsel %vm3529, %v3531, %v3527
    %v3533 = vmul.f32 1.0, %v3532
    %v3534 = vrcp.pop %v3514
    %v3535 = vmul.f32 %v3514, %v3534
    %v3536 = vsub.f32 1.0, %v3535
    %v3537 = vmul.f32 %v3534, %v3536
    %v3538 = vadd.f32 %v3534, %v3537
    %vm3539 = vweird.f32 %v3514
    %vm3540 = vweird.f32 %v3534
    %vm3541 = vmor %vm3539, %vm3540
    %v3542 = vsel %vm3541, %v3534, %v3538
    %v3543 = vand.u32 2147483647, %v3514
    %vm3544 = vcmp.eq.f32.partialorder %v3543, 8.507059e+37
    %v3545 = vand.u32 %v3514, 2147483648
    %v3546 = vor.u32 1.1754944e-38, %v3545
    %v3547 = vsel %vm3544, %v3546, %v3542
    %v3548 = vmul.f32 1.0, %v3547
    %v3549 = vrcp.pop %v3515
    %v3550 = vmul.f32 %v3515, %v3549
    %v3551 = vsub.f32 1.0, %v3550
    %v3552 = vmul.f32 %v3549, %v3551
    %v3553 = vadd.f32 %v3549, %v3552
    %vm3554 = vweird.f32 %v3515
    %vm3555 = vweird.f32 %v3549
    %vm3556 = vmor %vm3554, %vm3555
    %v3557 = vsel %vm3556, %v3549, %v3553
    %v3558 = vand.u32 2147483647, %v3515
    %vm3559 = vcmp.eq.f32.partialorder %v3558, 8.507059e+37
    %v3560 = vand.u32 %v3515, 2147483648
    %v3561 = vor.u32 1.1754944e-38, %v3560
    %v3562 = vsel %vm3559, %v3561, %v3557
    %v3563 = vmul.f32 1.0, %v3562
    %v3564 = vrcp.pop %v3516
    %v3565 = vmul.f32 %v3516, %v3564
    %v3566 = vsub.f32 1.0, %v3565
    %v3567 = vmul.f32 %v3564, %v3566
    %v3568 = vadd.f32 %v3564, %v3567
    %vm3569 = vweird.f32 %v3516
    %vm3570 = vweird.f32 %v3564
    %vm3571 = vmor %vm3569, %vm3570
    %v3572 = vsel %vm3571, %v3564, %v3568
    %v3573 = vand.u32 2147483647, %v3516
    %vm3574 = vcmp.eq.f32.partialorder %v3573, 8.507059e+37
    %v3575 = vand.u32 %v3516, 2147483648
    %v3576 = vor.u32 1.1754944e-38, %v3575
    %v3577 = vsel %vm3574, %v3576, %v3572
    %v3578 = vmul.f32 1.0, %v3577
    %v3579 = vrcp.pop %v3517
    %v3580 = vmul.f32 %v3517, %v3579
    %v3581 = vsub.f32 1.0, %v3580
    %v3582 = vmul.f32 %v3579, %v3581
    %v3583 = vadd.f32 %v3579, %v3582
    %vm3584 = vweird.f32 %v3517
    %vm3585 = vweird.f32 %v3579
    %vm3586 = vmor %vm3584, %vm3585
    %v3587 = vsel %vm3586, %v3579, %v3583
    %v3588 = vand.u32 2147483647, %v3517
    %vm3589 = vcmp.eq.f32.partialorder %v3588, 8.507059e+37
    %v3590 = vand.u32 %v3517, 2147483648
    %v3591 = vor.u32 1.1754944e-38, %v3590
    %v3592 = vsel %vm3589, %v3591, %v3587
    %v3593 = vmul.f32 1.0, %v3592
    %v3594 = vrcp.pop %v3518
    %v3595 = vmul.f32 %v3518, %v3594
    %v3596 = vsub.f32 1.0, %v3595
    %v3597 = vmul.f32 %v3594, %v3596
    %v3598 = vadd.f32 %v3594, %v3597
    %vm3599 = vweird.f32 %v3518
    %vm3600 = vweird.f32 %v3594
    %vm3601 = vmor %vm3599, %vm3600
    %v3602 = vsel %vm3601, %v3594, %v3598
    %v3603 = vand.u32 2147483647, %v3518
    %vm3604 = vcmp.eq.f32.partialorder %v3603, 8.507059e+37
    %v3605 = vand.u32 %v3518, 2147483648
    %v3606 = vor.u32 1.1754944e-38, %v3605
    %v3607 = vsel %vm3604, %v3606, %v3602
    %v3608 = vmul.f32 1.0, %v3607
    %v3609 = vtanh.pop %v3490
    %v3610 = vtanh.pop %v3494
    %v3611 = vmul.f32 %v3548, %v3211
    %v3612 = vmul.f32 %v3593, %v3212
    %v3613 = vmul.f32 %v3533, %v3609
    %v3614 = vmul.f32 %v3578, %v3610
    %v3615 = vadd.f32 %v3611, %v3613
    %v3616 = vadd.f32 %v3612, %v3614
    %v3617 = vtanh.pop %v3615
    %v3618 = vtanh.pop %v3616
    %v3619 = vmul.f32 %v3563, %v3617
    %v3620 = vmul.f32 %v3608, %v3618
    %v3621 = vpack.c.bf16 %v3619, %v3619
    %v3622 = vpack.c.bf16 %v3620, %v3620
    %s3623 = scalar_lea.vmem [#allocation3], 48
    %3624 = vst [vmem:[%s3623] sm:$0xf] %v3621
    %3625 = vst [vmem:[%s3623 + $0x4] sm:$0xf] %v3622
    %s3626 = smul.u32 14, 4
    %s3627 = smul.addr %s3626, 8
    %s3628 = scalar_lea.vmem [#allocation2], %s3627
    %v3629 = vld [vmem:[%s3628] sm:$0xff]
    %v3630 = vld [vmem:[%s3628 + $0x8] sm:$0xff]
    %v3631 = vld [vmem:[%s3628 + $0x10] sm:$0xff]
    %v3632 = vld [vmem:[%s3628 + $0x18] sm:$0xff]
    %v3633 = vld [vmem:[%s3628 + $0x20] sm:$0xff]
    %v3634 = vld [vmem:[%s3628 + $0x28] sm:$0xff]
    %v3635 = vld [vmem:[%s3628 + $0x30] sm:$0xff]
    %v3636 = vld [vmem:[%s3628 + $0x38] sm:$0xff]
    %v3637 = vld [vmem:[%s5] sm:$0xff]
    %v3638 = vld [vmem:[%s5 + $0x8] sm:$0xff]
    %v3639 = vld [vmem:[%s5 + $0x10] sm:$0xff]
    %v3640 = vld [vmem:[%s5 + $0x18] sm:$0xff]
    %v3641 = vld [vmem:[%s5 + $0x20] sm:$0xff]
    %v3642 = vld [vmem:[%s5 + $0x28] sm:$0xff]
    %v3643 = vld [vmem:[%s5 + $0x30] sm:$0xff]
    %v3644 = vld [vmem:[%s5 + $0x38] sm:$0xff]
    %v3645 = vld [vmem:[%s5 + $0x40] sm:$0xff]
    %v3646 = vld [vmem:[%s5 + $0x48] sm:$0xff]
    %v3647 = vld [vmem:[%s5 + $0x50] sm:$0xff]
    %v3648 = vld [vmem:[%s5 + $0x58] sm:$0xff]
    %v3649 = vld [vmem:[%s5 + $0x60] sm:$0xff]
    %v3650 = vld [vmem:[%s5 + $0x68] sm:$0xff]
    %v3651 = vld [vmem:[%s5 + $0x70] sm:$0xff]
    %v3652 = vld [vmem:[%s5 + $0x78] sm:$0xff]
    %v3653 = vld [vmem:[%s5 + $0x80] sm:$0xff]
    %v3654 = vld [vmem:[%s5 + $0x88] sm:$0xff]
    %v3655 = vld [vmem:[%s5 + $0x90] sm:$0xff]
    %v3656 = vld [vmem:[%s5 + $0x98] sm:$0xff]
    %v3657 = vld [vmem:[%s5 + $0xa0] sm:$0xff]
    %v3658 = vld [vmem:[%s5 + $0xa8] sm:$0xff]
    %v3659 = vld [vmem:[%s5 + $0xb0] sm:$0xff]
    %v3660 = vld [vmem:[%s5 + $0xb8] sm:$0xff]
    %v3661 = vld [vmem:[%s5 + $0xc0] sm:$0xff]
    %v3662 = vld [vmem:[%s5 + $0xc8] sm:$0xff]
    %v3663 = vld [vmem:[%s5 + $0xd0] sm:$0xff]
    %v3664 = vld [vmem:[%s5 + $0xd8] sm:$0xff]
    %v3665 = vld [vmem:[%s5 + $0xe0] sm:$0xff]
    %v3666 = vld [vmem:[%s5 + $0xe8] sm:$0xff]
    %v3667 = vld [vmem:[%s5 + $0xf0] sm:$0xff]
    %v3668 = vld [vmem:[%s5 + $0xf8] sm:$0xff]
    %v3671 = vunpack.c.l.b16 %v3621
    %v3672 = vunpack.c.l.b16 %v3622
    %v3673 = vpack.c.b16 %v3672, %v3671
    %v3707 = vunpack.c.l.b16 %v3637
    %v3708 = vunpack.c.h.b16 %v3637
    %v3709 = vunpack.c.l.b16 %v3638
    %v3710 = vunpack.c.h.b16 %v3638
    %v3711 = vunpack.c.l.b16 %v3639
    %v3712 = vunpack.c.h.b16 %v3639
    %v3713 = vunpack.c.l.b16 %v3640
    %v3714 = vunpack.c.h.b16 %v3640
    %v3715 = vunpack.c.l.b16 %v3641
    %v3716 = vunpack.c.h.b16 %v3641
    %v3717 = vunpack.c.l.b16 %v3642
    %v3718 = vunpack.c.h.b16 %v3642
    %v3719 = vunpack.c.l.b16 %v3643
    %v3720 = vunpack.c.h.b16 %v3643
    %v3721 = vunpack.c.l.b16 %v3644
    %v3722 = vunpack.c.h.b16 %v3644
    %v3723 = vunpack.c.l.b16 %v3645
    %v3724 = vunpack.c.h.b16 %v3645
    %v3725 = vunpack.c.l.b16 %v3646
    %v3726 = vunpack.c.h.b16 %v3646
    %v3727 = vunpack.c.l.b16 %v3647
    %v3728 = vunpack.c.h.b16 %v3647
    %v3729 = vunpack.c.l.b16 %v3648
    %v3730 = vunpack.c.h.b16 %v3648
    %v3731 = vunpack.c.l.b16 %v3649
    %v3732 = vunpack.c.h.b16 %v3649
    %v3733 = vunpack.c.l.b16 %v3650
    %v3734 = vunpack.c.h.b16 %v3650
    %v3735 = vunpack.c.l.b16 %v3651
    %v3736 = vunpack.c.h.b16 %v3651
    %v3737 = vunpack.c.l.b16 %v3652
    %v3738 = vunpack.c.h.b16 %v3652
    %v3739 = vunpack.c.l.b16 %v3653
    %v3740 = vunpack.c.h.b16 %v3653
    %v3741 = vunpack.c.l.b16 %v3654
    %v3742 = vunpack.c.h.b16 %v3654
    %v3743 = vunpack.c.l.b16 %v3655
    %v3744 = vunpack.c.h.b16 %v3655
    %v3745 = vunpack.c.l.b16 %v3656
    %v3746 = vunpack.c.h.b16 %v3656
    %v3747 = vunpack.c.l.b16 %v3657
    %v3748 = vunpack.c.h.b16 %v3657
    %v3749 = vunpack.c.l.b16 %v3658
    %v3750 = vunpack.c.h.b16 %v3658
    %v3751 = vunpack.c.l.b16 %v3659
    %v3752 = vunpack.c.h.b16 %v3659
    %v3753 = vunpack.c.l.b16 %v3660
    %v3754 = vunpack.c.h.b16 %v3660
    %v3755 = vunpack.c.l.b16 %v3661
    %v3756 = vunpack.c.h.b16 %v3661
    %v3757 = vunpack.c.l.b16 %v3662
    %v3758 = vunpack.c.h.b16 %v3662
    %v3759 = vunpack.c.l.b16 %v3663
    %v3760 = vunpack.c.h.b16 %v3663
    %v3761 = vunpack.c.l.b16 %v3664
    %v3762 = vunpack.c.h.b16 %v3664
    %v3763 = vunpack.c.l.b16 %v3665
    %v3764 = vunpack.c.h.b16 %v3665
    %v3765 = vunpack.c.l.b16 %v3666
    %v3766 = vunpack.c.h.b16 %v3666
    %v3767 = vunpack.c.l.b16 %v3667
    %v3768 = vunpack.c.h.b16 %v3667
    %v3769 = vunpack.c.l.b16 %v3668
    %v3770 = vunpack.c.h.b16 %v3668
    %v3771 = vpack.c.b16 %v3711, %v3707
    %v3772 = vpack.c.b16 %v3712, %v3708
    %v3773 = vpack.c.b16 %v3713, %v3709
    %v3774 = vpack.c.b16 %v3714, %v3710
    %v3775 = vpack.c.b16 %v3719, %v3715
    %v3776 = vpack.c.b16 %v3720, %v3716
    %v3777 = vpack.c.b16 %v3721, %v3717
    %v3778 = vpack.c.b16 %v3722, %v3718
    %v3779 = vpack.c.b16 %v3727, %v3723
    %v3780 = vpack.c.b16 %v3728, %v3724
    %v3781 = vpack.c.b16 %v3729, %v3725
    %v3782 = vpack.c.b16 %v3730, %v3726
    %v3783 = vpack.c.b16 %v3735, %v3731
    %v3784 = vpack.c.b16 %v3736, %v3732
    %v3785 = vpack.c.b16 %v3737, %v3733
    %v3786 = vpack.c.b16 %v3738, %v3734
    %v3787 = vpack.c.b16 %v3743, %v3739
    %v3788 = vpack.c.b16 %v3744, %v3740
    %v3789 = vpack.c.b16 %v3745, %v3741
    %v3790 = vpack.c.b16 %v3746, %v3742
    %v3791 = vpack.c.b16 %v3751, %v3747
    %v3792 = vpack.c.b16 %v3752, %v3748
    %v3793 = vpack.c.b16 %v3753, %v3749
    %v3794 = vpack.c.b16 %v3754, %v3750
    %v3795 = vpack.c.b16 %v3759, %v3755
    %v3796 = vpack.c.b16 %v3760, %v3756
    %v3797 = vpack.c.b16 %v3761, %v3757
    %v3798 = vpack.c.b16 %v3762, %v3758
    %v3799 = vpack.c.b16 %v3767, %v3763
    %v3800 = vpack.c.b16 %v3768, %v3764
    %v3801 = vpack.c.b16 %v3769, %v3765
    %v3802 = vpack.c.b16 %v3770, %v3766
    %3835 = vmatpush.bf16.msra.mxu0 %v3799
    %3836 = vmatpush.bf16.msra.mxu0 %v3795
    %3837 = vmatpush.bf16.msra.mxu0 %v3791
    %3838 = vmatpush.bf16.msra.mxu0 %v3787
    %3839 = vmatpush.bf16.msra.mxu0 %v3783
    %3840 = vmatpush.bf16.msra.mxu0 %v3779
    %3841 = vmatpush.bf16.msra.mxu0 %v3775
    %3842 = vmatpush.bf16.msra.mxu0 %v3771
    %3843 = vmatmul.bf16.gmra.mxu0 %v3673
    %v3844 = vpop.f32.mrf.mxu0
    %v3845 = vadd.f32 0.0, %v3844
    %v3846 = vpop.f32.mrf.mxu0
    %v3847 = vadd.f32 0.0, %v3846
    %3848 = vdwg.mxu0
    %3849 = vmatpush.bf16.msra.mxu0 %v3800
    %3850 = vmatpush.bf16.msra.mxu0 %v3796
    %3851 = vmatpush.bf16.msra.mxu0 %v3792
    %3852 = vmatpush.bf16.msra.mxu0 %v3788
    %3853 = vmatpush.bf16.msra.mxu0 %v3784
    %3854 = vmatpush.bf16.msra.mxu0 %v3780
    %3855 = vmatpush.bf16.msra.mxu0 %v3776
    %3856 = vmatpush.bf16.msra.mxu0 %v3772
    %3857 = vmatmul.bf16.gmra.mxu0 %v3673
    %v3858 = vpop.f32.mrf.mxu0
    %v3859 = vadd.f32 0.0, %v3858
    %v3860 = vpop.f32.mrf.mxu0
    %v3861 = vadd.f32 0.0, %v3860
    %3862 = vdwg.mxu0
    %3863 = vmatpush.bf16.msra.mxu0 %v3801
    %3864 = vmatpush.bf16.msra.mxu0 %v3797
    %3865 = vmatpush.bf16.msra.mxu0 %v3793
    %3866 = vmatpush.bf16.msra.mxu0 %v3789
    %3867 = vmatpush.bf16.msra.mxu0 %v3785
    %3868 = vmatpush.bf16.msra.mxu0 %v3781
    %3869 = vmatpush.bf16.msra.mxu0 %v3777
    %3870 = vmatpush.bf16.msra.mxu0 %v3773
    %3871 = vmatmul.bf16.gmra.mxu0 %v3673
    %v3872 = vpop.f32.mrf.mxu0
    %v3873 = vadd.f32 0.0, %v3872
    %v3874 = vpop.f32.mrf.mxu0
    %v3875 = vadd.f32 0.0, %v3874
    %3876 = vdwg.mxu0
    %3877 = vmatpush.bf16.msra.mxu0 %v3802
    %3878 = vmatpush.bf16.msra.mxu0 %v3798
    %3879 = vmatpush.bf16.msra.mxu0 %v3794
    %3880 = vmatpush.bf16.msra.mxu0 %v3790
    %3881 = vmatpush.bf16.msra.mxu0 %v3786
    %3882 = vmatpush.bf16.msra.mxu0 %v3782
    %3883 = vmatpush.bf16.msra.mxu0 %v3778
    %3884 = vmatpush.bf16.msra.mxu0 %v3774
    %3885 = vmatmul.bf16.gmra.mxu0 %v3673
    %v3886 = vpop.f32.mrf.mxu0
    %v3887 = vadd.f32 0.0, %v3886
    %v3888 = vpop.f32.mrf.mxu0
    %v3889 = vadd.f32 0.0, %v3888
    %3890 = vdwg.mxu0
    %v3891 = vadd.f32 %v3629, %v3845
    %v3892 = vadd.f32 %v3630, %v3859
    %v3893 = vadd.f32 %v3631, %v3873
    %v3894 = vadd.f32 %v3632, %v3887
    %v3895 = vadd.f32 %v3633, %v3847
    %v3896 = vadd.f32 %v3634, %v3861
    %v3897 = vadd.f32 %v3635, %v3875
    %v3898 = vadd.f32 %v3636, %v3889
    %v3899 = vxor.u32 %v3891, 2147483648
    %v3900 = vxor.u32 %v3892, 2147483648
    %v3901 = vxor.u32 %v3893, 2147483648
    %v3902 = vxor.u32 %v3895, 2147483648
    %v3903 = vxor.u32 %v3896, 2147483648
    %v3904 = vxor.u32 %v3897, 2147483648
    %v3905 = vmul.f32 %v3899, 1.442695
    %v3906 = vpow.pop %v3905
    %v3907 = vmul.f32 %v3900, 1.442695
    %v3908 = vpow.pop %v3907
    %v3909 = vmul.f32 %v3901, 1.442695
    %v3910 = vpow.pop %v3909
    %v3911 = vmul.f32 %v3902, 1.442695
    %v3912 = vpow.pop %v3911
    %v3913 = vmul.f32 %v3903, 1.442695
    %v3914 = vpow.pop %v3913
    %v3915 = vmul.f32 %v3904, 1.442695
    %v3916 = vpow.pop %v3915
    %v3917 = vadd.f32 %v3906, 1.0
    %v3918 = vadd.f32 %v3908, 1.0
    %v3919 = vadd.f32 %v3910, 1.0
    %v3920 = vadd.f32 %v3912, 1.0
    %v3921 = vadd.f32 %v3914, 1.0
    %v3922 = vadd.f32 %v3916, 1.0
    %v3923 = vrcp.pop %v3917
    %v3924 = vmul.f32 %v3917, %v3923
    %v3925 = vsub.f32 1.0, %v3924
    %v3926 = vmul.f32 %v3923, %v3925
    %v3927 = vadd.f32 %v3923, %v3926
    %vm3928 = vweird.f32 %v3917
    %vm3929 = vweird.f32 %v3923
    %vm3930 = vmor %vm3928, %vm3929
    %v3931 = vsel %vm3930, %v3923, %v3927
    %v3932 = vand.u32 2147483647, %v3917
    %vm3933 = vcmp.eq.f32.partialorder %v3932, 8.507059e+37
    %v3934 = vand.u32 %v3917, 2147483648
    %v3935 = vor.u32 1.1754944e-38, %v3934
    %v3936 = vsel %vm3933, %v3935, %v3931
    %v3937 = vmul.f32 1.0, %v3936
    %v3938 = vrcp.pop %v3918
    %v3939 = vmul.f32 %v3918, %v3938
    %v3940 = vsub.f32 1.0, %v3939
    %v3941 = vmul.f32 %v3938, %v3940
    %v3942 = vadd.f32 %v3938, %v3941
    %vm3943 = vweird.f32 %v3918
    %vm3944 = vweird.f32 %v3938
    %vm3945 = vmor %vm3943, %vm3944
    %v3946 = vsel %vm3945, %v3938, %v3942
    %v3947 = vand.u32 2147483647, %v3918
    %vm3948 = vcmp.eq.f32.partialorder %v3947, 8.507059e+37
    %v3949 = vand.u32 %v3918, 2147483648
    %v3950 = vor.u32 1.1754944e-38, %v3949
    %v3951 = vsel %vm3948, %v3950, %v3946
    %v3952 = vmul.f32 1.0, %v3951
    %v3953 = vrcp.pop %v3919
    %v3954 = vmul.f32 %v3919, %v3953
    %v3955 = vsub.f32 1.0, %v3954
    %v3956 = vmul.f32 %v3953, %v3955
    %v3957 = vadd.f32 %v3953, %v3956
    %vm3958 = vweird.f32 %v3919
    %vm3959 = vweird.f32 %v3953
    %vm3960 = vmor %vm3958, %vm3959
    %v3961 = vsel %vm3960, %v3953, %v3957
    %v3962 = vand.u32 2147483647, %v3919
    %vm3963 = vcmp.eq.f32.partialorder %v3962, 8.507059e+37
    %v3964 = vand.u32 %v3919, 2147483648
    %v3965 = vor.u32 1.1754944e-38, %v3964
    %v3966 = vsel %vm3963, %v3965, %v3961
    %v3967 = vmul.f32 1.0, %v3966
    %v3968 = vrcp.pop %v3920
    %v3969 = vmul.f32 %v3920, %v3968
    %v3970 = vsub.f32 1.0, %v3969
    %v3971 = vmul.f32 %v3968, %v3970
    %v3972 = vadd.f32 %v3968, %v3971
    %vm3973 = vweird.f32 %v3920
    %vm3974 = vweird.f32 %v3968
    %vm3975 = vmor %vm3973, %vm3974
    %v3976 = vsel %vm3975, %v3968, %v3972
    %v3977 = vand.u32 2147483647, %v3920
    %vm3978 = vcmp.eq.f32.partialorder %v3977, 8.507059e+37
    %v3979 = vand.u32 %v3920, 2147483648
    %v3980 = vor.u32 1.1754944e-38, %v3979
    %v3981 = vsel %vm3978, %v3980, %v3976
    %v3982 = vmul.f32 1.0, %v3981
    %v3983 = vrcp.pop %v3921
    %v3984 = vmul.f32 %v3921, %v3983
    %v3985 = vsub.f32 1.0, %v3984
    %v3986 = vmul.f32 %v3983, %v3985
    %v3987 = vadd.f32 %v3983, %v3986
    %vm3988 = vweird.f32 %v3921
    %vm3989 = vweird.f32 %v3983
    %vm3990 = vmor %vm3988, %vm3989
    %v3991 = vsel %vm3990, %v3983, %v3987
    %v3992 = vand.u32 2147483647, %v3921
    %vm3993 = vcmp.eq.f32.partialorder %v3992, 8.507059e+37
    %v3994 = vand.u32 %v3921, 2147483648
    %v3995 = vor.u32 1.1754944e-38, %v3994
    %v3996 = vsel %vm3993, %v3995, %v3991
    %v3997 = vmul.f32 1.0, %v3996
    %v3998 = vrcp.pop %v3922
    %v3999 = vmul.f32 %v3922, %v3998
    %v4000 = vsub.f32 1.0, %v3999
    %v4001 = vmul.f32 %v3998, %v4000
    %v4002 = vadd.f32 %v3998, %v4001
    %vm4003 = vweird.f32 %v3922
    %vm4004 = vweird.f32 %v3998
    %vm4005 = vmor %vm4003, %vm4004
    %v4006 = vsel %vm4005, %v3998, %v4002
    %v4007 = vand.u32 2147483647, %v3922
    %vm4008 = vcmp.eq.f32.partialorder %v4007, 8.507059e+37
    %v4009 = vand.u32 %v3922, 2147483648
    %v4010 = vor.u32 1.1754944e-38, %v4009
    %v4011 = vsel %vm4008, %v4010, %v4006
    %v4012 = vmul.f32 1.0, %v4011
    %v4013 = vtanh.pop %v3894
    %v4014 = vtanh.pop %v3898
    %v4015 = vmul.f32 %v3952, %v3615
    %v4016 = vmul.f32 %v3997, %v3616
    %v4017 = vmul.f32 %v3937, %v4013
    %v4018 = vmul.f32 %v3982, %v4014
    %v4019 = vadd.f32 %v4015, %v4017
    %v4020 = vadd.f32 %v4016, %v4018
    %v4021 = vtanh.pop %v4019
    %v4022 = vtanh.pop %v4020
    %v4023 = vmul.f32 %v3967, %v4021
    %v4024 = vmul.f32 %v4012, %v4022
    %v4025 = vpack.c.bf16 %v4023, %v4023
    %v4026 = vpack.c.bf16 %v4024, %v4024
    %s4027 = scalar_lea.vmem [#allocation3], 56
    %4028 = vst [vmem:[%s4027] sm:$0xf] %v4025
    %4029 = vst [vmem:[%s4027 + $0x4] sm:$0xf] %v4026
    %v4030 = vld [vmem:[#allocation3] sm:$0xf]
    %v4031 = vld [vmem:[#allocation3 + $0x4] sm:$0xf]
    %v4032 = vld [vmem:[#allocation3 + $0x8] sm:$0xf]
    %v4033 = vld [vmem:[#allocation3 + $0xc] sm:$0xf]
    %v4034 = vld [vmem:[#allocation3 + $0x10] sm:$0xf]
    %v4035 = vld [vmem:[#allocation3 + $0x14] sm:$0xf]
    %v4036 = vld [vmem:[#allocation3 + $0x18] sm:$0xf]
    %v4037 = vld [vmem:[#allocation3 + $0x1c] sm:$0xf]
    %v4038 = vld [vmem:[#allocation3 + $0x20] sm:$0xf]
    %v4039 = vld [vmem:[#allocation3 + $0x24] sm:$0xf]
    %v4040 = vld [vmem:[#allocation3 + $0x28] sm:$0xf]
    %v4041 = vld [vmem:[#allocation3 + $0x2c] sm:$0xf]
    %v4042 = vld [vmem:[#allocation3 + $0x30] sm:$0xf]
    %v4043 = vld [vmem:[#allocation3 + $0x34] sm:$0xf]
    %v4044 = vld [vmem:[#allocation3 + $0x38] sm:$0xf]
    %v4045 = vld [vmem:[#allocation3 + $0x3c] sm:$0xf]
    %v4046 = vld [vmem:[%s8] sm:$0xff]
    %v4047 = vld [vmem:[%s8 + $0x8] sm:$0xff]
    %v4048 = vld [vmem:[%s8 + $0x10] sm:$0xff]
    %v4049 = vld [vmem:[%s8 + $0x18] sm:$0xff]
    %v4050 = vld [vmem:[%s8 + $0x20] sm:$0xff]
    %v4051 = vld [vmem:[%s8 + $0x28] sm:$0xff]
    %v4052 = vld [vmem:[%s8 + $0x30] sm:$0xff]
    %v4053 = vld [vmem:[%s8 + $0x38] sm:$0xff]
    %v4054 = vld [vmem:[%s8 + $0x40] sm:$0xff]
    %v4055 = vld [vmem:[%s8 + $0x48] sm:$0xff]
    %v4056 = vld [vmem:[%s8 + $0x50] sm:$0xff]
    %v4057 = vld [vmem:[%s8 + $0x58] sm:$0xff]
    %v4058 = vld [vmem:[%s8 + $0x60] sm:$0xff]
    %v4059 = vld [vmem:[%s8 + $0x68] sm:$0xff]
    %v4060 = vld [vmem:[%s8 + $0x70] sm:$0xff]
    %v4061 = vld [vmem:[%s8 + $0x78] sm:$0xff]
    %v4078 = vunpack.c.l.b16 %v4030
    %v4079 = vunpack.c.l.b16 %v4031
    %v4080 = vunpack.c.l.b16 %v4032
    %v4081 = vunpack.c.l.b16 %v4033
    %v4082 = vunpack.c.l.b16 %v4034
    %v4083 = vunpack.c.l.b16 %v4035
    %v4084 = vunpack.c.l.b16 %v4036
    %v4085 = vunpack.c.l.b16 %v4037
    %v4086 = vunpack.c.l.b16 %v4038
    %v4087 = vunpack.c.l.b16 %v4039
    %v4088 = vunpack.c.l.b16 %v4040
    %v4089 = vunpack.c.l.b16 %v4041
    %v4090 = vunpack.c.l.b16 %v4042
    %v4091 = vunpack.c.l.b16 %v4043
    %v4092 = vunpack.c.l.b16 %v4044
    %v4093 = vunpack.c.l.b16 %v4045
    %v4094 = vpack.c.b16 %v4079, %v4078
    %v4095 = vpack.c.b16 %v4081, %v4080
    %v4096 = vpack.c.b16 %v4083, %v4082
    %v4097 = vpack.c.b16 %v4085, %v4084
    %v4098 = vpack.c.b16 %v4087, %v4086
    %v4099 = vpack.c.b16 %v4089, %v4088
    %v4100 = vpack.c.b16 %v4091, %v4090
    %v4101 = vpack.c.b16 %v4093, %v4092
    %v4126 = vunpack.c.l.b16 %v4046
    %v4127 = vunpack.c.h.b16 %v4046
    %v4128 = vunpack.c.l.b16 %v4047
    %v4129 = vunpack.c.h.b16 %v4047
    %v4130 = vunpack.c.l.b16 %v4048
    %v4131 = vunpack.c.h.b16 %v4048
    %v4132 = vunpack.c.l.b16 %v4049
    %v4133 = vunpack.c.h.b16 %v4049
    %v4134 = vunpack.c.l.b16 %v4050
    %v4135 = vunpack.c.h.b16 %v4050
    %v4136 = vunpack.c.l.b16 %v4051
    %v4137 = vunpack.c.h.b16 %v4051
    %v4138 = vunpack.c.l.b16 %v4052
    %v4139 = vunpack.c.h.b16 %v4052
    %v4140 = vunpack.c.l.b16 %v4053
    %v4141 = vunpack.c.h.b16 %v4053
    %v4142 = vunpack.c.l.b16 %v4054
    %v4143 = vunpack.c.h.b16 %v4054
    %v4144 = vunpack.c.l.b16 %v4055
    %v4145 = vunpack.c.h.b16 %v4055
    %v4146 = vunpack.c.l.b16 %v4056
    %v4147 = vunpack.c.h.b16 %v4056
    %v4148 = vunpack.c.l.b16 %v4057
    %v4149 = vunpack.c.h.b16 %v4057
    %v4150 = vunpack.c.l.b16 %v4058
    %v4151 = vunpack.c.h.b16 %v4058
    %v4152 = vunpack.c.l.b16 %v4059
    %v4153 = vunpack.c.h.b16 %v4059
    %v4154 = vunpack.c.l.b16 %v4060
    %v4155 = vunpack.c.h.b16 %v4060
    %v4156 = vunpack.c.l.b16 %v4061
    %v4157 = vunpack.c.h.b16 %v4061
    %v4158 = vpack.c.b16 %v4128, %v4126
    %v4159 = vpack.c.b16 %v4129, %v4127
    %v4160 = vpack.c.b16 %v4132, %v4130
    %v4161 = vpack.c.b16 %v4133, %v4131
    %v4162 = vpack.c.b16 %v4136, %v4134
    %v4163 = vpack.c.b16 %v4137, %v4135
    %v4164 = vpack.c.b16 %v4140, %v4138
    %v4165 = vpack.c.b16 %v4141, %v4139
    %v4166 = vpack.c.b16 %v4144, %v4142
    %v4167 = vpack.c.b16 %v4145, %v4143
    %v4168 = vpack.c.b16 %v4148, %v4146
    %v4169 = vpack.c.b16 %v4149, %v4147
    %v4170 = vpack.c.b16 %v4152, %v4150
    %v4171 = vpack.c.b16 %v4153, %v4151
    %v4172 = vpack.c.b16 %v4156, %v4154
    %v4173 = vpack.c.b16 %v4157, %v4155
    %4190 = vmatpush.bf16.msra.mxu0 %v4172
    %4191 = vmatpush.bf16.msra.mxu0 %v4170
    %4192 = vmatpush.bf16.msra.mxu0 %v4168
    %4193 = vmatpush.bf16.msra.mxu0 %v4166
    %4194 = vmatpush.bf16.msra.mxu0 %v4164
    %4195 = vmatpush.bf16.msra.mxu0 %v4162
    %4196 = vmatpush.bf16.msra.mxu0 %v4160
    %4197 = vmatpush.bf16.msra.mxu0 %v4158
    %4198 = vmatmul.bf16.gmra.mxu0 %v4094
    %v4199 = vpop.f32.mrf.mxu0
    %v4200 = vadd.f32 0.0, %v4199
    %v4201 = vpop.f32.mrf.mxu0
    %v4202 = vadd.f32 0.0, %v4201
    %4203 = vmatmul.bf16.gmra.mxu0 %v4095
    %v4204 = vpop.f32.mrf.mxu0
    %v4205 = vadd.f32 0.0, %v4204
    %v4206 = vpop.f32.mrf.mxu0
    %v4207 = vadd.f32 0.0, %v4206
    %4208 = vmatmul.bf16.gmra.mxu0 %v4096
    %v4209 = vpop.f32.mrf.mxu0
    %v4210 = vadd.f32 0.0, %v4209
    %v4211 = vpop.f32.mrf.mxu0
    %v4212 = vadd.f32 0.0, %v4211
    %4213 = vmatmul.bf16.gmra.mxu0 %v4097
    %v4214 = vpop.f32.mrf.mxu0
    %v4215 = vadd.f32 0.0, %v4214
    %v4216 = vpop.f32.mrf.mxu0
    %v4217 = vadd.f32 0.0, %v4216
    %4218 = vmatmul.bf16.gmra.mxu0 %v4098
    %v4219 = vpop.f32.mrf.mxu0
    %v4220 = vadd.f32 0.0, %v4219
    %v4221 = vpop.f32.mrf.mxu0
    %v4222 = vadd.f32 0.0, %v4221
    %4223 = vmatmul.bf16.gmra.mxu0 %v4099
    %v4224 = vpop.f32.mrf.mxu0
    %v4225 = vadd.f32 0.0, %v4224
    %v4226 = vpop.f32.mrf.mxu0
    %v4227 = vadd.f32 0.0, %v4226
    %4228 = vmatmul.bf16.gmra.mxu0 %v4100
    %v4229 = vpop.f32.mrf.mxu0
    %v4230 = vadd.f32 0.0, %v4229
    %v4231 = vpop.f32.mrf.mxu0
    %v4232 = vadd.f32 0.0, %v4231
    %4233 = vmatmul.bf16.gmra.mxu0 %v4101
    %v4234 = vpop.f32.mrf.mxu0
    %v4235 = vadd.f32 0.0, %v4234
    %v4236 = vpop.f32.mrf.mxu0
    %v4237 = vadd.f32 0.0, %v4236
    %4238 = vdwg.mxu0
    %4239 = vmatpush.bf16.msra.mxu0 %v4173
    %4240 = vmatpush.bf16.msra.mxu0 %v4171
    %4241 = vmatpush.bf16.msra.mxu0 %v4169
    %4242 = vmatpush.bf16.msra.mxu0 %v4167
    %4243 = vmatpush.bf16.msra.mxu0 %v4165
    %4244 = vmatpush.bf16.msra.mxu0 %v4163
    %4245 = vmatpush.bf16.msra.mxu0 %v4161
    %4246 = vmatpush.bf16.msra.mxu0 %v4159
    %4247 = vmatmul.bf16.gmra.mxu0 %v4094
    %v4248 = vpop.f32.mrf.mxu0
    %v4249 = vadd.f32 0.0, %v4248
    %v4250 = vpop.f32.mrf.mxu0
    %v4251 = vadd.f32 0.0, %v4250
    %4252 = vmatmul.bf16.gmra.mxu0 %v4095
    %v4253 = vpop.f32.mrf.mxu0
    %v4254 = vadd.f32 0.0, %v4253
    %v4255 = vpop.f32.mrf.mxu0
    %v4256 = vadd.f32 0.0, %v4255
    %4257 = vmatmul.bf16.gmra.mxu0 %v4096
    %v4258 = vpop.f32.mrf.mxu0
    %v4259 = vadd.f32 0.0, %v4258
    %v4260 = vpop.f32.mrf.mxu0
    %v4261 = vadd.f32 0.0, %v4260
    %4262 = vmatmul.bf16.gmra.mxu0 %v4097
    %v4263 = vpop.f32.mrf.mxu0
    %v4264 = vadd.f32 0.0, %v4263
    %v4265 = vpop.f32.mrf.mxu0
    %v4266 = vadd.f32 0.0, %v4265
    %4267 = vmatmul.bf16.gmra.mxu0 %v4098
    %v4268 = vpop.f32.mrf.mxu0
    %v4269 = vadd.f32 0.0, %v4268
    %v4270 = vpop.f32.mrf.mxu0
    %v4271 = vadd.f32 0.0, %v4270
    %4272 = vmatmul.bf16.gmra.mxu0 %v4099
    %v4273 = vpop.f32.mrf.mxu0
    %v4274 = vadd.f32 0.0, %v4273
    %v4275 = vpop.f32.mrf.mxu0
    %v4276 = vadd.f32 0.0, %v4275
    %4277 = vmatmul.bf16.gmra.mxu0 %v4100
    %v4278 = vpop.f32.mrf.mxu0
    %v4279 = vadd.f32 0.0, %v4278
    %v4280 = vpop.f32.mrf.mxu0
    %v4281 = vadd.f32 0.0, %v4280
    %4282 = vmatmul.bf16.gmra.mxu0 %v4101
    %v4283 = vpop.f32.mrf.mxu0
    %v4284 = vadd.f32 0.0, %v4283
    %v4285 = vpop.f32.mrf.mxu0
    %v4286 = vadd.f32 0.0, %v4285
    %4287 = vdwg.mxu0
    %v4288 = vadd.f32 %v4200, %v261
    %v4289 = vadd.f32 %v4249, %v275
    %v4290 = vadd.f32 %v4202, %v263
    %v4291 = vadd.f32 %v4251, %v277
    %v4292 = vadd.f32 %v4205, %v261
    %v4293 = vadd.f32 %v4254, %v275
    %v4294 = vadd.f32 %v4207, %v263
    %v4295 = vadd.f32 %v4256, %v277
    %v4296 = vadd.f32 %v4210, %v261
    %v4297 = vadd.f32 %v4259, %v275
    %v4298 = vadd.f32 %v4212, %v263
    %v4299 = vadd.f32 %v4261, %v277
    %v4300 = vadd.f32 %v4215, %v261
    %v4301 = vadd.f32 %v4264, %v275
    %v4302 = vadd.f32 %v4217, %v263
    %v4303 = vadd.f32 %v4266, %v277
    %v4304 = vadd.f32 %v4220, %v261
    %v4305 = vadd.f32 %v4269, %v275
    %v4306 = vadd.f32 %v4222, %v263
    %v4307 = vadd.f32 %v4271, %v277
    %v4308 = vadd.f32 %v4225, %v261
    %v4309 = vadd.f32 %v4274, %v275
    %v4310 = vadd.f32 %v4227, %v263
    %v4311 = vadd.f32 %v4276, %v277
    %v4312 = vadd.f32 %v4230, %v261
    %v4313 = vadd.f32 %v4279, %v275
    %v4314 = vadd.f32 %v4232, %v263
    %v4315 = vadd.f32 %v4281, %v277
    %v4316 = vadd.f32 %v4235, %v261
    %v4317 = vadd.f32 %v4284, %v275
    %v4318 = vadd.f32 %v4237, %v263
    %v4319 = vadd.f32 %v4286, %v277
    %vm4320 = vcmp.gt.f32.partialorder %v4288, 0.0
    %vm4321 = vcmp.gt.f32.partialorder %v4289, 0.0
    %vm4322 = vcmp.gt.f32.partialorder %v4290, 0.0
    %vm4323 = vcmp.gt.f32.partialorder %v4291, 0.0
    %vm4324 = vcmp.gt.f32.partialorder %v4292, 0.0
    %vm4325 = vcmp.gt.f32.partialorder %v4293, 0.0
    %vm4326 = vcmp.gt.f32.partialorder %v4294, 0.0
    %vm4327 = vcmp.gt.f32.partialorder %v4295, 0.0
    %vm4328 = vcmp.gt.f32.partialorder %v4296, 0.0
    %vm4329 = vcmp.gt.f32.partialorder %v4297, 0.0
    %vm4330 = vcmp.gt.f32.partialorder %v4298, 0.0
    %vm4331 = vcmp.gt.f32.partialorder %v4299, 0.0
    %vm4332 = vcmp.gt.f32.partialorder %v4300, 0.0
    %vm4333 = vcmp.gt.f32.partialorder %v4301, 0.0
    %vm4334 = vcmp.gt.f32.partialorder %v4302, 0.0
    %vm4335 = vcmp.gt.f32.partialorder %v4303, 0.0
    %vm4336 = vcmp.gt.f32.partialorder %v4304, 0.0
    %vm4337 = vcmp.gt.f32.partialorder %v4305, 0.0
    %vm4338 = vcmp.gt.f32.partialorder %v4306, 0.0
    %vm4339 = vcmp.gt.f32.partialorder %v4307, 0.0
    %vm4340 = vcmp.gt.f32.partialorder %v4308, 0.0
    %vm4341 = vcmp.gt.f32.partialorder %v4309, 0.0
    %vm4342 = vcmp.gt.f32.partialorder %v4310, 0.0
    %vm4343 = vcmp.gt.f32.partialorder %v4311, 0.0
    %vm4344 = vcmp.gt.f32.partialorder %v4312, 0.0
    %vm4345 = vcmp.gt.f32.partialorder %v4313, 0.0
    %vm4346 = vcmp.gt.f32.partialorder %v4314, 0.0
    %vm4347 = vcmp.gt.f32.partialorder %v4315, 0.0
    %vm4348 = vcmp.gt.f32.partialorder %v4316, 0.0
    %vm4349 = vcmp.gt.f32.partialorder %v4317, 0.0
    %vm4350 = vcmp.gt.f32.partialorder %v4318, 0.0
    %vm4351 = vcmp.gt.f32.partialorder %v4319, 0.0
    %v4352 = vmul.f32 %v4288, 0.01
    %v4353 = vmul.f32 %v4289, 0.01
    %v4354 = vmul.f32 %v4290, 0.01
    %v4355 = vmul.f32 %v4291, 0.01
    %v4356 = vmul.f32 %v4292, 0.01
    %v4357 = vmul.f32 %v4293, 0.01
    %v4358 = vmul.f32 %v4294, 0.01
    %v4359 = vmul.f32 %v4295, 0.01
    %v4360 = vmul.f32 %v4296, 0.01
    %v4361 = vmul.f32 %v4297, 0.01
    %v4362 = vmul.f32 %v4298, 0.01
    %v4363 = vmul.f32 %v4299, 0.01
    %v4364 = vmul.f32 %v4300, 0.01
    %v4365 = vmul.f32 %v4301, 0.01
    %v4366 = vmul.f32 %v4302, 0.01
    %v4367 = vmul.f32 %v4303, 0.01
    %v4368 = vmul.f32 %v4304, 0.01
    %v4369 = vmul.f32 %v4305, 0.01
    %v4370 = vmul.f32 %v4306, 0.01
    %v4371 = vmul.f32 %v4307, 0.01
    %v4372 = vmul.f32 %v4308, 0.01
    %v4373 = vmul.f32 %v4309, 0.01
    %v4374 = vmul.f32 %v4310, 0.01
    %v4375 = vmul.f32 %v4311, 0.01
    %v4376 = vmul.f32 %v4312, 0.01
    %v4377 = vmul.f32 %v4313, 0.01
    %v4378 = vmul.f32 %v4314, 0.01
    %v4379 = vmul.f32 %v4315, 0.01
    %v4380 = vmul.f32 %v4316, 0.01
    %v4381 = vmul.f32 %v4317, 0.01
    %v4382 = vmul.f32 %v4318, 0.01
    %v4383 = vmul.f32 %v4319, 0.01
    %v4384 = vsel %vm4320, %v4288, %v4352
    %v4385 = vsel %vm4321, %v4289, %v4353
    %v4386 = vsel %vm4322, %v4290, %v4354
    %v4387 = vsel %vm4323, %v4291, %v4355
    %v4388 = vsel %vm4324, %v4292, %v4356
    %v4389 = vsel %vm4325, %v4293, %v4357
    %v4390 = vsel %vm4326, %v4294, %v4358
    %v4391 = vsel %vm4327, %v4295, %v4359
    %v4392 = vsel %vm4328, %v4296, %v4360
    %v4393 = vsel %vm4329, %v4297, %v4361
    %v4394 = vsel %vm4330, %v4298, %v4362
    %v4395 = vsel %vm4331, %v4299, %v4363
    %v4396 = vsel %vm4332, %v4300, %v4364
    %v4397 = vsel %vm4333, %v4301, %v4365
    %v4398 = vsel %vm4334, %v4302, %v4366
    %v4399 = vsel %vm4335, %v4303, %v4367
    %v4400 = vsel %vm4336, %v4304, %v4368
    %v4401 = vsel %vm4337, %v4305, %v4369
    %v4402 = vsel %vm4338, %v4306, %v4370
    %v4403 = vsel %vm4339, %v4307, %v4371
    %v4404 = vsel %vm4340, %v4308, %v4372
    %v4405 = vsel %vm4341, %v4309, %v4373
    %v4406 = vsel %vm4342, %v4310, %v4374
    %v4407 = vsel %vm4343, %v4311, %v4375
    %v4408 = vsel %vm4344, %v4312, %v4376
    %v4409 = vsel %vm4345, %v4313, %v4377
    %v4410 = vsel %vm4346, %v4314, %v4378
    %v4411 = vsel %vm4347, %v4315, %v4379
    %v4412 = vsel %vm4348, %v4316, %v4380
    %v4413 = vsel %vm4349, %v4317, %v4381
    %v4414 = vsel %vm4350, %v4318, %v4382
    %v4415 = vsel %vm4351, %v4319, %v4383
    %v4416 = vpack.c.bf16 %v4386, %v4384
    %v4417 = vpack.c.bf16 %v4387, %v4385
    %v4418 = vpack.c.bf16 %v4390, %v4388
    %v4419 = vpack.c.bf16 %v4391, %v4389
    %v4420 = vpack.c.bf16 %v4394, %v4392
    %v4421 = vpack.c.bf16 %v4395, %v4393
    %v4422 = vpack.c.bf16 %v4398, %v4396
    %v4423 = vpack.c.bf16 %v4399, %v4397
    %v4424 = vpack.c.bf16 %v4402, %v4400
    %v4425 = vpack.c.bf16 %v4403, %v4401
    %v4426 = vpack.c.bf16 %v4406, %v4404
    %v4427 = vpack.c.bf16 %v4407, %v4405
    %v4428 = vpack.c.bf16 %v4410, %v4408
    %v4429 = vpack.c.bf16 %v4411, %v4409
    %v4430 = vpack.c.bf16 %v4414, %v4412
    %v4431 = vpack.c.bf16 %v4415, %v4413
    %v4432 = vld [vmem:[%s10] sm:$0xff]
    %v4433 = vld [vmem:[%s10 + $0x8] sm:$0xff]
    %v4434 = vld [vmem:[%s10 + $0x10] sm:$0xff]
    %v4435 = vld [vmem:[%s10 + $0x18] sm:$0xff]
    %v4436 = vld [vmem:[%s10 + $0x20] sm:$0xff]
    %v4437 = vld [vmem:[%s10 + $0x28] sm:$0xff]
    %v4438 = vld [vmem:[%s10 + $0x30] sm:$0xff]
    %v4439 = vld [vmem:[%s10 + $0x38] sm:$0xff]
    %v4440 = vld [vmem:[%s10 + $0x40] sm:$0xff]
    %v4441 = vld [vmem:[%s10 + $0x48] sm:$0xff]
    %v4442 = vld [vmem:[%s10 + $0x50] sm:$0xff]
    %v4443 = vld [vmem:[%s10 + $0x58] sm:$0xff]
    %v4444 = vld [vmem:[%s10 + $0x60] sm:$0xff]
    %v4445 = vld [vmem:[%s10 + $0x68] sm:$0xff]
    %v4446 = vld [vmem:[%s10 + $0x70] sm:$0xff]
    %v4447 = vld [vmem:[%s10 + $0x78] sm:$0xff]
    %v4448 = vld [vmem:[%s10 + $0x80] sm:$0xff]
    %v4449 = vld [vmem:[%s10 + $0x88] sm:$0xff]
    %v4450 = vld [vmem:[%s10 + $0x90] sm:$0xff]
    %v4451 = vld [vmem:[%s10 + $0x98] sm:$0xff]
    %v4452 = vld [vmem:[%s10 + $0xa0] sm:$0xff]
    %v4453 = vld [vmem:[%s10 + $0xa8] sm:$0xff]
    %v4454 = vld [vmem:[%s10 + $0xb0] sm:$0xff]
    %v4455 = vld [vmem:[%s10 + $0xb8] sm:$0xff]
    %v4456 = vld [vmem:[%s10 + $0xc0] sm:$0xff]
    %v4457 = vld [vmem:[%s10 + $0xc8] sm:$0xff]
    %v4458 = vld [vmem:[%s10 + $0xd0] sm:$0xff]
    %v4459 = vld [vmem:[%s10 + $0xd8] sm:$0xff]
    %v4460 = vld [vmem:[%s10 + $0xe0] sm:$0xff]
    %v4461 = vld [vmem:[%s10 + $0xe8] sm:$0xff]
    %v4462 = vld [vmem:[%s10 + $0xf0] sm:$0xff]
    %v4463 = vld [vmem:[%s10 + $0xf8] sm:$0xff]
    %v4464 = vld [vmem:[%s11] sm:$0x3]
    %v4466 = vperm.slane %v4464, 0
    %v4467 = vperm.slane %v4464, 1
    %v4502 = vunpack.c.l.b16 %v4432
    %v4503 = vunpack.c.h.b16 %v4432
    %v4504 = vunpack.c.l.b16 %v4433
    %v4505 = vunpack.c.h.b16 %v4433
    %v4506 = vunpack.c.l.b16 %v4434
    %v4507 = vunpack.c.h.b16 %v4434
    %v4508 = vunpack.c.l.b16 %v4435
    %v4509 = vunpack.c.h.b16 %v4435
    %v4510 = vunpack.c.l.b16 %v4436
    %v4511 = vunpack.c.h.b16 %v4436
    %v4512 = vunpack.c.l.b16 %v4437
    %v4513 = vunpack.c.h.b16 %v4437
    %v4514 = vunpack.c.l.b16 %v4438
    %v4515 = vunpack.c.h.b16 %v4438
    %v4516 = vunpack.c.l.b16 %v4439
    %v4517 = vunpack.c.h.b16 %v4439
    %v4518 = vunpack.c.l.b16 %v4440
    %v4519 = vunpack.c.h.b16 %v4440
    %v4520 = vunpack.c.l.b16 %v4441
    %v4521 = vunpack.c.h.b16 %v4441
    %v4522 = vunpack.c.l.b16 %v4442
    %v4523 = vunpack.c.h.b16 %v4442
    %v4524 = vunpack.c.l.b16 %v4443
    %v4525 = vunpack.c.h.b16 %v4443
    %v4526 = vunpack.c.l.b16 %v4444
    %v4527 = vunpack.c.h.b16 %v4444
    %v4528 = vunpack.c.l.b16 %v4445
    %v4529 = vunpack.c.h.b16 %v4445
    %v4530 = vunpack.c.l.b16 %v4446
    %v4531 = vunpack.c.h.b16 %v4446
    %v4532 = vunpack.c.l.b16 %v4447
    %v4533 = vunpack.c.h.b16 %v4447
    %v4534 = vunpack.c.l.b16 %v4448
    %v4535 = vunpack.c.h.b16 %v4448
    %v4536 = vunpack.c.l.b16 %v4449
    %v4537 = vunpack.c.h.b16 %v4449
    %v4538 = vunpack.c.l.b16 %v4450
    %v4539 = vunpack.c.h.b16 %v4450
    %v4540 = vunpack.c.l.b16 %v4451
    %v4541 = vunpack.c.h.b16 %v4451
    %v4542 = vunpack.c.l.b16 %v4452
    %v4543 = vunpack.c.h.b16 %v4452
    %v4544 = vunpack.c.l.b16 %v4453
    %v4545 = vunpack.c.h.b16 %v4453
    %v4546 = vunpack.c.l.b16 %v4454
    %v4547 = vunpack.c.h.b16 %v4454
    %v4548 = vunpack.c.l.b16 %v4455
    %v4549 = vunpack.c.h.b16 %v4455
    %v4550 = vunpack.c.l.b16 %v4456
    %v4551 = vunpack.c.h.b16 %v4456
    %v4552 = vunpack.c.l.b16 %v4457
    %v4553 = vunpack.c.h.b16 %v4457
    %v4554 = vunpack.c.l.b16 %v4458
    %v4555 = vunpack.c.h.b16 %v4458
    %v4556 = vunpack.c.l.b16 %v4459
    %v4557 = vunpack.c.h.b16 %v4459
    %v4558 = vunpack.c.l.b16 %v4460
    %v4559 = vunpack.c.h.b16 %v4460
    %v4560 = vunpack.c.l.b16 %v4461
    %v4561 = vunpack.c.h.b16 %v4461
    %v4562 = vunpack.c.l.b16 %v4462
    %v4563 = vunpack.c.h.b16 %v4462
    %v4564 = vunpack.c.l.b16 %v4463
    %v4565 = vunpack.c.h.b16 %v4463
    %v4566 = vpack.c.b16 %v4504, %v4502
    %v4567 = vpack.c.b16 %v4505, %v4503
    %v4568 = vpack.c.b16 %v4508, %v4506
    %v4569 = vpack.c.b16 %v4509, %v4507
    %v4570 = vpack.c.b16 %v4512, %v4510
    %v4571 = vpack.c.b16 %v4513, %v4511
    %v4572 = vpack.c.b16 %v4516, %v4514
    %v4573 = vpack.c.b16 %v4517, %v4515
    %v4574 = vpack.c.b16 %v4520, %v4518
    %v4575 = vpack.c.b16 %v4521, %v4519
    %v4576 = vpack.c.b16 %v4524, %v4522
    %v4577 = vpack.c.b16 %v4525, %v4523
    %v4578 = vpack.c.b16 %v4528, %v4526
    %v4579 = vpack.c.b16 %v4529, %v4527
    %v4580 = vpack.c.b16 %v4532, %v4530
    %v4581 = vpack.c.b16 %v4533, %v4531
    %v4582 = vpack.c.b16 %v4536, %v4534
    %v4583 = vpack.c.b16 %v4537, %v4535
    %v4584 = vpack.c.b16 %v4540, %v4538
    %v4585 = vpack.c.b16 %v4541, %v4539
    %v4586 = vpack.c.b16 %v4544, %v4542
    %v4587 = vpack.c.b16 %v4545, %v4543
    %v4588 = vpack.c.b16 %v4548, %v4546
    %v4589 = vpack.c.b16 %v4549, %v4547
    %v4590 = vpack.c.b16 %v4552, %v4550
    %v4591 = vpack.c.b16 %v4553, %v4551
    %v4592 = vpack.c.b16 %v4556, %v4554
    %v4593 = vpack.c.b16 %v4557, %v4555
    %v4594 = vpack.c.b16 %v4560, %v4558
    %v4595 = vpack.c.b16 %v4561, %v4559
    %v4596 = vpack.c.b16 %v4564, %v4562
    %v4597 = vpack.c.b16 %v4565, %v4563
    %4630 = vmatpush.bf16.msra.mxu0 %v4580
    %4631 = vmatpush.bf16.msra.mxu0 %v4578
    %4632 = vmatpush.bf16.msra.mxu0 %v4576
    %4633 = vmatpush.bf16.msra.mxu0 %v4574
    %4634 = vmatpush.bf16.msra.mxu0 %v4572
    %4635 = vmatpush.bf16.msra.mxu0 %v4570
    %4636 = vmatpush.bf16.msra.mxu0 %v4568
    %4637 = vmatpush.bf16.msra.mxu0 %v4566
    %4638 = vmatmul.bf16.gmra.mxu0 %v4416
    %v4639 = vpop.f32.mrf.mxu0
    %v4640 = vadd.f32 %v4466, %v4639
    %v4641 = vpop.f32.mrf.mxu0
    %v4642 = vadd.f32 %v4466, %v4641
    %4643 = vmatmul.bf16.gmra.mxu0 %v4418
    %v4644 = vpop.f32.mrf.mxu0
    %v4645 = vadd.f32 %v4466, %v4644
    %v4646 = vpop.f32.mrf.mxu0
    %v4647 = vadd.f32 %v4466, %v4646
    %4648 = vmatmul.bf16.gmra.mxu0 %v4420
    %v4649 = vpop.f32.mrf.mxu0
    %v4650 = vadd.f32 %v4466, %v4649
    %v4651 = vpop.f32.mrf.mxu0
    %v4652 = vadd.f32 %v4466, %v4651
    %4653 = vmatmul.bf16.gmra.mxu0 %v4422
    %v4654 = vpop.f32.mrf.mxu0
    %v4655 = vadd.f32 %v4466, %v4654
    %v4656 = vpop.f32.mrf.mxu0
    %v4657 = vadd.f32 %v4466, %v4656
    %4658 = vmatmul.bf16.gmra.mxu0 %v4424
    %v4659 = vpop.f32.mrf.mxu0
    %v4660 = vadd.f32 %v4466, %v4659
    %v4661 = vpop.f32.mrf.mxu0
    %v4662 = vadd.f32 %v4466, %v4661
    %4663 = vmatmul.bf16.gmra.mxu0 %v4426
    %v4664 = vpop.f32.mrf.mxu0
    %v4665 = vadd.f32 %v4466, %v4664
    %v4666 = vpop.f32.mrf.mxu0
    %v4667 = vadd.f32 %v4466, %v4666
    %4668 = vmatmul.bf16.gmra.mxu0 %v4428
    %v4669 = vpop.f32.mrf.mxu0
    %v4670 = vadd.f32 %v4466, %v4669
    %v4671 = vpop.f32.mrf.mxu0
    %v4672 = vadd.f32 %v4466, %v4671
    %4673 = vmatmul.bf16.gmra.mxu0 %v4430
    %v4674 = vpop.f32.mrf.mxu0
    %v4675 = vadd.f32 %v4466, %v4674
    %v4676 = vpop.f32.mrf.mxu0
    %v4677 = vadd.f32 %v4466, %v4676
    %4678 = vdwg.mxu0
    %4679 = vmatpush.bf16.msra.mxu0 %v4596
    %4680 = vmatpush.bf16.msra.mxu0 %v4594
    %4681 = vmatpush.bf16.msra.mxu0 %v4592
    %4682 = vmatpush.bf16.msra.mxu0 %v4590
    %4683 = vmatpush.bf16.msra.mxu0 %v4588
    %4684 = vmatpush.bf16.msra.mxu0 %v4586
    %4685 = vmatpush.bf16.msra.mxu0 %v4584
    %4686 = vmatpush.bf16.msra.mxu0 %v4582
    %4687 = vmatmul.bf16.gmra.mxu0 %v4417
    %v4688 = vpop.f32.mrf.mxu0
    %v4689 = vadd.f32 %v4640, %v4688
    %v4690 = vpop.f32.mrf.mxu0
    %v4691 = vadd.f32 %v4642, %v4690
    %4692 = vmatmul.bf16.gmra.mxu0 %v4419
    %v4693 = vpop.f32.mrf.mxu0
    %v4694 = vadd.f32 %v4645, %v4693
    %v4695 = vpop.f32.mrf.mxu0
    %v4696 = vadd.f32 %v4647, %v4695
    %4697 = vmatmul.bf16.gmra.mxu0 %v4421
    %v4698 = vpop.f32.mrf.mxu0
    %v4699 = vadd.f32 %v4650, %v4698
    %v4700 = vpop.f32.mrf.mxu0
    %v4701 = vadd.f32 %v4652, %v4700
    %4702 = vmatmul.bf16.gmra.mxu0 %v4423
    %v4703 = vpop.f32.mrf.mxu0
    %v4704 = vadd.f32 %v4655, %v4703
    %v4705 = vpop.f32.mrf.mxu0
    %v4706 = vadd.f32 %v4657, %v4705
    %4707 = vmatmul.bf16.gmra.mxu0 %v4425
    %v4708 = vpop.f32.mrf.mxu0
    %v4709 = vadd.f32 %v4660, %v4708
    %v4710 = vpop.f32.mrf.mxu0
    %v4711 = vadd.f32 %v4662, %v4710
    %4712 = vmatmul.bf16.gmra.mxu0 %v4427
    %v4713 = vpop.f32.mrf.mxu0
    %v4714 = vadd.f32 %v4665, %v4713
    %v4715 = vpop.f32.mrf.mxu0
    %v4716 = vadd.f32 %v4667, %v4715
    %4717 = vmatmul.bf16.gmra.mxu0 %v4429
    %v4718 = vpop.f32.mrf.mxu0
    %v4719 = vadd.f32 %v4670, %v4718
    %v4720 = vpop.f32.mrf.mxu0
    %v4721 = vadd.f32 %v4672, %v4720
    %4722 = vmatmul.bf16.gmra.mxu0 %v4431
    %v4723 = vpop.f32.mrf.mxu0
    %v4724 = vadd.f32 %v4675, %v4723
    %v4725 = vpop.f32.mrf.mxu0
    %v4726 = vadd.f32 %v4677, %v4725
    %4727 = vdwg.mxu0
    %4728 = vmatpush.bf16.msra.mxu0 %v4581
    %4729 = vmatpush.bf16.msra.mxu0 %v4579
    %4730 = vmatpush.bf16.msra.mxu0 %v4577
    %4731 = vmatpush.bf16.msra.mxu0 %v4575
    %4732 = vmatpush.bf16.msra.mxu0 %v4573
    %4733 = vmatpush.bf16.msra.mxu0 %v4571
    %4734 = vmatpush.bf16.msra.mxu0 %v4569
    %4735 = vmatpush.bf16.msra.mxu0 %v4567
    %4736 = vmatmul.bf16.gmra.mxu0 %v4416
    %v4737 = vpop.f32.mrf.mxu0
    %v4738 = vadd.f32 %v4467, %v4737
    %v4739 = vpop.f32.mrf.mxu0
    %v4740 = vadd.f32 %v4467, %v4739
    %4741 = vmatmul.bf16.gmra.mxu0 %v4418
    %v4742 = vpop.f32.mrf.mxu0
    %v4743 = vadd.f32 %v4467, %v4742
    %v4744 = vpop.f32.mrf.mxu0
    %v4745 = vadd.f32 %v4467, %v4744
    %4746 = vmatmul.bf16.gmra.mxu0 %v4420
    %v4747 = vpop.f32.mrf.mxu0
    %v4748 = vadd.f32 %v4467, %v4747
    %v4749 = vpop.f32.mrf.mxu0
    %v4750 = vadd.f32 %v4467, %v4749
    %4751 = vmatmul.bf16.gmra.mxu0 %v4422
    %v4752 = vpop.f32.mrf.mxu0
    %v4753 = vadd.f32 %v4467, %v4752
    %v4754 = vpop.f32.mrf.mxu0
    %v4755 = vadd.f32 %v4467, %v4754
    %4756 = vmatmul.bf16.gmra.mxu0 %v4424
    %v4757 = vpop.f32.mrf.mxu0
    %v4758 = vadd.f32 %v4467, %v4757
    %v4759 = vpop.f32.mrf.mxu0
    %v4760 = vadd.f32 %v4467, %v4759
    %4761 = vmatmul.bf16.gmra.mxu0 %v4426
    %v4762 = vpop.f32.mrf.mxu0
    %v4763 = vadd.f32 %v4467, %v4762
    %v4764 = vpop.f32.mrf.mxu0
    %v4765 = vadd.f32 %v4467, %v4764
    %4766 = vmatmul.bf16.gmra.mxu0 %v4428
    %v4767 = vpop.f32.mrf.mxu0
    %v4768 = vadd.f32 %v4467, %v4767
    %v4769 = vpop.f32.mrf.mxu0
    %v4770 = vadd.f32 %v4467, %v4769
    %4771 = vmatmul.bf16.gmra.mxu0 %v4430
    %v4772 = vpop.f32.mrf.mxu0
    %v4773 = vadd.f32 %v4467, %v4772
    %v4774 = vpop.f32.mrf.mxu0
    %v4775 = vadd.f32 %v4467, %v4774
    %4776 = vdwg.mxu0
    %4777 = vmatpush.bf16.msra.mxu0 %v4597
    %4778 = vmatpush.bf16.msra.mxu0 %v4595
    %4779 = vmatpush.bf16.msra.mxu0 %v4593
    %4780 = vmatpush.bf16.msra.mxu0 %v4591
    %4781 = vmatpush.bf16.msra.mxu0 %v4589
    %4782 = vmatpush.bf16.msra.mxu0 %v4587
    %4783 = vmatpush.bf16.msra.mxu0 %v4585
    %4784 = vmatpush.bf16.msra.mxu0 %v4583
    %4785 = vmatmul.bf16.gmra.mxu0 %v4417
    %v4786 = vpop.f32.mrf.mxu0
    %v4787 = vadd.f32 %v4738, %v4786
    %v4788 = vpop.f32.mrf.mxu0
    %v4789 = vadd.f32 %v4740, %v4788
    %4790 = vmatmul.bf16.gmra.mxu0 %v4419
    %v4791 = vpop.f32.mrf.mxu0
    %v4792 = vadd.f32 %v4743, %v4791
    %v4793 = vpop.f32.mrf.mxu0
    %v4794 = vadd.f32 %v4745, %v4793
    %4795 = vmatmul.bf16.gmra.mxu0 %v4421
    %v4796 = vpop.f32.mrf.mxu0
    %v4797 = vadd.f32 %v4748, %v4796
    %v4798 = vpop.f32.mrf.mxu0
    %v4799 = vadd.f32 %v4750, %v4798
    %4800 = vmatmul.bf16.gmra.mxu0 %v4423
    %v4801 = vpop.f32.mrf.mxu0
    %v4802 = vadd.f32 %v4753, %v4801
    %v4803 = vpop.f32.mrf.mxu0
    %v4804 = vadd.f32 %v4755, %v4803
    %4805 = vmatmul.bf16.gmra.mxu0 %v4425
    %v4806 = vpop.f32.mrf.mxu0
    %v4807 = vadd.f32 %v4758, %v4806
    %v4808 = vpop.f32.mrf.mxu0
    %v4809 = vadd.f32 %v4760, %v4808
    %4810 = vmatmul.bf16.gmra.mxu0 %v4427
    %v4811 = vpop.f32.mrf.mxu0
    %v4812 = vadd.f32 %v4763, %v4811
    %v4813 = vpop.f32.mrf.mxu0
    %v4814 = vadd.f32 %v4765, %v4813
    %4815 = vmatmul.bf16.gmra.mxu0 %v4429
    %v4816 = vpop.f32.mrf.mxu0
    %v4817 = vadd.f32 %v4768, %v4816
    %v4818 = vpop.f32.mrf.mxu0
    %v4819 = vadd.f32 %v4770, %v4818
    %4820 = vmatmul.bf16.gmra.mxu0 %v4431
    %v4821 = vpop.f32.mrf.mxu0
    %v4822 = vadd.f32 %v4773, %v4821
    %v4823 = vpop.f32.mrf.mxu0
    %v4824 = vadd.f32 %v4775, %v4823
    %4825 = vdwg.mxu0
    %vm4826 = vcmp.gt.f32.partialorder %v4689, 0.0
    %vm4827 = vcmp.gt.f32.partialorder %v4787, 0.0
    %vm4828 = vcmp.gt.f32.partialorder %v4691, 0.0
    %vm4829 = vcmp.gt.f32.partialorder %v4789, 0.0
    %vm4830 = vcmp.gt.f32.partialorder %v4694, 0.0
    %vm4831 = vcmp.gt.f32.partialorder %v4792, 0.0
    %vm4832 = vcmp.gt.f32.partialorder %v4696, 0.0
    %vm4833 = vcmp.gt.f32.partialorder %v4794, 0.0
    %vm4834 = vcmp.gt.f32.partialorder %v4699, 0.0
    %vm4835 = vcmp.gt.f32.partialorder %v4797, 0.0
    %vm4836 = vcmp.gt.f32.partialorder %v4701, 0.0
    %vm4837 = vcmp.gt.f32.partialorder %v4799, 0.0
    %vm4838 = vcmp.gt.f32.partialorder %v4704, 0.0
    %vm4839 = vcmp.gt.f32.partialorder %v4802, 0.0
    %vm4840 = vcmp.gt.f32.partialorder %v4706, 0.0
    %vm4841 = vcmp.gt.f32.partialorder %v4804, 0.0
    %vm4842 = vcmp.gt.f32.partialorder %v4709, 0.0
    %vm4843 = vcmp.gt.f32.partialorder %v4807, 0.0
    %vm4844 = vcmp.gt.f32.partialorder %v4711, 0.0
    %vm4845 = vcmp.gt.f32.partialorder %v4809, 0.0
    %vm4846 = vcmp.gt.f32.partialorder %v4714, 0.0
    %vm4847 = vcmp.gt.f32.partialorder %v4812, 0.0
    %vm4848 = vcmp.gt.f32.partialorder %v4716, 0.0
    %vm4849 = vcmp.gt.f32.partialorder %v4814, 0.0
    %vm4850 = vcmp.gt.f32.partialorder %v4719, 0.0
    %vm4851 = vcmp.gt.f32.partialorder %v4817, 0.0
    %vm4852 = vcmp.gt.f32.partialorder %v4721, 0.0
    %vm4853 = vcmp.gt.f32.partialorder %v4819, 0.0
    %vm4854 = vcmp.gt.f32.partialorder %v4724, 0.0
    %vm4855 = vcmp.gt.f32.partialorder %v4822, 0.0
    %vm4856 = vcmp.gt.f32.partialorder %v4726, 0.0
    %vm4857 = vcmp.gt.f32.partialorder %v4824, 0.0
    %v4858 = vmul.f32 %v4689, 0.01
    %v4859 = vmul.f32 %v4787, 0.01
    %v4860 = vmul.f32 %v4691, 0.01
    %v4861 = vmul.f32 %v4789, 0.01
    %v4862 = vmul.f32 %v4694, 0.01
    %v4863 = vmul.f32 %v4792, 0.01
    %v4864 = vmul.f32 %v4696, 0.01
    %v4865 = vmul.f32 %v4794, 0.01
    %v4866 = vmul.f32 %v4699, 0.01
    %v4867 = vmul.f32 %v4797, 0.01
    %v4868 = vmul.f32 %v4701, 0.01
    %v4869 = vmul.f32 %v4799, 0.01
    %v4870 = vmul.f32 %v4704, 0.01
    %v4871 = vmul.f32 %v4802, 0.01
    %v4872 = vmul.f32 %v4706, 0.01
    %v4873 = vmul.f32 %v4804, 0.01
    %v4874 = vmul.f32 %v4709, 0.01
    %v4875 = vmul.f32 %v4807, 0.01
    %v4876 = vmul.f32 %v4711, 0.01
    %v4877 = vmul.f32 %v4809, 0.01
    %v4878 = vmul.f32 %v4714, 0.01
    %v4879 = vmul.f32 %v4812, 0.01
    %v4880 = vmul.f32 %v4716, 0.01
    %v4881 = vmul.f32 %v4814, 0.01
    %v4882 = vmul.f32 %v4719, 0.01
    %v4883 = vmul.f32 %v4817, 0.01
    %v4884 = vmul.f32 %v4721, 0.01
    %v4885 = vmul.f32 %v4819, 0.01
    %v4886 = vmul.f32 %v4724, 0.01
    %v4887 = vmul.f32 %v4822, 0.01
    %v4888 = vmul.f32 %v4726, 0.01
    %v4889 = vmul.f32 %v4824, 0.01
    %v4890 = vsel %vm4826, %v4689, %v4858
    %v4891 = vsel %vm4827, %v4787, %v4859
    %v4892 = vsel %vm4828, %v4691, %v4860
    %v4893 = vsel %vm4829, %v4789, %v4861
    %v4894 = vsel %vm4830, %v4694, %v4862
    %v4895 = vsel %vm4831, %v4792, %v4863
    %v4896 = vsel %vm4832, %v4696, %v4864
    %v4897 = vsel %vm4833, %v4794, %v4865
    %v4898 = vsel %vm4834, %v4699, %v4866
    %v4899 = vsel %vm4835, %v4797, %v4867
    %v4900 = vsel %vm4836, %v4701, %v4868
    %v4901 = vsel %vm4837, %v4799, %v4869
    %v4902 = vsel %vm4838, %v4704, %v4870
    %v4903 = vsel %vm4839, %v4802, %v4871
    %v4904 = vsel %vm4840, %v4706, %v4872
    %v4905 = vsel %vm4841, %v4804, %v4873
    %v4906 = vsel %vm4842, %v4709, %v4874
    %v4907 = vsel %vm4843, %v4807, %v4875
    %v4908 = vsel %vm4844, %v4711, %v4876
    %v4909 = vsel %vm4845, %v4809, %v4877
    %v4910 = vsel %vm4846, %v4714, %v4878
    %v4911 = vsel %vm4847, %v4812, %v4879
    %v4912 = vsel %vm4848, %v4716, %v4880
    %v4913 = vsel %vm4849, %v4814, %v4881
    %v4914 = vsel %vm4850, %v4719, %v4882
    %v4915 = vsel %vm4851, %v4817, %v4883
    %v4916 = vsel %vm4852, %v4721, %v4884
    %v4917 = vsel %vm4853, %v4819, %v4885
    %v4918 = vsel %vm4854, %v4724, %v4886
    %v4919 = vsel %vm4855, %v4822, %v4887
    %v4920 = vsel %vm4856, %v4726, %v4888
    %v4921 = vsel %vm4857, %v4824, %v4889
    %v4922 = vpack.c.bf16 %v4891, %v4890
    %v4923 = vpack.c.bf16 %v4893, %v4892
    %v4924 = vpack.c.bf16 %v4895, %v4894
    %v4925 = vpack.c.bf16 %v4897, %v4896
    %v4926 = vpack.c.bf16 %v4899, %v4898
    %v4927 = vpack.c.bf16 %v4901, %v4900
    %v4928 = vpack.c.bf16 %v4903, %v4902
    %v4929 = vpack.c.bf16 %v4905, %v4904
    %v4930 = vpack.c.bf16 %v4907, %v4906
    %v4931 = vpack.c.bf16 %v4909, %v4908
    %v4932 = vpack.c.bf16 %v4911, %v4910
    %v4933 = vpack.c.bf16 %v4913, %v4912
    %v4934 = vpack.c.bf16 %v4915, %v4914
    %v4935 = vpack.c.bf16 %v4917, %v4916
    %v4936 = vpack.c.bf16 %v4919, %v4918
    %v4937 = vpack.c.bf16 %v4921, %v4920
    %4938 = vst [vmem:[#allocation4] sm:$0xff] %v4922
    %4939 = vst [vmem:[#allocation4 + $0x8] sm:$0xff] %v4923
    %4940 = vst [vmem:[#allocation4 + $0x10] sm:$0xff] %v4924
    %4941 = vst [vmem:[#allocation4 + $0x18] sm:$0xff] %v4925
    %4942 = vst [vmem:[#allocation4 + $0x20] sm:$0xff] %v4926
    %4943 = vst [vmem:[#allocation4 + $0x28] sm:$0xff] %v4927
    %4944 = vst [vmem:[#allocation4 + $0x30] sm:$0xff] %v4928
    %4945 = vst [vmem:[#allocation4 + $0x38] sm:$0xff] %v4929
    %4946 = vst [vmem:[#allocation4 + $0x40] sm:$0xff] %v4930
    %4947 = vst [vmem:[#allocation4 + $0x48] sm:$0xff] %v4931
    %4948 = vst [vmem:[#allocation4 + $0x50] sm:$0xff] %v4932
    %4949 = vst [vmem:[#allocation4 + $0x58] sm:$0xff] %v4933
    %4950 = vst [vmem:[#allocation4 + $0x60] sm:$0xff] %v4934
    %4951 = vst [vmem:[#allocation4 + $0x68] sm:$0xff] %v4935
    %4952 = vst [vmem:[#allocation4 + $0x70] sm:$0xff] %v4936
    %4953 = vst [vmem:[#allocation4 + $0x78] sm:$0xff] %v4937
  $region61: #{boke_forward.1} parent=0 // pred_fallthru
    _
  %v4954 = vld [vmem:[#allocation4] sm:$0xff]
  %v4955 = vld [vmem:[#allocation4 + $0x8] sm:$0xff]
  %v4956 = vld [vmem:[#allocation4 + $0x10] sm:$0xff]
  %v4957 = vld [vmem:[#allocation4 + $0x18] sm:$0xff]
  %v4958 = vld [vmem:[#allocation4 + $0x20] sm:$0xff]
  %v4959 = vld [vmem:[#allocation4 + $0x28] sm:$0xff]
  %v4960 = vld [vmem:[#allocation4 + $0x30] sm:$0xff]
  %v4961 = vld [vmem:[#allocation4 + $0x38] sm:$0xff]
  %v4962 = vld [vmem:[#allocation4 + $0x40] sm:$0xff]
  %v4963 = vld [vmem:[#allocation4 + $0x48] sm:$0xff]
  %v4964 = vld [vmem:[#allocation4 + $0x50] sm:$0xff]
  %v4965 = vld [vmem:[#allocation4 + $0x58] sm:$0xff]
  %v4966 = vld [vmem:[#allocation4 + $0x60] sm:$0xff]
  %v4967 = vld [vmem:[#allocation4 + $0x68] sm:$0xff]
  %v4968 = vld [vmem:[#allocation4 + $0x70] sm:$0xff]
  %v4969 = vld [vmem:[#allocation4 + $0x78] sm:$0xff]
  %v4970 = vld [vmem:[%s12] sm:$0xf]
  %v4971 = vld [vmem:[%s12 + $0x4] sm:$0xf]
  %v4972 = vld [vmem:[%s12 + $0x8] sm:$0xf]
  %v4973 = vld [vmem:[%s12 + $0xc] sm:$0xf]
  %v4974 = vld [vmem:[%s12 + $0x10] sm:$0xf]
  %v4975 = vld [vmem:[%s12 + $0x14] sm:$0xf]
  %v4976 = vld [vmem:[%s12 + $0x18] sm:$0xf]
  %v4977 = vld [vmem:[%s12 + $0x1c] sm:$0xf]
  %v4978 = vld [vmem:[%s12 + $0x20] sm:$0xf]
  %v4979 = vld [vmem:[%s12 + $0x24] sm:$0xf]
  %v4980 = vld [vmem:[%s12 + $0x28] sm:$0xf]
  %v4981 = vld [vmem:[%s12 + $0x2c] sm:$0xf]
  %v4982 = vld [vmem:[%s12 + $0x30] sm:$0xf]
  %v4983 = vld [vmem:[%s12 + $0x34] sm:$0xf]
  %v4984 = vld [vmem:[%s12 + $0x38] sm:$0xf]
  %v4985 = vld [vmem:[%s12 + $0x3c] sm:$0xf]
  %v4986 = vld [vmem:[%s12 + $0x40] sm:$0xf]
  %v4987 = vld [vmem:[%s12 + $0x44] sm:$0xf]
  %v4988 = vld [vmem:[%s12 + $0x48] sm:$0xf]
  %v4989 = vld [vmem:[%s12 + $0x4c] sm:$0xf]
  %v4990 = vld [vmem:[%s12 + $0x50] sm:$0xf]
  %v4991 = vld [vmem:[%s12 + $0x54] sm:$0xf]
  %v4992 = vld [vmem:[%s12 + $0x58] sm:$0xf]
  %v4993 = vld [vmem:[%s12 + $0x5c] sm:$0xf]
  %v4994 = vld [vmem:[%s12 + $0x60] sm:$0xf]
  %v4995 = vld [vmem:[%s12 + $0x64] sm:$0xf]
  %v4996 = vld [vmem:[%s12 + $0x68] sm:$0xf]
  %v4997 = vld [vmem:[%s12 + $0x6c] sm:$0xf]
  %v4998 = vld [vmem:[%s12 + $0x70] sm:$0xf]
  %v4999 = vld [vmem:[%s12 + $0x74] sm:$0xf]
  %v5000 = vld [vmem:[%s12 + $0x78] sm:$0xf]
  %v5001 = vld [vmem:[%s12 + $0x7c] sm:$0xf]
  %v5002 = vld [vmem:[%s13] sm:$0x1]
  %v5004 = vperm.slane %v5002, 0
  %v5022 = vunpack.c.l.b16 %v4954
  %v5023 = vunpack.c.h.b16 %v4954
  %v5024 = vunpack.c.l.b16 %v4955
  %v5025 = vunpack.c.h.b16 %v4955
  %v5026 = vunpack.c.l.b16 %v4956
  %v5027 = vunpack.c.h.b16 %v4956
  %v5028 = vunpack.c.l.b16 %v4957
  %v5029 = vunpack.c.h.b16 %v4957
  %v5030 = vunpack.c.l.b16 %v4958
  %v5031 = vunpack.c.h.b16 %v4958
  %v5032 = vunpack.c.l.b16 %v4959
  %v5033 = vunpack.c.h.b16 %v4959
  %v5034 = vunpack.c.l.b16 %v4960
  %v5035 = vunpack.c.h.b16 %v4960
  %v5036 = vunpack.c.l.b16 %v4961
  %v5037 = vunpack.c.h.b16 %v4961
  %v5038 = vunpack.c.l.b16 %v4962
  %v5039 = vunpack.c.h.b16 %v4962
  %v5040 = vunpack.c.l.b16 %v4963
  %v5041 = vunpack.c.h.b16 %v4963
  %v5042 = vunpack.c.l.b16 %v4964
  %v5043 = vunpack.c.h.b16 %v4964
  %v5044 = vunpack.c.l.b16 %v4965
  %v5045 = vunpack.c.h.b16 %v4965
  %v5046 = vunpack.c.l.b16 %v4966
  %v5047 = vunpack.c.h.b16 %v4966
  %v5048 = vunpack.c.l.b16 %v4967
  %v5049 = vunpack.c.h.b16 %v4967
  %v5050 = vunpack.c.l.b16 %v4968
  %v5051 = vunpack.c.h.b16 %v4968
  %v5052 = vunpack.c.l.b16 %v4969
  %v5053 = vunpack.c.h.b16 %v4969
  %v5054 = vpack.c.b16 %v5024, %v5022
  %v5055 = vpack.c.b16 %v5025, %v5023
  %v5056 = vpack.c.b16 %v5028, %v5026
  %v5057 = vpack.c.b16 %v5029, %v5027
  %v5058 = vpack.c.b16 %v5032, %v5030
  %v5059 = vpack.c.b16 %v5033, %v5031
  %v5060 = vpack.c.b16 %v5036, %v5034
  %v5061 = vpack.c.b16 %v5037, %v5035
  %v5062 = vpack.c.b16 %v5040, %v5038
  %v5063 = vpack.c.b16 %v5041, %v5039
  %v5064 = vpack.c.b16 %v5044, %v5042
  %v5065 = vpack.c.b16 %v5045, %v5043
  %v5066 = vpack.c.b16 %v5048, %v5046
  %v5067 = vpack.c.b16 %v5049, %v5047
  %v5068 = vpack.c.b16 %v5052, %v5050
  %v5069 = vpack.c.b16 %v5053, %v5051
  %v5118 = vunpack.c.l.b16 %v4970
  %v5119 = vunpack.c.l.b16 %v4971
  %v5120 = vunpack.c.l.b16 %v4972
  %v5121 = vunpack.c.l.b16 %v4973
  %v5122 = vunpack.c.l.b16 %v4974
  %v5123 = vunpack.c.l.b16 %v4975
  %v5124 = vunpack.c.l.b16 %v4976
  %v5125 = vunpack.c.l.b16 %v4977
  %v5126 = vunpack.c.l.b16 %v4978
  %v5127 = vunpack.c.l.b16 %v4979
  %v5128 = vunpack.c.l.b16 %v4980
  %v5129 = vunpack.c.l.b16 %v4981
  %v5130 = vunpack.c.l.b16 %v4982
  %v5131 = vunpack.c.l.b16 %v4983
  %v5132 = vunpack.c.l.b16 %v4984
  %v5133 = vunpack.c.l.b16 %v4985
  %v5134 = vunpack.c.l.b16 %v4986
  %v5135 = vunpack.c.l.b16 %v4987
  %v5136 = vunpack.c.l.b16 %v4988
  %v5137 = vunpack.c.l.b16 %v4989
  %v5138 = vunpack.c.l.b16 %v4990
  %v5139 = vunpack.c.l.b16 %v4991
  %v5140 = vunpack.c.l.b16 %v4992
  %v5141 = vunpack.c.l.b16 %v4993
  %v5142 = vunpack.c.l.b16 %v4994
  %v5143 = vunpack.c.l.b16 %v4995
  %v5144 = vunpack.c.l.b16 %v4996
  %v5145 = vunpack.c.l.b16 %v4997
  %v5146 = vunpack.c.l.b16 %v4998
  %v5147 = vunpack.c.l.b16 %v4999
  %v5148 = vunpack.c.l.b16 %v5000
  %v5149 = vunpack.c.l.b16 %v5001
  %v5150 = vpack.c.b16 %v5119, %v5118
  %v5151 = vpack.c.b16 %v5121, %v5120
  %v5152 = vpack.c.b16 %v5123, %v5122
  %v5153 = vpack.c.b16 %v5125, %v5124
  %v5154 = vpack.c.b16 %v5127, %v5126
  %v5155 = vpack.c.b16 %v5129, %v5128
  %v5156 = vpack.c.b16 %v5131, %v5130
  %v5157 = vpack.c.b16 %v5133, %v5132
  %v5158 = vpack.c.b16 %v5135, %v5134
  %v5159 = vpack.c.b16 %v5137, %v5136
  %v5160 = vpack.c.b16 %v5139, %v5138
  %v5161 = vpack.c.b16 %v5141, %v5140
  %v5162 = vpack.c.b16 %v5143, %v5142
  %v5163 = vpack.c.b16 %v5145, %v5144
  %v5164 = vpack.c.b16 %v5147, %v5146
  %v5165 = vpack.c.b16 %v5149, %v5148
  %5182 = vmatpush.bf16.msra.mxu0 %v5157
  %5183 = vmatpush.bf16.msra.mxu0 %v5156
  %5184 = vmatpush.bf16.msra.mxu0 %v5155
  %5185 = vmatpush.bf16.msra.mxu0 %v5154
  %5186 = vmatpush.bf16.msra.mxu0 %v5153
  %5187 = vmatpush.bf16.msra.mxu0 %v5152
  %5188 = vmatpush.bf16.msra.mxu0 %v5151
  %5189 = vmatpush.bf16.msra.mxu0 %v5150
  %5190 = vmatmul.bf16.gmra.mxu0 %v5054
  %v5191 = vpop.f32.mrf.mxu0
  %v5192 = vadd.f32 %v5004, %v5191
  %v5193 = vpop.f32.mrf.mxu0
  %v5194 = vadd.f32 %v5004, %v5193
  %5195 = vmatmul.bf16.gmra.mxu0 %v5056
  %v5196 = vpop.f32.mrf.mxu0
  %v5197 = vadd.f32 %v5004, %v5196
  %v5198 = vpop.f32.mrf.mxu0
  %v5199 = vadd.f32 %v5004, %v5198
  %5200 = vmatmul.bf16.gmra.mxu0 %v5058
  %v5201 = vpop.f32.mrf.mxu0
  %v5202 = vadd.f32 %v5004, %v5201
  %v5203 = vpop.f32.mrf.mxu0
  %v5204 = vadd.f32 %v5004, %v5203
  %5205 = vmatmul.bf16.gmra.mxu0 %v5060
  %v5206 = vpop.f32.mrf.mxu0
  %v5207 = vadd.f32 %v5004, %v5206
  %v5208 = vpop.f32.mrf.mxu0
  %v5209 = vadd.f32 %v5004, %v5208
  %5210 = vmatmul.bf16.gmra.mxu0 %v5062
  %v5211 = vpop.f32.mrf.mxu0
  %v5212 = vadd.f32 %v5004, %v5211
  %v5213 = vpop.f32.mrf.mxu0
  %v5214 = vadd.f32 %v5004, %v5213
  %5215 = vmatmul.bf16.gmra.mxu0 %v5064
  %v5216 = vpop.f32.mrf.mxu0
  %v5217 = vadd.f32 %v5004, %v5216
  %v5218 = vpop.f32.mrf.mxu0
  %v5219 = vadd.f32 %v5004, %v5218
  %5220 = vmatmul.bf16.gmra.mxu0 %v5066
  %v5221 = vpop.f32.mrf.mxu0
  %v5222 = vadd.f32 %v5004, %v5221
  %v5223 = vpop.f32.mrf.mxu0
  %v5224 = vadd.f32 %v5004, %v5223
  %5225 = vmatmul.bf16.gmra.mxu0 %v5068
  %v5226 = vpop.f32.mrf.mxu0
  %v5227 = vadd.f32 %v5004, %v5226
  %v5228 = vpop.f32.mrf.mxu0
  %v5229 = vadd.f32 %v5004, %v5228
  %5230 = vdwg.mxu0
  %5231 = vmatpush.bf16.msra.mxu0 %v5165
  %5232 = vmatpush.bf16.msra.mxu0 %v5164
  %5233 = vmatpush.bf16.msra.mxu0 %v5163
  %5234 = vmatpush.bf16.msra.mxu0 %v5162
  %5235 = vmatpush.bf16.msra.mxu0 %v5161
  %5236 = vmatpush.bf16.msra.mxu0 %v5160
  %5237 = vmatpush.bf16.msra.mxu0 %v5159
  %5238 = vmatpush.bf16.msra.mxu0 %v5158
  %5239 = vmatmul.bf16.gmra.mxu0 %v5055
  %v5240 = vpop.f32.mrf.mxu0
  %v5241 = vadd.f32 %v5192, %v5240
  %v5242 = vpop.f32.mrf.mxu0
  %v5243 = vadd.f32 %v5194, %v5242
  %5244 = vmatmul.bf16.gmra.mxu0 %v5057
  %v5245 = vpop.f32.mrf.mxu0
  %v5246 = vadd.f32 %v5197, %v5245
  %v5247 = vpop.f32.mrf.mxu0
  %v5248 = vadd.f32 %v5199, %v5247
  %5249 = vmatmul.bf16.gmra.mxu0 %v5059
  %v5250 = vpop.f32.mrf.mxu0
  %v5251 = vadd.f32 %v5202, %v5250
  %v5252 = vpop.f32.mrf.mxu0
  %v5253 = vadd.f32 %v5204, %v5252
  %5254 = vmatmul.bf16.gmra.mxu0 %v5061
  %v5255 = vpop.f32.mrf.mxu0
  %v5256 = vadd.f32 %v5207, %v5255
  %v5257 = vpop.f32.mrf.mxu0
  %v5258 = vadd.f32 %v5209, %v5257
  %5259 = vmatmul.bf16.gmra.mxu0 %v5063
  %v5260 = vpop.f32.mrf.mxu0
  %v5261 = vadd.f32 %v5212, %v5260
  %v5262 = vpop.f32.mrf.mxu0
  %v5263 = vadd.f32 %v5214, %v5262
  %5264 = vmatmul.bf16.gmra.mxu0 %v5065
  %v5265 = vpop.f32.mrf.mxu0
  %v5266 = vadd.f32 %v5217, %v5265
  %v5267 = vpop.f32.mrf.mxu0
  %v5268 = vadd.f32 %v5219, %v5267
  %5269 = vmatmul.bf16.gmra.mxu0 %v5067
  %v5270 = vpop.f32.mrf.mxu0
  %v5271 = vadd.f32 %v5222, %v5270
  %v5272 = vpop.f32.mrf.mxu0
  %v5273 = vadd.f32 %v5224, %v5272
  %5274 = vmatmul.bf16.gmra.mxu0 %v5069
  %v5275 = vpop.f32.mrf.mxu0
  %v5276 = vadd.f32 %v5227, %v5275
  %v5277 = vpop.f32.mrf.mxu0
  %v5278 = vadd.f32 %v5229, %v5277
  %5279 = vdwg.mxu0
  %5280 = vst [vmem:[%s14] sm:$0xff] %v5241
  %5281 = vst [vmem:[%s14 + $0x8] sm:$0xff] %v5243
  %5282 = vst [vmem:[%s14 + $0x10] sm:$0xff] %v5246
  %5283 = vst [vmem:[%s14 + $0x18] sm:$0xff] %v5248
  %5284 = vst [vmem:[%s14 + $0x20] sm:$0xff] %v5251
  %5285 = vst [vmem:[%s14 + $0x28] sm:$0xff] %v5253
  %5286 = vst [vmem:[%s14 + $0x30] sm:$0xff] %v5256
  %5287 = vst [vmem:[%s14 + $0x38] sm:$0xff] %v5258
  %5288 = vst [vmem:[%s14 + $0x40] sm:$0xff] %v5261
  %5289 = vst [vmem:[%s14 + $0x48] sm:$0xff] %v5263
  %5290 = vst [vmem:[%s14 + $0x50] sm:$0xff] %v5266
  %5291 = vst [vmem:[%s14 + $0x58] sm:$0xff] %v5268
  %5292 = vst [vmem:[%s14 + $0x60] sm:$0xff] %v5271
  %5293 = vst [vmem:[%s14 + $0x68] sm:$0xff] %v5273
  %5294 = vst [vmem:[%s14 + $0x70] sm:$0xff] %v5276
  %5295 = vst [vmem:[%s14 + $0x78] sm:$0xff] %v5278
  // Predicated region
  $region62: #{boke_forward.1} parent=0 // pred_check
    _
  $region63: #{boke_forward.1} parent=0 // pred_check_branch
    %5297 = sbr.rel (0) target = $region65
  $region64: #{boke_forward.1} parent=0 // pred_region
    _
  $region65: #{boke_forward.1} parent=0 // pred_fallthru
    _
  // Predicated region
  $region66: #{boke_forward.1} parent=0 // pred_check
    _
  $region67: #{boke_forward.1} parent=0 // pred_check_branch
    %5299 = sbr.rel (0) target = $region69
  $region68: #{boke_forward.1} parent=0 // pred_region
    _
  $region69: #{boke_forward.1} parent=0 // pred_fallthru
    _

</llo_original>
